<compile_context>
chip_gen: v7x
topology: tpu7x:2x2x1
jax: 0.10.0
libtpu: 0.0.40
codegen_flags: <defaults>
</compile_context>

<pallas_src>
import math
from functools import partial

import jax
import jax.numpy as jnp
from jax.experimental import pallas as pl
from jax.experimental.pallas import tpu as pltpu

# Set to jnp.bfloat16 on v6e/v7x for higher MXU throughput (accumulation stays
# f32); kept at float32 here to match the torch float32 reference exactly.
_MXU_DTYPE = jnp.float32


def _gather_matrix(n_seg, r, seg, dil, sp):
    """(n_seg*r, sp) 0/1 matrix; row (b, i) selects flat position b*seg + i*dil.

    Built from 3-D iotas (no integer div/mod) so it lowers as plain VPU ops;
    the gather/scatter themselves become standard MXU matmuls.
    """
    seg_i = jax.lax.broadcasted_iota(jnp.int32, (n_seg, r, sp), 0)
    tok_i = jax.lax.broadcasted_iota(jnp.int32, (n_seg, r, sp), 1)
    pos_i = jax.lax.broadcasted_iota(jnp.int32, (n_seg, r, sp), 2)
    g = (pos_i == seg_i * seg + tok_i * dil).astype(_MXU_DTYPE)
    return g.reshape(n_seg * r, sp)


def _layer_kernel(*refs, n_head, branches):
    """One full LongBERT layer for one batch element.

    refs = (x_ref, bias_ref_0..bias_ref_{n_branch-1},
            wq_ref, wo_ref, bo_ref, g_ref, b_ref, o_ref)
    x_ref:    (1, S, E)            hidden state
    bias_ref: (1, n_seg, 1, r)     additive key-padding bias (0 / -1e30)
    """
    n_branch = len(branches)
    x_ref = refs[0]
    bias_refs = refs[1:1 + n_branch]
    wq_ref, wo_ref, bo_ref, g_ref, b_ref, o_ref = refs[1 + n_branch:]

    S = x_ref.shape[1]
    E = x_ref.shape[2]
    d_head = E // n_head
    inv_sqrt_d = 1.0 / math.sqrt(d_head)
    inv_nb = 1.0 / n_branch

    x = x_ref[0]                                               # (S, E)
    # q = k = v = x @ Wq.T (the reference projects all three with q_proj).
    # Projecting before the dilation slice is exact because q_proj has no bias.
    qkv = jax.lax.dot_general(
        x.astype(_MXU_DTYPE), wq_ref[...].astype(_MXU_DTYPE),
        (((1,), (1,)), ((), ())), preferred_element_type=jnp.float32)  # (S, E)

    acc = jnp.zeros((S, E), jnp.float32)
    for b_idx, (seg, dil) in enumerate(branches):
        sp = ((S + seg - 1) // seg) * seg
        n_seg = sp // seg
        r = (seg + dil - 1) // dil            # dilated tokens per segment

        qkv_p = qkv
        if sp > S:
            # zero padding matches the reference (zero tokens, bias-free proj)
            qkv_p = jnp.concatenate(
                [qkv_p, jnp.zeros((sp - S, E), jnp.float32)], axis=0)

        if dil == 1:
            q_flat = qkv_p                                     # r == seg
            gmat = None
        else:
            gmat = _gather_matrix(n_seg, r, seg, dil, sp)      # (n_seg*r, sp)
            q_flat = jax.lax.dot_general(
                gmat, qkv_p.astype(_MXU_DTYPE), (((1,), (0,)), ((), ())),
                preferred_element_type=jnp.float32)
        q3 = q_flat.reshape(n_seg, r, E)                       # (n_seg, r, E)

        bias = bias_refs[b_idx][0]                             # (n_seg, 1, r)
        # nan_to_num on an all-masked segment's softmax == zero the segment.
        keep = (jnp.max(bias, axis=-1, keepdims=True) > -1.0
                ).astype(jnp.float32)                          # (n_seg, 1, 1)

        head_outs = []
        for h in range(n_head):
            qh = q3[:, :, h * d_head:(h + 1) * d_head]         # (n_seg, r, d)
            qh_c = qh.astype(_MXU_DTYPE)
            scores = jnp.einsum('bqd,bkd->bqk', qh_c, qh_c,
                                preferred_element_type=jnp.float32)
            scores = scores * inv_sqrt_d + bias                # key-pad mask
            mrow = jnp.max(scores, axis=-1, keepdims=True)
            ex = jnp.exp(scores - mrow)
            p = ex * pl.reciprocal(jnp.sum(ex, axis=-1, keepdims=True),
                                   approx=True)
            head_outs.append(
                jnp.einsum('bqk,bkd->bqd', p.astype(_MXU_DTYPE), qh_c,
                           preferred_element_type=jnp.float32))
        out3 = jnp.concatenate(head_outs, axis=-1) * keep      # (n_seg, r, E)
        out_flat = out3.reshape(n_seg * r, E)

        if dil == 1:
            full = out_flat                                    # (sp, E)
        else:
            # scatter back to the dilated positions: full = gmat.T @ out_flat
            full = jax.lax.dot_general(
                gmat, out_flat.astype(_MXU_DTYPE), (((0,), (0,)), ((), ())),
                preferred_element_type=jnp.float32)
        acc = acc + full[:S, :] * inv_nb

    # output sublayer: Linear(E, E) + LayerNorm(eps=1e-12)   (no residual)
    z = jax.lax.dot_general(
        acc.astype(_MXU_DTYPE), wo_ref[...].astype(_MXU_DTYPE),
        (((1,), (1,)), ((), ())), preferred_element_type=jnp.float32)
    z = z + bo_ref[...]
    mu = jnp.mean(z, axis=-1, keepdims=True)
    var = jnp.mean(jnp.square(z - mu), axis=-1, keepdims=True)
    y = (z - mu) * jax.lax.rsqrt(var + 1e-12) * g_ref[...] + b_ref[...]
    o_ref[0] = y.astype(o_ref.dtype)


def _branch_key_bias(mask_f, seg, dil):
    """Per-(batch, segment) additive key bias for one branch.

    0.0 = attend, -1e30 = padded key.  Layer independent -> computed once per
    forward.  mask_f: (B, S) float, 1.0 where token is padding.
    """
    B, S = mask_f.shape
    sp = ((S + seg - 1) // seg) * seg
    if sp > S:
        # the reference pads key_padding_mask with zeros (= not masked)
        mask_f = jnp.concatenate(
            [mask_f, jnp.zeros((B, sp - S), mask_f.dtype)], axis=1)
    n_seg = sp // seg
    m = mask_f.reshape(B, n_seg, seg)[:, :, ::dil]             # (B, n_seg, r)
    r = m.shape[-1]
    return (m * (-1e30)).reshape(B, n_seg, 1, r).astype(jnp.float32)


def longbert_layer(h, branch_biases, params, branches, n_head):
    """One fused LongBERTLayer: all branches + average + Linear + LayerNorm."""
    B, S, E = h.shape

    in_specs = [pl.BlockSpec((1, S, E), lambda i: (i, 0, 0))]
    for bias in branch_biases:
        n_seg, r = bias.shape[1], bias.shape[3]
        in_specs.append(pl.BlockSpec((1, n_seg, 1, r),
                                     lambda i: (i, 0, 0, 0)))
    in_specs += [
        pl.BlockSpec((E, E), lambda i: (0, 0)),   # wq
        pl.BlockSpec((E, E), lambda i: (0, 0)),   # wo
        pl.BlockSpec((1, E), lambda i: (0, 0)),   # bo
        pl.BlockSpec((1, E), lambda i: (0, 0)),   # ln gamma
        pl.BlockSpec((1, E), lambda i: (0, 0)),   # ln beta
    ]

    return pl.pallas_call(
        partial(_layer_kernel, n_head=n_head, branches=tuple(branches)),
        out_shape=jax.ShapeDtypeStruct((B, S, E), jnp.float32),
        grid=(B,),
        in_specs=in_specs,
        out_specs=pl.BlockSpec((1, S, E), lambda i: (i, 0, 0)),
        compiler_params=pltpu.CompilerParams(
            dimension_semantics=("parallel",)),
    )(h, *branch_biases, params["wq"], params["wo"], params["bo"],
      params["ln_g"], params["ln_b"])


def longbert_encoder(h, attention_mask, layer_params, pooler_params,
                     segment_sizes, dilated_rates, n_head,
                     output_hidden_states=False):
    # key_padding_mask = ~attention_mask.bool() -> 1.0 where token is padding
    mask_f = (attention_mask == 0).astype(jnp.float32)
    branches = tuple(zip(segment_sizes, dilated_rates))
    # per-branch key-padding biases are layer independent: compute once
    branch_biases = [_branch_key_bias(mask_f, seg, dil) for seg, dil in branches]

    hidden_states = ()
    for p in layer_params:
        h = longbert_layer(h, branch_biases, p, branches, n_head)
        hidden_states = hidden_states + (h,)

    # pooler: tanh(Linear(h[:, 0, :])) -- tiny, launch-bound as a kernel, so
    # it is left to XLA per the performance review.
    h0 = h[:, 0, :]
    pooled = jnp.tanh(
        jax.lax.dot_general(h0, pooler_params["wp"], (((1,), (1,)), ((), ())),
                            preferred_element_type=jnp.float32)
        + pooler_params["bp"])

    out = {"last_hidden_state": h, "pooled_output": pooled}
    if output_hidden_states:
        out["hidden_states"] = hidden_states
    return out


if __name__ == "__main__":
    # synthetic LongBERT config
    B, S, E, H = 2, 16, 32, 4            # batch, seq, hidden, heads
    n_layers = 2
    segment_sizes = (8, 16)
    dilated_rates = (1, 2)
    # attention_probs_dropout_prob = hidden_dropout_prob = 0.0

    key = jax.random.PRNGKey(0)
    k_h, kq, ko, kbo, kp, kbp = jax.random.split(key, 6)

    hidden_state = jax.random.normal(k_h, (B, S, E), jnp.float32)
    # batch 1: tokens 8.. are padding -> the second (seg=8, dil=1) segment is
    # fully masked, exercising the nan_to_num -> zero path.
    attention_mask = jnp.ones((B, S), jnp.int32).at[1, 8:].set(0)

    # clone() deep-copies a single LongBERTLayer -> every layer starts with
    # identical weights, so we build one param set and reuse it.
    layer_p = {
        "wq": 0.1 * jax.random.normal(kq, (E, E), jnp.float32),
        "wo": 0.1 * jax.random.normal(ko, (E, E), jnp.float32),
        "bo": 0.01 * jax.random.normal(kbo, (1, E), jnp.float32),
        "ln_g": jnp.ones((1, E), jnp.float32),    # LayerNorm default init
        "ln_b": jnp.zeros((1, E), jnp.float32),
    }
    layer_params = [layer_p] * n_layers
    pooler_params = {
        "wp": 0.1 * jax.random.normal(kp, (E, E), jnp.float32),
        "bp": 0.01 * jax.random.normal(kbp, (1, E), jnp.float32),
    }

    out = longbert_encoder(hidden_state, attention_mask, layer_params,
                           pooler_params, segment_sizes, dilated_rates, H,
                           output_hidden_states=True)
    jax.block_until_ready(out["last_hidden_state"])
    jax.block_until_ready(out["pooled_output"])
    print("KERNEL_OK")
</pallas_src>

<mosaic_0001>
module attributes {stable_mosaic.version = 11 : i64} {
  func.func @_layer_kernel(%arg0: i32, %arg1: memref<1x16x32xf32, #tpu.memory_space<vmem>>, %arg2: memref<1x2x1x8xf32, #tpu.memory_space<vmem>>, %arg3: memref<1x1x1x8xf32, #tpu.memory_space<vmem>>, %arg4: memref<32x32xf32, #tpu.memory_space<vmem>>, %arg5: memref<32x32xf32, #tpu.memory_space<vmem>>, %arg6: memref<1x32xf32, #tpu.memory_space<vmem>>, %arg7: memref<1x32xf32, #tpu.memory_space<vmem>>, %arg8: memref<1x32xf32, #tpu.memory_space<vmem>>, %arg9: memref<1x16x32xf32, #tpu.memory_space<vmem>>) attributes {dimension_semantics = [#tpu.dimension_semantics<parallel>], iteration_bounds = array<i64: 2>, scalar_prefetch = 0 : i64, scratch_operands = 0 : i64, tpu.core_type = #tpu.core_type<tc>, window_params = [{transform_indices = @transform_0, window_bounds = array<i64: 1, 16, 32>}, {transform_indices = @transform_1, window_bounds = array<i64: 1, 2, 1, 8>}, {transform_indices = @transform_2, window_bounds = array<i64: 1, 1, 1, 8>}, {pipeline_mode = #tpu.pipeline_mode<synchronous>, transform_indices = @transform_3, window_bounds = array<i64: 32, 32>}, {pipeline_mode = #tpu.pipeline_mode<synchronous>, transform_indices = @transform_4, window_bounds = array<i64: 32, 32>}, {pipeline_mode = #tpu.pipeline_mode<synchronous>, transform_indices = @transform_5, window_bounds = array<i64: 1, 32>}, {pipeline_mode = #tpu.pipeline_mode<synchronous>, transform_indices = @transform_6, window_bounds = array<i64: 1, 32>}, {pipeline_mode = #tpu.pipeline_mode<synchronous>, transform_indices = @transform_7, window_bounds = array<i64: 1, 32>}, {transform_indices = @transform_8, window_bounds = array<i64: 1, 16, 32>}]} {
    %c0 = arith.constant 0 : index
    %c0_0 = arith.constant 0 : index
    %c0_1 = arith.constant 0 : index
    %0 = vector.load %arg1[%c0, %c0_0, %c0_1] : memref<1x16x32xf32, #tpu.memory_space<vmem>>, vector<1x16x32xf32>
    %1 = vector.shape_cast %0 : vector<1x16x32xf32> to vector<16x32xf32>
    %c0_2 = arith.constant 0 : index
    %c0_3 = arith.constant 0 : index
    %2 = vector.load %arg4[%c0_2, %c0_3] : memref<32x32xf32, #tpu.memory_space<vmem>>, vector<32x32xf32>
    %cst = arith.constant dense<0.000000e+00> : vector<16x32xf32>
    %3 = tpu.matmul %1, %2, %cst {dimension_numbers = #tpu.dot_dimension_numbers<[1], [1], [0], [0], [0, 0, 1, 0], [], []>} : vector<16x32xf32>, vector<32x32xf32>, vector<16x32xf32> -> vector<16x32xf32>
    %cst_4 = arith.constant 0.000000e+00 : f32
    %4 = vector.broadcast %cst_4 : f32 to vector<16x32xf32>
    %5 = vector.shape_cast %3 : vector<16x32xf32> to vector<2x8x32xf32>
    %c0_5 = arith.constant 0 : index
    %c0_6 = arith.constant 0 : index
    %c0_7 = arith.constant 0 : index
    %c0_8 = arith.constant 0 : index
    %6 = vector.load %arg2[%c0_5, %c0_6, %c0_7, %c0_8] : memref<1x2x1x8xf32, #tpu.memory_space<vmem>>, vector<1x2x1x8xf32>
    %7 = vector.shape_cast %6 : vector<1x2x1x8xf32> to vector<2x1x8xf32>
    %cst_9 = arith.constant dense<0xFF800000> : vector<2x1xf32>
    %8 = vector.multi_reduction <maximumf>, %7, %cst_9 [2] : vector<2x1x8xf32> to vector<2x1xf32>
    %9 = vector.shape_cast %8 : vector<2x1xf32> to vector<2x1x1xf32>
    %cst_10 = arith.constant -1.000000e+00 : f32
    %10 = vector.broadcast %cst_10 : f32 to vector<2x1x1xf32>
    %11 = arith.cmpf ogt, %9, %10 : vector<2x1x1xf32>
    %12 = arith.extui %11 : vector<2x1x1xi1> to vector<2x1x1xi32>
    %13 = arith.sitofp %12 : vector<2x1x1xi32> to vector<2x1x1xf32>
    %14 = vector.extract_strided_slice %5 {offsets = [0, 0, 0], sizes = [2, 8, 8], strides = [1, 1, 1]} : vector<2x8x32xf32> to vector<2x8x8xf32>
    "tpu.trace_start"() <{level = 10 : i32, message = "bqd,bkd->bqk"}> : () -> ()
    %cst_11 = arith.constant dense<0.000000e+00> : vector<2x8x8xf32>
    %15 = tpu.matmul %14, %14, %cst_11 {dimension_numbers = #tpu.dot_dimension_numbers<[2], [2], [1], [1], [0, 0, 0, 1, 1, 1], [0], [0]>} : vector<2x8x8xf32>, vector<2x8x8xf32>, vector<2x8x8xf32> -> vector<2x8x8xf32>
    "tpu.trace_stop"() : () -> ()
    %cst_12 = arith.constant 0.353553385 : f32
    %16 = vector.broadcast %cst_12 : f32 to vector<2x8x8xf32>
    %17 = arith.mulf %15, %16 : vector<2x8x8xf32>
    %18 = vector.broadcast %7 : vector<2x1x8xf32> to vector<2x8x8xf32>
    %19 = arith.addf %17, %18 : vector<2x8x8xf32>
    %cst_13 = arith.constant dense<0xFF800000> : vector<2x8xf32>
    %20 = vector.multi_reduction <maximumf>, %19, %cst_13 [2] : vector<2x8x8xf32> to vector<2x8xf32>
    %21 = vector.shape_cast %20 : vector<2x8xf32> to vector<2x8x1xf32>
    %22 = vector.broadcast %21 : vector<2x8x1xf32> to vector<2x8x8xf32>
    %23 = arith.subf %19, %22 : vector<2x8x8xf32>
    %24 = math.exp %23 : vector<2x8x8xf32>
    %cst_14 = arith.constant dense<0.000000e+00> : vector<2x8xf32>
    %25 = vector.multi_reduction <add>, %24, %cst_14 [2] : vector<2x8x8xf32> to vector<2x8xf32>
    %26 = vector.shape_cast %25 : vector<2x8xf32> to vector<2x8x1xf32>
    %27 = tpu.reciprocal %26 {approx = true} : vector<2x8x1xf32> -> vector<2x8x1xf32>
    %28 = vector.broadcast %27 : vector<2x8x1xf32> to vector<2x8x8xf32>
    %29 = arith.mulf %24, %28 : vector<2x8x8xf32>
    "tpu.trace_start"() <{level = 10 : i32, message = "bqk,bkd->bqd"}> : () -> ()
    %cst_15 = arith.constant dense<0.000000e+00> : vector<2x8x8xf32>
    %30 = tpu.matmul %29, %14, %cst_15 {dimension_numbers = #tpu.dot_dimension_numbers<[2], [1], [1], [2], [0, 0, 0, 1, 1, 2], [0], [0]>} : vector<2x8x8xf32>, vector<2x8x8xf32>, vector<2x8x8xf32> -> vector<2x8x8xf32>
    "tpu.trace_stop"() : () -> ()
    %31 = vector.extract_strided_slice %5 {offsets = [0, 0, 8], sizes = [2, 8, 8], strides = [1, 1, 1]} : vector<2x8x32xf32> to vector<2x8x8xf32>
    "tpu.trace_start"() <{level = 10 : i32, message = "bqd,bkd->bqk"}> : () -> ()
    %cst_16 = arith.constant dense<0.000000e+00> : vector<2x8x8xf32>
    %32 = tpu.matmul %31, %31, %cst_16 {dimension_numbers = #tpu.dot_dimension_numbers<[2], [2], [1], [1], [0, 0, 0, 1, 1, 1], [0], [0]>} : vector<2x8x8xf32>, vector<2x8x8xf32>, vector<2x8x8xf32> -> vector<2x8x8xf32>
    "tpu.trace_stop"() : () -> ()
    %cst_17 = arith.constant 0.353553385 : f32
    %33 = vector.broadcast %cst_17 : f32 to vector<2x8x8xf32>
    %34 = arith.mulf %32, %33 : vector<2x8x8xf32>
    %35 = vector.broadcast %7 : vector<2x1x8xf32> to vector<2x8x8xf32>
    %36 = arith.addf %34, %35 : vector<2x8x8xf32>
    %cst_18 = arith.constant dense<0xFF800000> : vector<2x8xf32>
    %37 = vector.multi_reduction <maximumf>, %36, %cst_18 [2] : vector<2x8x8xf32> to vector<2x8xf32>
    %38 = vector.shape_cast %37 : vector<2x8xf32> to vector<2x8x1xf32>
    %39 = vector.broadcast %38 : vector<2x8x1xf32> to vector<2x8x8xf32>
    %40 = arith.subf %36, %39 : vector<2x8x8xf32>
    %41 = math.exp %40 : vector<2x8x8xf32>
    %cst_19 = arith.constant dense<0.000000e+00> : vector<2x8xf32>
    %42 = vector.multi_reduction <add>, %41, %cst_19 [2] : vector<2x8x8xf32> to vector<2x8xf32>
    %43 = vector.shape_cast %42 : vector<2x8xf32> to vector<2x8x1xf32>
    %44 = tpu.reciprocal %43 {approx = true} : vector<2x8x1xf32> -> vector<2x8x1xf32>
    %45 = vector.broadcast %44 : vector<2x8x1xf32> to vector<2x8x8xf32>
    %46 = arith.mulf %41, %45 : vector<2x8x8xf32>
    "tpu.trace_start"() <{level = 10 : i32, message = "bqk,bkd->bqd"}> : () -> ()
    %cst_20 = arith.constant dense<0.000000e+00> : vector<2x8x8xf32>
    %47 = tpu.matmul %46, %31, %cst_20 {dimension_numbers = #tpu.dot_dimension_numbers<[2], [1], [1], [2], [0, 0, 0, 1, 1, 2], [0], [0]>} : vector<2x8x8xf32>, vector<2x8x8xf32>, vector<2x8x8xf32> -> vector<2x8x8xf32>
    "tpu.trace_stop"() : () -> ()
    %48 = vector.extract_strided_slice %5 {offsets = [0, 0, 16], sizes = [2, 8, 8], strides = [1, 1, 1]} : vector<2x8x32xf32> to vector<2x8x8xf32>
    "tpu.trace_start"() <{level = 10 : i32, message = "bqd,bkd->bqk"}> : () -> ()
    %cst_21 = arith.constant dense<0.000000e+00> : vector<2x8x8xf32>
    %49 = tpu.matmul %48, %48, %cst_21 {dimension_numbers = #tpu.dot_dimension_numbers<[2], [2], [1], [1], [0, 0, 0, 1, 1, 1], [0], [0]>} : vector<2x8x8xf32>, vector<2x8x8xf32>, vector<2x8x8xf32> -> vector<2x8x8xf32>
    "tpu.trace_stop"() : () -> ()
    %cst_22 = arith.constant 0.353553385 : f32
    %50 = vector.broadcast %cst_22 : f32 to vector<2x8x8xf32>
    %51 = arith.mulf %49, %50 : vector<2x8x8xf32>
    %52 = vector.broadcast %7 : vector<2x1x8xf32> to vector<2x8x8xf32>
    %53 = arith.addf %51, %52 : vector<2x8x8xf32>
    %cst_23 = arith.constant dense<0xFF800000> : vector<2x8xf32>
    %54 = vector.multi_reduction <maximumf>, %53, %cst_23 [2] : vector<2x8x8xf32> to vector<2x8xf32>
    %55 = vector.shape_cast %54 : vector<2x8xf32> to vector<2x8x1xf32>
    %56 = vector.broadcast %55 : vector<2x8x1xf32> to vector<2x8x8xf32>
    %57 = arith.subf %53, %56 : vector<2x8x8xf32>
    %58 = math.exp %57 : vector<2x8x8xf32>
    %cst_24 = arith.constant dense<0.000000e+00> : vector<2x8xf32>
    %59 = vector.multi_reduction <add>, %58, %cst_24 [2] : vector<2x8x8xf32> to vector<2x8xf32>
    %60 = vector.shape_cast %59 : vector<2x8xf32> to vector<2x8x1xf32>
    %61 = tpu.reciprocal %60 {approx = true} : vector<2x8x1xf32> -> vector<2x8x1xf32>
    %62 = vector.broadcast %61 : vector<2x8x1xf32> to vector<2x8x8xf32>
    %63 = arith.mulf %58, %62 : vector<2x8x8xf32>
    "tpu.trace_start"() <{level = 10 : i32, message = "bqk,bkd->bqd"}> : () -> ()
    %cst_25 = arith.constant dense<0.000000e+00> : vector<2x8x8xf32>
    %64 = tpu.matmul %63, %48, %cst_25 {dimension_numbers = #tpu.dot_dimension_numbers<[2], [1], [1], [2], [0, 0, 0, 1, 1, 2], [0], [0]>} : vector<2x8x8xf32>, vector<2x8x8xf32>, vector<2x8x8xf32> -> vector<2x8x8xf32>
    "tpu.trace_stop"() : () -> ()
    %65 = vector.extract_strided_slice %5 {offsets = [0, 0, 24], sizes = [2, 8, 8], strides = [1, 1, 1]} : vector<2x8x32xf32> to vector<2x8x8xf32>
    "tpu.trace_start"() <{level = 10 : i32, message = "bqd,bkd->bqk"}> : () -> ()
    %cst_26 = arith.constant dense<0.000000e+00> : vector<2x8x8xf32>
    %66 = tpu.matmul %65, %65, %cst_26 {dimension_numbers = #tpu.dot_dimension_numbers<[2], [2], [1], [1], [0, 0, 0, 1, 1, 1], [0], [0]>} : vector<2x8x8xf32>, vector<2x8x8xf32>, vector<2x8x8xf32> -> vector<2x8x8xf32>
    "tpu.trace_stop"() : () -> ()
    %cst_27 = arith.constant 0.353553385 : f32
    %67 = vector.broadcast %cst_27 : f32 to vector<2x8x8xf32>
    %68 = arith.mulf %66, %67 : vector<2x8x8xf32>
    %69 = vector.broadcast %7 : vector<2x1x8xf32> to vector<2x8x8xf32>
    %70 = arith.addf %68, %69 : vector<2x8x8xf32>
    %cst_28 = arith.constant dense<0xFF800000> : vector<2x8xf32>
    %71 = vector.multi_reduction <maximumf>, %70, %cst_28 [2] : vector<2x8x8xf32> to vector<2x8xf32>
    %72 = vector.shape_cast %71 : vector<2x8xf32> to vector<2x8x1xf32>
    %73 = vector.broadcast %72 : vector<2x8x1xf32> to vector<2x8x8xf32>
    %74 = arith.subf %70, %73 : vector<2x8x8xf32>
    %75 = math.exp %74 : vector<2x8x8xf32>
    %cst_29 = arith.constant dense<0.000000e+00> : vector<2x8xf32>
    %76 = vector.multi_reduction <add>, %75, %cst_29 [2] : vector<2x8x8xf32> to vector<2x8xf32>
    %77 = vector.shape_cast %76 : vector<2x8xf32> to vector<2x8x1xf32>
    %78 = tpu.reciprocal %77 {approx = true} : vector<2x8x1xf32> -> vector<2x8x1xf32>
    %79 = vector.broadcast %78 : vector<2x8x1xf32> to vector<2x8x8xf32>
    %80 = arith.mulf %75, %79 : vector<2x8x8xf32>
    "tpu.trace_start"() <{level = 10 : i32, message = "bqk,bkd->bqd"}> : () -> ()
    %cst_30 = arith.constant dense<0.000000e+00> : vector<2x8x8xf32>
    %81 = tpu.matmul %80, %65, %cst_30 {dimension_numbers = #tpu.dot_dimension_numbers<[2], [1], [1], [2], [0, 0, 0, 1, 1, 2], [0], [0]>} : vector<2x8x8xf32>, vector<2x8x8xf32>, vector<2x8x8xf32> -> vector<2x8x8xf32>
    "tpu.trace_stop"() : () -> ()
    %82 = tpu.concatenate %30, %47, %64, %81 in 2 : vector<2x8x8xf32>, vector<2x8x8xf32>, vector<2x8x8xf32>, vector<2x8x8xf32> -> vector<2x8x32xf32>
    %83 = vector.broadcast %13 : vector<2x1x1xf32> to vector<2x8x32xf32>
    %84 = arith.mulf %82, %83 : vector<2x8x32xf32>
    %85 = vector.shape_cast %84 : vector<2x8x32xf32> to vector<16x32xf32>
    %cst_31 = arith.constant 5.000000e-01 : f32
    %86 = vector.broadcast %cst_31 : f32 to vector<16x32xf32>
    %87 = arith.mulf %85, %86 : vector<16x32xf32>
    %88 = arith.addf %4, %87 : vector<16x32xf32>
    %89 = tpu.iota {dimensions = array<i32: 0>} : vector<1x8x16xi32>
    %90 = tpu.iota {dimensions = array<i32: 1>} : vector<1x8x16xi32>
    %91 = tpu.iota {dimensions = array<i32: 2>} : vector<1x8x16xi32>
    %c16_i32 = arith.constant 16 : i32
    %92 = vector.broadcast %c16_i32 : i32 to vector<1x8x16xi32>
    %93 = arith.muli %89, %92 : vector<1x8x16xi32>
    %c2_i32 = arith.constant 2 : i32
    %94 = vector.broadcast %c2_i32 : i32 to vector<1x8x16xi32>
    %95 = arith.muli %90, %94 : vector<1x8x16xi32>
    %96 = arith.addi %93, %95 : vector<1x8x16xi32>
    %97 = arith.cmpi eq, %91, %96 : vector<1x8x16xi32>
    %98 = arith.extui %97 : vector<1x8x16xi1> to vector<1x8x16xi32>
    %99 = arith.sitofp %98 : vector<1x8x16xi32> to vector<1x8x16xf32>
    %100 = vector.shape_cast %99 : vector<1x8x16xf32> to vector<8x16xf32>
    %cst_32 = arith.constant dense<0.000000e+00> : vector<8x32xf32>
    %101 = tpu.matmul %100, %3, %cst_32 {dimension_numbers = #tpu.dot_dimension_numbers<[1], [0], [0], [1], [0, 0, 1, 1], [], []>} : vector<8x16xf32>, vector<16x32xf32>, vector<8x32xf32> -> vector<8x32xf32>
    %102 = vector.shape_cast %101 : vector<8x32xf32> to vector<1x8x32xf32>
    %c0_33 = arith.constant 0 : index
    %c0_34 = arith.constant 0 : index
    %c0_35 = arith.constant 0 : index
    %c0_36 = arith.constant 0 : index
    %103 = vector.load %arg3[%c0_33, %c0_34, %c0_35, %c0_36] : memref<1x1x1x8xf32, #tpu.memory_space<vmem>>, vector<1x1x1x8xf32>
    %104 = vector.shape_cast %103 : vector<1x1x1x8xf32> to vector<1x1x8xf32>
    %cst_37 = arith.constant dense<0xFF800000> : vector<1x1xf32>
    %105 = vector.multi_reduction <maximumf>, %104, %cst_37 [2] : vector<1x1x8xf32> to vector<1x1xf32>
    %106 = vector.shape_cast %105 : vector<1x1xf32> to vector<1x1x1xf32>
    %cst_38 = arith.constant -1.000000e+00 : f32
    %107 = vector.broadcast %cst_38 : f32 to vector<1x1x1xf32>
    %108 = arith.cmpf ogt, %106, %107 : vector<1x1x1xf32>
    %109 = arith.extui %108 : vector<1x1x1xi1> to vector<1x1x1xi32>
    %110 = arith.sitofp %109 : vector<1x1x1xi32> to vector<1x1x1xf32>
    %111 = vector.extract_strided_slice %102 {offsets = [0, 0, 0], sizes = [1, 8, 8], strides = [1, 1, 1]} : vector<1x8x32xf32> to vector<1x8x8xf32>
    "tpu.trace_start"() <{level = 10 : i32, message = "bqd,bkd->bqk"}> : () -> ()
    %cst_39 = arith.constant dense<0.000000e+00> : vector<1x8x8xf32>
    %112 = tpu.matmul %111, %111, %cst_39 {dimension_numbers = #tpu.dot_dimension_numbers<[2], [2], [1], [1], [0, 0, 0, 1, 1, 1], [0], [0]>} : vector<1x8x8xf32>, vector<1x8x8xf32>, vector<1x8x8xf32> -> vector<1x8x8xf32>
    "tpu.trace_stop"() : () -> ()
    %cst_40 = arith.constant 0.353553385 : f32
    %113 = vector.broadcast %cst_40 : f32 to vector<1x8x8xf32>
    %114 = arith.mulf %112, %113 : vector<1x8x8xf32>
    %115 = vector.broadcast %104 : vector<1x1x8xf32> to vector<1x8x8xf32>
    %116 = arith.addf %114, %115 : vector<1x8x8xf32>
    %cst_41 = arith.constant dense<0xFF800000> : vector<1x8xf32>
    %117 = vector.multi_reduction <maximumf>, %116, %cst_41 [2] : vector<1x8x8xf32> to vector<1x8xf32>
    %118 = vector.shape_cast %117 : vector<1x8xf32> to vector<1x8x1xf32>
    %119 = vector.broadcast %118 : vector<1x8x1xf32> to vector<1x8x8xf32>
    %120 = arith.subf %116, %119 : vector<1x8x8xf32>
    %121 = math.exp %120 : vector<1x8x8xf32>
    %cst_42 = arith.constant dense<0.000000e+00> : vector<1x8xf32>
    %122 = vector.multi_reduction <add>, %121, %cst_42 [2] : vector<1x8x8xf32> to vector<1x8xf32>
    %123 = vector.shape_cast %122 : vector<1x8xf32> to vector<1x8x1xf32>
    %124 = tpu.reciprocal %123 {approx = true} : vector<1x8x1xf32> -> vector<1x8x1xf32>
    %125 = vector.broadcast %124 : vector<1x8x1xf32> to vector<1x8x8xf32>
    %126 = arith.mulf %121, %125 : vector<1x8x8xf32>
    "tpu.trace_start"() <{level = 10 : i32, message = "bqk,bkd->bqd"}> : () -> ()
    %cst_43 = arith.constant dense<0.000000e+00> : vector<1x8x8xf32>
    %127 = tpu.matmul %126, %111, %cst_43 {dimension_numbers = #tpu.dot_dimension_numbers<[2], [1], [1], [2], [0, 0, 0, 1, 1, 2], [0], [0]>} : vector<1x8x8xf32>, vector<1x8x8xf32>, vector<1x8x8xf32> -> vector<1x8x8xf32>
    "tpu.trace_stop"() : () -> ()
    %128 = vector.extract_strided_slice %102 {offsets = [0, 0, 8], sizes = [1, 8, 8], strides = [1, 1, 1]} : vector<1x8x32xf32> to vector<1x8x8xf32>
    "tpu.trace_start"() <{level = 10 : i32, message = "bqd,bkd->bqk"}> : () -> ()
    %cst_44 = arith.constant dense<0.000000e+00> : vector<1x8x8xf32>
    %129 = tpu.matmul %128, %128, %cst_44 {dimension_numbers = #tpu.dot_dimension_numbers<[2], [2], [1], [1], [0, 0, 0, 1, 1, 1], [0], [0]>} : vector<1x8x8xf32>, vector<1x8x8xf32>, vector<1x8x8xf32> -> vector<1x8x8xf32>
    "tpu.trace_stop"() : () -> ()
    %cst_45 = arith.constant 0.353553385 : f32
    %130 = vector.broadcast %cst_45 : f32 to vector<1x8x8xf32>
    %131 = arith.mulf %129, %130 : vector<1x8x8xf32>
    %132 = vector.broadcast %104 : vector<1x1x8xf32> to vector<1x8x8xf32>
    %133 = arith.addf %131, %132 : vector<1x8x8xf32>
    %cst_46 = arith.constant dense<0xFF800000> : vector<1x8xf32>
    %134 = vector.multi_reduction <maximumf>, %133, %cst_46 [2] : vector<1x8x8xf32> to vector<1x8xf32>
    %135 = vector.shape_cast %134 : vector<1x8xf32> to vector<1x8x1xf32>
    %136 = vector.broadcast %135 : vector<1x8x1xf32> to vector<1x8x8xf32>
    %137 = arith.subf %133, %136 : vector<1x8x8xf32>
    %138 = math.exp %137 : vector<1x8x8xf32>
    %cst_47 = arith.constant dense<0.000000e+00> : vector<1x8xf32>
    %139 = vector.multi_reduction <add>, %138, %cst_47 [2] : vector<1x8x8xf32> to vector<1x8xf32>
    %140 = vector.shape_cast %139 : vector<1x8xf32> to vector<1x8x1xf32>
    %141 = tpu.reciprocal %140 {approx = true} : vector<1x8x1xf32> -> vector<1x8x1xf32>
    %142 = vector.broadcast %141 : vector<1x8x1xf32> to vector<1x8x8xf32>
    %143 = arith.mulf %138, %142 : vector<1x8x8xf32>
    "tpu.trace_start"() <{level = 10 : i32, message = "bqk,bkd->bqd"}> : () -> ()
    %cst_48 = arith.constant dense<0.000000e+00> : vector<1x8x8xf32>
    %144 = tpu.matmul %143, %128, %cst_48 {dimension_numbers = #tpu.dot_dimension_numbers<[2], [1], [1], [2], [0, 0, 0, 1, 1, 2], [0], [0]>} : vector<1x8x8xf32>, vector<1x8x8xf32>, vector<1x8x8xf32> -> vector<1x8x8xf32>
    "tpu.trace_stop"() : () -> ()
    %145 = vector.extract_strided_slice %102 {offsets = [0, 0, 16], sizes = [1, 8, 8], strides = [1, 1, 1]} : vector<1x8x32xf32> to vector<1x8x8xf32>
    "tpu.trace_start"() <{level = 10 : i32, message = "bqd,bkd->bqk"}> : () -> ()
    %cst_49 = arith.constant dense<0.000000e+00> : vector<1x8x8xf32>
    %146 = tpu.matmul %145, %145, %cst_49 {dimension_numbers = #tpu.dot_dimension_numbers<[2], [2], [1], [1], [0, 0, 0, 1, 1, 1], [0], [0]>} : vector<1x8x8xf32>, vector<1x8x8xf32>, vector<1x8x8xf32> -> vector<1x8x8xf32>
    "tpu.trace_stop"() : () -> ()
    %cst_50 = arith.constant 0.353553385 : f32
    %147 = vector.broadcast %cst_50 : f32 to vector<1x8x8xf32>
    %148 = arith.mulf %146, %147 : vector<1x8x8xf32>
    %149 = vector.broadcast %104 : vector<1x1x8xf32> to vector<1x8x8xf32>
    %150 = arith.addf %148, %149 : vector<1x8x8xf32>
    %cst_51 = arith.constant dense<0xFF800000> : vector<1x8xf32>
    %151 = vector.multi_reduction <maximumf>, %150, %cst_51 [2] : vector<1x8x8xf32> to vector<1x8xf32>
    %152 = vector.shape_cast %151 : vector<1x8xf32> to vector<1x8x1xf32>
    %153 = vector.broadcast %152 : vector<1x8x1xf32> to vector<1x8x8xf32>
    %154 = arith.subf %150, %153 : vector<1x8x8xf32>
    %155 = math.exp %154 : vector<1x8x8xf32>
    %cst_52 = arith.constant dense<0.000000e+00> : vector<1x8xf32>
    %156 = vector.multi_reduction <add>, %155, %cst_52 [2] : vector<1x8x8xf32> to vector<1x8xf32>
    %157 = vector.shape_cast %156 : vector<1x8xf32> to vector<1x8x1xf32>
    %158 = tpu.reciprocal %157 {approx = true} : vector<1x8x1xf32> -> vector<1x8x1xf32>
    %159 = vector.broadcast %158 : vector<1x8x1xf32> to vector<1x8x8xf32>
    %160 = arith.mulf %155, %159 : vector<1x8x8xf32>
    "tpu.trace_start"() <{level = 10 : i32, message = "bqk,bkd->bqd"}> : () -> ()
    %cst_53 = arith.constant dense<0.000000e+00> : vector<1x8x8xf32>
    %161 = tpu.matmul %160, %145, %cst_53 {dimension_numbers = #tpu.dot_dimension_numbers<[2], [1], [1], [2], [0, 0, 0, 1, 1, 2], [0], [0]>} : vector<1x8x8xf32>, vector<1x8x8xf32>, vector<1x8x8xf32> -> vector<1x8x8xf32>
    "tpu.trace_stop"() : () -> ()
    %162 = vector.extract_strided_slice %102 {offsets = [0, 0, 24], sizes = [1, 8, 8], strides = [1, 1, 1]} : vector<1x8x32xf32> to vector<1x8x8xf32>
    "tpu.trace_start"() <{level = 10 : i32, message = "bqd,bkd->bqk"}> : () -> ()
    %cst_54 = arith.constant dense<0.000000e+00> : vector<1x8x8xf32>
    %163 = tpu.matmul %162, %162, %cst_54 {dimension_numbers = #tpu.dot_dimension_numbers<[2], [2], [1], [1], [0, 0, 0, 1, 1, 1], [0], [0]>} : vector<1x8x8xf32>, vector<1x8x8xf32>, vector<1x8x8xf32> -> vector<1x8x8xf32>
    "tpu.trace_stop"() : () -> ()
    %cst_55 = arith.constant 0.353553385 : f32
    %164 = vector.broadcast %cst_55 : f32 to vector<1x8x8xf32>
    %165 = arith.mulf %163, %164 : vector<1x8x8xf32>
    %166 = vector.broadcast %104 : vector<1x1x8xf32> to vector<1x8x8xf32>
    %167 = arith.addf %165, %166 : vector<1x8x8xf32>
    %cst_56 = arith.constant dense<0xFF800000> : vector<1x8xf32>
    %168 = vector.multi_reduction <maximumf>, %167, %cst_56 [2] : vector<1x8x8xf32> to vector<1x8xf32>
    %169 = vector.shape_cast %168 : vector<1x8xf32> to vector<1x8x1xf32>
    %170 = vector.broadcast %169 : vector<1x8x1xf32> to vector<1x8x8xf32>
    %171 = arith.subf %167, %170 : vector<1x8x8xf32>
    %172 = math.exp %171 : vector<1x8x8xf32>
    %cst_57 = arith.constant dense<0.000000e+00> : vector<1x8xf32>
    %173 = vector.multi_reduction <add>, %172, %cst_57 [2] : vector<1x8x8xf32> to vector<1x8xf32>
    %174 = vector.shape_cast %173 : vector<1x8xf32> to vector<1x8x1xf32>
    %175 = tpu.reciprocal %174 {approx = true} : vector<1x8x1xf32> -> vector<1x8x1xf32>
    %176 = vector.broadcast %175 : vector<1x8x1xf32> to vector<1x8x8xf32>
    %177 = arith.mulf %172, %176 : vector<1x8x8xf32>
    "tpu.trace_start"() <{level = 10 : i32, message = "bqk,bkd->bqd"}> : () -> ()
    %cst_58 = arith.constant dense<0.000000e+00> : vector<1x8x8xf32>
    %178 = tpu.matmul %177, %162, %cst_58 {dimension_numbers = #tpu.dot_dimension_numbers<[2], [1], [1], [2], [0, 0, 0, 1, 1, 2], [0], [0]>} : vector<1x8x8xf32>, vector<1x8x8xf32>, vector<1x8x8xf32> -> vector<1x8x8xf32>
    "tpu.trace_stop"() : () -> ()
    %179 = tpu.concatenate %127, %144, %161, %178 in 2 : vector<1x8x8xf32>, vector<1x8x8xf32>, vector<1x8x8xf32>, vector<1x8x8xf32> -> vector<1x8x32xf32>
    %180 = vector.broadcast %110 : vector<1x1x1xf32> to vector<1x8x32xf32>
    %181 = arith.mulf %179, %180 : vector<1x8x32xf32>
    %182 = vector.shape_cast %181 : vector<1x8x32xf32> to vector<8x32xf32>
    %cst_59 = arith.constant dense<0.000000e+00> : vector<16x32xf32>
    %183 = tpu.matmul %100, %182, %cst_59 {dimension_numbers = #tpu.dot_dimension_numbers<[0], [0], [1], [1], [0, 1, 1, 1], [], []>} : vector<8x16xf32>, vector<8x32xf32>, vector<16x32xf32> -> vector<16x32xf32>
    %cst_60 = arith.constant 5.000000e-01 : f32
    %184 = vector.broadcast %cst_60 : f32 to vector<16x32xf32>
    %185 = arith.mulf %183, %184 : vector<16x32xf32>
    %186 = arith.addf %88, %185 : vector<16x32xf32>
    %c0_61 = arith.constant 0 : index
    %c0_62 = arith.constant 0 : index
    %187 = vector.load %arg5[%c0_61, %c0_62] : memref<32x32xf32, #tpu.memory_space<vmem>>, vector<32x32xf32>
    %cst_63 = arith.constant dense<0.000000e+00> : vector<16x32xf32>
    %188 = tpu.matmul %186, %187, %cst_63 {dimension_numbers = #tpu.dot_dimension_numbers<[1], [1], [0], [0], [0, 0, 1, 0], [], []>} : vector<16x32xf32>, vector<32x32xf32>, vector<16x32xf32> -> vector<16x32xf32>
    %c0_64 = arith.constant 0 : index
    %c0_65 = arith.constant 0 : index
    %189 = vector.load %arg6[%c0_64, %c0_65] : memref<1x32xf32, #tpu.memory_space<vmem>>, vector<1x32xf32>
    %190 = vector.broadcast %189 : vector<1x32xf32> to vector<16x32xf32>
    %191 = arith.addf %188, %190 : vector<16x32xf32>
    %cst_66 = arith.constant dense<0.000000e+00> : vector<16xf32>
    %192 = vector.multi_reduction <add>, %191, %cst_66 [1] : vector<16x32xf32> to vector<16xf32>
    %193 = vector.shape_cast %192 : vector<16xf32> to vector<16x1xf32>
    %cst_67 = arith.constant 3.200000e+01 : f32
    %194 = vector.broadcast %cst_67 : f32 to vector<16x1xf32>
    %195 = arith.divf %193, %194 : vector<16x1xf32>
    %196 = vector.broadcast %195 : vector<16x1xf32> to vector<16x32xf32>
    %197 = arith.subf %191, %196 : vector<16x32xf32>
    %198 = arith.mulf %197, %197 : vector<16x32xf32>
    %cst_68 = arith.constant dense<0.000000e+00> : vector<16xf32>
    %199 = vector.multi_reduction <add>, %198, %cst_68 [1] : vector<16x32xf32> to vector<16xf32>
    %200 = vector.shape_cast %199 : vector<16xf32> to vector<16x1xf32>
    %cst_69 = arith.constant 3.200000e+01 : f32
    %201 = vector.broadcast %cst_69 : f32 to vector<16x1xf32>
    %202 = arith.divf %200, %201 : vector<16x1xf32>
    %203 = vector.broadcast %195 : vector<16x1xf32> to vector<16x32xf32>
    %204 = arith.subf %191, %203 : vector<16x32xf32>
    %cst_70 = arith.constant 9.99999996E-13 : f32
    %205 = vector.broadcast %cst_70 : f32 to vector<16x1xf32>
    %206 = arith.addf %202, %205 : vector<16x1xf32>
    %207 = math.rsqrt %206 : vector<16x1xf32>
    %208 = vector.broadcast %207 : vector<16x1xf32> to vector<16x32xf32>
    %209 = arith.mulf %204, %208 : vector<16x32xf32>
    %c0_71 = arith.constant 0 : index
    %c0_72 = arith.constant 0 : index
    %210 = vector.load %arg7[%c0_71, %c0_72] : memref<1x32xf32, #tpu.memory_space<vmem>>, vector<1x32xf32>
    %211 = vector.broadcast %210 : vector<1x32xf32> to vector<16x32xf32>
    %212 = arith.mulf %209, %211 : vector<16x32xf32>
    %c0_73 = arith.constant 0 : index
    %c0_74 = arith.constant 0 : index
    %213 = vector.load %arg8[%c0_73, %c0_74] : memref<1x32xf32, #tpu.memory_space<vmem>>, vector<1x32xf32>
    %214 = vector.broadcast %213 : vector<1x32xf32> to vector<16x32xf32>
    %215 = arith.addf %212, %214 : vector<16x32xf32>
    %c0_75 = arith.constant 0 : index
    %c0_76 = arith.constant 0 : index
    %c0_77 = arith.constant 0 : index
    %216 = vector.load %arg9[%c0_75, %c0_76, %c0_77] : memref<1x16x32xf32, #tpu.memory_space<vmem>>, vector<1x16x32xf32>
    %217 = vector.shape_cast %216 : vector<1x16x32xf32> to vector<16x32xf32>
    %218 = vector.shape_cast %215 : vector<16x32xf32> to vector<1x16x32xf32>
    tpu.vector_store %arg9[%c0_75, %c0_76, %c0_77], %218 {strides = array<i32>} : memref<1x16x32xf32, #tpu.memory_space<vmem>>, vector<1x16x32xf32>,
    return
  }
  func.func @transform_0(%arg0: i32) -> (i32, i32, i32) {
    %c0_i32 = arith.constant 0 : i32
    %c0_i32_0 = arith.constant 0 : i32
    %c0_i32_1 = arith.constant 0 : i32
    return %arg0, %c0_i32, %c0_i32_0 : i32, i32, i32
  }
  func.func @transform_1(%arg0: i32) -> (i32, i32, i32, i32) {
    %c0_i32 = arith.constant 0 : i32
    %c0_i32_0 = arith.constant 0 : i32
    %c0_i32_1 = arith.constant 0 : i32
    %c0_i32_2 = arith.constant 0 : i32
    return %arg0, %c0_i32, %c0_i32_0, %c0_i32_1 : i32, i32, i32, i32
  }
  func.func @transform_2(%arg0: i32) -> (i32, i32, i32, i32) {
    %c0_i32 = arith.constant 0 : i32
    %c0_i32_0 = arith.constant 0 : i32
    %c0_i32_1 = arith.constant 0 : i32
    %c0_i32_2 = arith.constant 0 : i32
    return %arg0, %c0_i32, %c0_i32_0, %c0_i32_1 : i32, i32, i32, i32
  }
  func.func @transform_3(%arg0: i32) -> (i32, i32) {
    %c0_i32 = arith.constant 0 : i32
    %c0_i32_0 = arith.constant 0 : i32
    %c0_i32_1 = arith.constant 0 : i32
    return %c0_i32, %c0_i32_0 : i32, i32
  }
  func.func @transform_4(%arg0: i32) -> (i32, i32) {
    %c0_i32 = arith.constant 0 : i32
    %c0_i32_0 = arith.constant 0 : i32
    %c0_i32_1 = arith.constant 0 : i32
    return %c0_i32, %c0_i32_0 : i32, i32
  }
  func.func @transform_5(%arg0: i32) -> (i32, i32) {
    %c0_i32 = arith.constant 0 : i32
    %c0_i32_0 = arith.constant 0 : i32
    %c0_i32_1 = arith.constant 0 : i32
    return %c0_i32, %c0_i32_0 : i32, i32
  }
  func.func @transform_6(%arg0: i32) -> (i32, i32) {
    %c0_i32 = arith.constant 0 : i32
    %c0_i32_0 = arith.constant 0 : i32
    %c0_i32_1 = arith.constant 0 : i32
    return %c0_i32, %c0_i32_0 : i32, i32
  }
  func.func @transform_7(%arg0: i32) -> (i32, i32) {
    %c0_i32 = arith.constant 0 : i32
    %c0_i32_0 = arith.constant 0 : i32
    %c0_i32_1 = arith.constant 0 : i32
    return %c0_i32, %c0_i32_0 : i32, i32
  }
  func.func @transform_8(%arg0: i32) -> (i32, i32, i32) {
    %c0_i32 = arith.constant 0 : i32
    %c0_i32_0 = arith.constant 0 : i32
    %c0_i32_1 = arith.constant 0 : i32
    return %arg0, %c0_i32, %c0_i32_0 : i32, i32, i32
  }
}

</mosaic_0001>

<llo_original>
// kernel: tpu_custom_call.1
$region0: #{tpu_custom_call.1}
  #allocation0 [shape = 'u32[]', space=smem, size = 0x4, offset = 0x4, fixed_abs, tag = 'smem constant byte address 0x4 - core index']
  #allocation1 [shape = 'u32[144,128]{1,0:T(1,128)}', space=vmem, size = 0x12000, scoped, tag = 'internal scratch']
  %s0 = inlined_call_operand.hbm [shape: f32[2,16,32], index: 0, kind: input, shape index: {}]
  %s1 = inlined_call_operand.hbm [shape: f32[2,2,1,8], index: 1, kind: input, shape index: {}]
  %s2 = inlined_call_operand.vmem [shape: f32[2,1,1,8], index: 2, kind: input, shape index: {}]
  %s3 = inlined_call_operand.hbm [shape: f32[32,32], index: 3, kind: input, shape index: {}]
  %s4 = inlined_call_operand.hbm [shape: f32[32,32], index: 4, kind: input, shape index: {}]
  %s5 = inlined_call_operand.vmem [shape: f32[1,32], index: 5, kind: input, shape index: {}]
  %s6 = inlined_call_operand.vmem [shape: f32[1,32], index: 6, kind: input, shape index: {}]
  %s7 = inlined_call_operand.vmem [shape: f32[1,32], index: 7, kind: input, shape index: {}]
  %s8 = inlined_call_operand.hbm [shape: f32[2,16,32], index: 8, kind: output, shape index: {}]
  %s9 = sld [smem:[#allocation0]]
  $region81: #{tpu_custom_call.1} parent=0
    _
  %s11 = ssub.s32 1, %s9
  %s12 = scalar_select 0, %s11, %s9
  $region1: #{tpu_custom_call.1} parent=0
    #allocation2 [shape = 'u8[16384]{0}', space=vmem, size = 0x4000, scoped, tag = 'input window, operand 0']
    #allocation3 [shape = 's32[2]{0}', space=sflag, size = 0x8, scoped, tag = 'scoped memory for tpu_custom_call.1']
    #allocation4 [shape = 's32[2]{0}', space=sflag, size = 0x8, scoped, tag = 'scoped memory for tpu_custom_call.1']
    #allocation5 [shape = 'u8[2048]{0}', space=vmem, size = 0x800, scoped, tag = 'input window, operand 1']
    #allocation6 [shape = 's32[2]{0}', space=sflag, size = 0x8, scoped, tag = 'scoped memory for tpu_custom_call.1']
    #allocation7 [shape = 'u8[16384]{0}', space=vmem, size = 0x4000, scoped, tag = 'input window, operand 3, single buffered']
    #allocation8 [shape = 'u8[16384]{0}', space=vmem, size = 0x4000, scoped, tag = 'input window, operand 4, single buffered']
    #allocation9 [shape = 's32[1]{0}', space=sflag, size = 0x4, scoped, tag = 'scoped memory for tpu_custom_call.1']
    #allocation10 [shape = 'u8[16384]{0}', space=vmem, size = 0x4000, scoped, tag = 'output window, operand 0']
    %13 = vsyncpa [#allocation3], 0
    %s14 = scalar_lea.sflag [#allocation3], 1
    %15 = vsyncpa %s14, 0
    %16 = vsyncpa [#allocation6], 0
    %s17 = scalar_lea.sflag [#allocation6], 1
    %18 = vsyncpa %s17, 0
    %19 = vsyncpa [#allocation9], 0
    %20 = vsyncpa [#allocation4], 0
    %s21 = scalar_lea.sflag [#allocation4], 1
    %22 = vsyncpa %s21, 0
    loop: start=0, step=1, limit=4
    $region2: #{tpu_custom_call.1} parent=1 // loop_pre_header
      _
    $region3: #{tpu_custom_call.1} parent=1 // loop_header
      %s24 = sphi 0, %s28
      %p25 = scmp.ge.s32.totalorder %s24, 4
      %s34 = sphi 0, %s36
      %s37 = sphi 0, %s34
      %s38 = sphi 0, %s37
      %s54 = sphi 0, %s38
      %s60 = sphi 0, %s62
      %s63 = sphi 0, %s60
      %s64 = sphi 0, %s63
      %s80 = sphi 0, %s64
      %s86 = sphi 0, %s88
      %s89 = sphi 0, %s86
      %s90 = sphi 0, %s89
      %s106 = sphi 0, %s90
      %s110 = sphi 0, %s110
      %s112 = sphi 0, %s110
      %s113 = sphi 0, %s112
      %s127 = sphi 0, %s113
      %s131 = sphi 0, %s131
      %s133 = sphi 0, %s131
      %s134 = sphi 0, %s133
      %s148 = sphi 0, %s134
      %s152 = sphi 0, %s152
      %s154 = sphi 0, %s152
      %s155 = sphi 0, %s154
      %s169 = sphi 0, %s155
      %s173 = sphi 0, %s173
      %s175 = sphi 0, %s173
      %s176 = sphi 0, %s175
      %s190 = sphi 0, %s176
      %s194 = sphi 0, %s194
      %s196 = sphi 0, %s194
      %s197 = sphi 0, %s196
      %s211 = sphi 0, %s197
      %s217 = sphi 0, %s219
      %s220 = sphi 0, %s217
      %s221 = sphi 0, %s220
      %s237 = sphi 0, %s221
    $region4: #{tpu_custom_call.1} parent=1 // loop_header_branch
      %27 = sbr.rel (%p25) target = $region8
    $region5: #{tpu_custom_call.1} parent=1 // loop_body
      %s29 = ssub.s32 %s24, 1
      %s30 = ssub.s32 %s24, 2
      %s31 = sadd.s32 %s24, 1
      %s32 = ssub.s32 %s24, %s31
      %p33 = scmp.eq.s32.totalorder %s32, 0
      %s35 = sadd.s32 %s34, 1
      %s36 = scalar_select %p33, %s34, %s35
      %p39 = pneg %p33
      %p40 = scmp.eq.s32.totalorder %s24, 1
      %p41 = por %p39, %p40
      %p42 = scmp.ne.s32.totalorder %s34, %s37
      %p43 = scmp.eq.s32.totalorder %s24, 0
      %p44 = por %p42, %p43
      %p45 = scmp.ne.s32.totalorder %s34, %s37
      %p46 = scmp.eq.s32.totalorder %s29, 1
      %p47 = por %p45, %p46
      %p48 = scmp.ne.s32.totalorder %s37, %s38
      %p49 = scmp.eq.s32.totalorder %s29, 0
      %p50 = por %p48, %p49
      %p51 = scmp.ne.s32.totalorder %s37, %s38
      %p52 = scmp.eq.s32.totalorder %s30, 1
      %p53 = por %p51, %p52
      %p55 = scmp.ne.s32.totalorder %s38, %s54
      %p56 = scmp.eq.s32.totalorder %s30, 0
      %p57 = por %p55, %p56
      %s58 = ssub.s32 %s24, %s31
      %p59 = scmp.eq.s32.totalorder %s58, 0
      %s61 = sadd.s32 %s60, 1
      %s62 = scalar_select %p59, %s60, %s61
      %p65 = pneg %p59
      %p66 = scmp.eq.s32.totalorder %s24, 1
      %p67 = por %p65, %p66
      %p68 = scmp.ne.s32.totalorder %s60, %s63
      %p69 = scmp.eq.s32.totalorder %s24, 0
      %p70 = por %p68, %p69
      %p71 = scmp.ne.s32.totalorder %s60, %s63
      %p72 = scmp.eq.s32.totalorder %s29, 1
      %p73 = por %p71, %p72
      %p74 = scmp.ne.s32.totalorder %s63, %s64
      %p75 = scmp.eq.s32.totalorder %s29, 0
      %p76 = por %p74, %p75
      %p77 = scmp.ne.s32.totalorder %s63, %s64
      %p78 = scmp.eq.s32.totalorder %s30, 1
      %p79 = por %p77, %p78
      %p81 = scmp.ne.s32.totalorder %s64, %s80
      %p82 = scmp.eq.s32.totalorder %s30, 0
      %p83 = por %p81, %p82
      %s84 = ssub.s32 %s24, %s31
      %p85 = scmp.eq.s32.totalorder %s84, 0
      %s87 = sadd.s32 %s86, 1
      %s88 = scalar_select %p85, %s86, %s87
      %p91 = pneg %p85
      %p92 = scmp.eq.s32.totalorder %s24, 1
      %p93 = por %p91, %p92
      %p94 = scmp.ne.s32.totalorder %s86, %s89
      %p95 = scmp.eq.s32.totalorder %s24, 0
      %p96 = por %p94, %p95
      %p97 = scmp.ne.s32.totalorder %s86, %s89
      %p98 = scmp.eq.s32.totalorder %s29, 1
      %p99 = por %p97, %p98
      %p100 = scmp.ne.s32.totalorder %s89, %s90
      %p101 = scmp.eq.s32.totalorder %s29, 0
      %p102 = por %p100, %p101
      %p103 = scmp.ne.s32.totalorder %s89, %s90
      %p104 = scmp.eq.s32.totalorder %s30, 1
      %p105 = por %p103, %p104
      %p107 = scmp.ne.s32.totalorder %s90, %s106
      %p108 = scmp.eq.s32.totalorder %s30, 0
      %p109 = por %p107, %p108
      %s111 = sadd.s32 %s110, 1
      %p114 = scmp.eq.s32.totalorder %s24, 1
      %p115 = scmp.ne.s32.totalorder %s110, %s112
      %p116 = scmp.eq.s32.totalorder %s24, 0
      %p117 = por %p115, %p116
      %p118 = scmp.ne.s32.totalorder %s110, %s112
      %p119 = scmp.eq.s32.totalorder %s29, 1
      %p120 = por %p118, %p119
      %p121 = scmp.ne.s32.totalorder %s112, %s113
      %p122 = scmp.eq.s32.totalorder %s29, 0
      %p123 = por %p121, %p122
      %p124 = scmp.ne.s32.totalorder %s112, %s113
      %p125 = scmp.eq.s32.totalorder %s30, 1
      %p126 = por %p124, %p125
      %p128 = scmp.ne.s32.totalorder %s113, %s127
      %p129 = scmp.eq.s32.totalorder %s30, 0
      %p130 = por %p128, %p129
      %s132 = sadd.s32 %s131, 1
      %p135 = scmp.eq.s32.totalorder %s24, 1
      %p136 = scmp.ne.s32.totalorder %s131, %s133
      %p137 = scmp.eq.s32.totalorder %s24, 0
      %p138 = por %p136, %p137
      %p139 = scmp.ne.s32.totalorder %s131, %s133
      %p140 = scmp.eq.s32.totalorder %s29, 1
      %p141 = por %p139, %p140
      %p142 = scmp.ne.s32.totalorder %s133, %s134
      %p143 = scmp.eq.s32.totalorder %s29, 0
      %p144 = por %p142, %p143
      %p145 = scmp.ne.s32.totalorder %s133, %s134
      %p146 = scmp.eq.s32.totalorder %s30, 1
      %p147 = por %p145, %p146
      %p149 = scmp.ne.s32.totalorder %s134, %s148
      %p150 = scmp.eq.s32.totalorder %s30, 0
      %p151 = por %p149, %p150
      %s153 = sadd.s32 %s152, 1
      %p156 = scmp.eq.s32.totalorder %s24, 1
      %p157 = scmp.ne.s32.totalorder %s152, %s154
      %p158 = scmp.eq.s32.totalorder %s24, 0
      %p159 = por %p157, %p158
      %p160 = scmp.ne.s32.totalorder %s152, %s154
      %p161 = scmp.eq.s32.totalorder %s29, 1
      %p162 = por %p160, %p161
      %p163 = scmp.ne.s32.totalorder %s154, %s155
      %p164 = scmp.eq.s32.totalorder %s29, 0
      %p165 = por %p163, %p164
      %p166 = scmp.ne.s32.totalorder %s154, %s155
      %p167 = scmp.eq.s32.totalorder %s30, 1
      %p168 = por %p166, %p167
      %p170 = scmp.ne.s32.totalorder %s155, %s169
      %p171 = scmp.eq.s32.totalorder %s30, 0
      %p172 = por %p170, %p171
      %s174 = sadd.s32 %s173, 1
      %p177 = scmp.eq.s32.totalorder %s24, 1
      %p178 = scmp.ne.s32.totalorder %s173, %s175
      %p179 = scmp.eq.s32.totalorder %s24, 0
      %p180 = por %p178, %p179
      %p181 = scmp.ne.s32.totalorder %s173, %s175
      %p182 = scmp.eq.s32.totalorder %s29, 1
      %p183 = por %p181, %p182
      %p184 = scmp.ne.s32.totalorder %s175, %s176
      %p185 = scmp.eq.s32.totalorder %s29, 0
      %p186 = por %p184, %p185
      %p187 = scmp.ne.s32.totalorder %s175, %s176
      %p188 = scmp.eq.s32.totalorder %s30, 1
      %p189 = por %p187, %p188
      %p191 = scmp.ne.s32.totalorder %s176, %s190
      %p192 = scmp.eq.s32.totalorder %s30, 0
      %p193 = por %p191, %p192
      %s195 = sadd.s32 %s194, 1
      %p198 = scmp.eq.s32.totalorder %s24, 1
      %p199 = scmp.ne.s32.totalorder %s194, %s196
      %p200 = scmp.eq.s32.totalorder %s24, 0
      %p201 = por %p199, %p200
      %p202 = scmp.ne.s32.totalorder %s194, %s196
      %p203 = scmp.eq.s32.totalorder %s29, 1
      %p204 = por %p202, %p203
      %p205 = scmp.ne.s32.totalorder %s196, %s197
      %p206 = scmp.eq.s32.totalorder %s29, 0
      %p207 = por %p205, %p206
      %p208 = scmp.ne.s32.totalorder %s196, %s197
      %p209 = scmp.eq.s32.totalorder %s30, 1
      %p210 = por %p208, %p209
      %p212 = scmp.ne.s32.totalorder %s197, %s211
      %p213 = scmp.eq.s32.totalorder %s30, 0
      %p214 = por %p212, %p213
      %s215 = ssub.s32 %s24, %s31
      %p216 = scmp.eq.s32.totalorder %s215, 0
      %s218 = sadd.s32 %s217, 1
      %s219 = scalar_select %p216, %s217, %s218
      %p222 = pneg %p216
      %p223 = scmp.eq.s32.totalorder %s24, 1
      %p224 = por %p222, %p223
      %p225 = scmp.ne.s32.totalorder %s217, %s220
      %p226 = scmp.eq.s32.totalorder %s24, 0
      %p227 = por %p225, %p226
      %p228 = scmp.ne.s32.totalorder %s217, %s220
      %p229 = scmp.eq.s32.totalorder %s29, 1
      %p230 = por %p228, %p229
      %p231 = scmp.ne.s32.totalorder %s220, %s221
      %p232 = scmp.eq.s32.totalorder %s29, 0
      %p233 = por %p231, %p232
      %p234 = scmp.ne.s32.totalorder %s220, %s221
      %p235 = scmp.eq.s32.totalorder %s30, 1
      %p236 = por %p234, %p235
      %p238 = scmp.ne.s32.totalorder %s221, %s237
      %p239 = scmp.eq.s32.totalorder %s30, 0
      %p240 = por %p238, %p239
      %p241 = scmp.le.s32.totalorder 1, %s24
      %p242 = scmp.lt.s32.totalorder %s24, 3
      %p243 = pnand %p241, %p242
      %p244 = pneg %p243
      // Predicated region
      $region9: #{tpu_custom_call.1} parent=5 // pred_check
        _
      $region10: #{tpu_custom_call.1} parent=5 // pred_check_branch
        %246 = sbr.rel (%p243) target = $region12
      $region11: #{tpu_custom_call.1} parent=5 // pred_region
        %s247 = ssub.s32 %s24, 1
        // Predicated region
        $region13: #{tpu_custom_call.1} parent=11 // pred_check
          %p248 = pneg %p123
        $region14: #{tpu_custom_call.1} parent=11 // pred_check_branch
          %250 = sbr.rel (%p248) target = $region16
        $region15: #{tpu_custom_call.1} parent=11 // pred_region
          %s252 = ssub.s32 512, 512
          %253 = vsyncadd [#allocation6], %s252
          %s254 = sshll.u32 [#allocation7], 4
          %s255 = int_to_ptr.vmem [resolvable:$true] %s254
          %260 = dma.hbm_to_vmem [thread:$0]  %s3, 512, %s255, [#allocation6], 128, 128, 8
        $region16: #{tpu_custom_call.1} parent=11 // pred_fallthru
          _
        // Predicated region
        $region17: #{tpu_custom_call.1} parent=11 // pred_check
          %p261 = pneg %p144
        $region18: #{tpu_custom_call.1} parent=11 // pred_check_branch
          %263 = sbr.rel (%p261) target = $region20
        $region19: #{tpu_custom_call.1} parent=11 // pred_region
          %s265 = ssub.s32 512, 512
          %266 = vsyncadd [#allocation9], %s265
          %s267 = sshll.u32 [#allocation8], 4
          %s268 = int_to_ptr.vmem [resolvable:$true] %s267
          %273 = dma.hbm_to_vmem [thread:$0]  %s4, 512, %s268, [#allocation9], 128, 128, 8
        $region20: #{tpu_custom_call.1} parent=11 // pred_fallthru
          _
        // Predicated region
        $region21: #{tpu_custom_call.1} parent=11 // pred_check
          %p274 = pneg %p165
        $region22: #{tpu_custom_call.1} parent=11 // pred_check_branch
          %276 = sbr.rel (%p274) target = $region24
        $region23: #{tpu_custom_call.1} parent=11 // pred_region
          _
        $region24: #{tpu_custom_call.1} parent=11 // pred_fallthru
          _
        // Predicated region
        $region25: #{tpu_custom_call.1} parent=11 // pred_check
          %p277 = pneg %p186
        $region26: #{tpu_custom_call.1} parent=11 // pred_check_branch
          %279 = sbr.rel (%p277) target = $region28
        $region27: #{tpu_custom_call.1} parent=11 // pred_region
          _
        $region28: #{tpu_custom_call.1} parent=11 // pred_fallthru
          _
        // Predicated region
        $region29: #{tpu_custom_call.1} parent=11 // pred_check
          %p280 = pneg %p207
        $region30: #{tpu_custom_call.1} parent=11 // pred_check_branch
          %282 = sbr.rel (%p280) target = $region32
        $region31: #{tpu_custom_call.1} parent=11 // pred_region
          _
        $region32: #{tpu_custom_call.1} parent=11 // pred_fallthru
          _
      $region12: #{tpu_custom_call.1} parent=5 // pred_fallthru
        _
      %p283 = scmp.lt.s32.totalorder %s24, 2
      // Predicated region
      $region33: #{tpu_custom_call.1} parent=5 // pred_check
        %p284 = pneg %p283
      $region34: #{tpu_custom_call.1} parent=5 // pred_check_branch
        %286 = sbr.rel (%p284) target = $region36
      $region35: #{tpu_custom_call.1} parent=5 // pred_region
        // Predicated region
        $region37: #{tpu_custom_call.1} parent=35 // pred_check
          %p287 = pneg %p44
        $region38: #{tpu_custom_call.1} parent=35 // pred_check_branch
          %289 = sbr.rel (%p287) target = $region40
        $region39: #{tpu_custom_call.1} parent=35 // pred_region
          %s290 = sand.u32 %s34, 1
          %s291 = scalar_lea.sflag [#allocation3], %s290
          %s292 = sand.u32 %s34, 1
          %s293 = smul.addr %s292, 16
          %s294 = scalar_lea.vmem [#allocation2], %s293
          %s296 = ssub.s32 256, 256
          %297 = vsyncadd %s291, %s296
          %s298 = smul.addr %s24, 2
          %s299 = smul.addr %s298, 128
          %s300 = scalar_lea.hbm %s0, %s299
          %s301 = sshll.u32 %s294, 4
          %s302 = int_to_ptr.vmem [resolvable:$true] %s301
          %307 = dma.hbm_to_vmem [thread:$0]  %s300, 256, %s302, %s291, 128, 128, 8
        $region40: #{tpu_custom_call.1} parent=35 // pred_fallthru
          _
        // Predicated region
        $region41: #{tpu_custom_call.1} parent=35 // pred_check
          %p308 = pneg %p70
        $region42: #{tpu_custom_call.1} parent=35 // pred_check_branch
          %310 = sbr.rel (%p308) target = $region44
        $region43: #{tpu_custom_call.1} parent=35 // pred_region
          %s311 = sand.u32 %s24, 1
          %s312 = scalar_lea.sflag [#allocation6], %s311
          %s313 = sand.u32 %s60, 1
          %s314 = smul.addr %s313, 2
          %s315 = scalar_lea.vmem [#allocation5], %s314
          %s317 = ssub.s32 32, 32
          %318 = vsyncadd %s312, %s317
          %s319 = smul.addr %s24, 2
          %s320 = smul.addr %s319, 16
          %s321 = scalar_lea.hbm %s1, %s320
          %s322 = sshll.u32 %s315, 4
          %s323 = int_to_ptr.vmem [resolvable:$true] %s322
          %328 = dma.hbm_to_vmem [thread:$0]  %s321, 32, %s323, %s312, 16, 16, 1
        $region44: #{tpu_custom_call.1} parent=35 // pred_fallthru
          _
        // Predicated region
        $region45: #{tpu_custom_call.1} parent=35 // pred_check
          %p329 = pneg %p96
        $region46: #{tpu_custom_call.1} parent=35 // pred_check_branch
          %331 = sbr.rel (%p329) target = $region48
        $region47: #{tpu_custom_call.1} parent=35 // pred_region
          %p332 = scmp.lt.s32.totalorder %s24, 1
          %s333 = scalar_select %p332, %s24, 1
          %s334 = scalar_lea.vmem %s2, %s333
        $region48: #{tpu_custom_call.1} parent=35 // pred_fallthru
          _
      $region36: #{tpu_custom_call.1} parent=5 // pred_fallthru
        _
      %p335 = scmp.le.s32.totalorder 1, %s24
      %p336 = scmp.lt.s32.totalorder %s24, 3
      %p337 = pnand %p335, %p336
      %p338 = pneg %p337
      // Predicated region
      $region49: #{tpu_custom_call.1} parent=5 // pred_check
        _
      $region50: #{tpu_custom_call.1} parent=5 // pred_check_branch
        %340 = sbr.rel (%p337) target = $region52
      $region51: #{tpu_custom_call.1} parent=5 // pred_region
        %s341 = ssub.s32 %s24, 1
        %s342 = sand.u32 %s37, 1
        %s343 = scalar_lea.sflag [#allocation3], %s342
        %s344 = sand.u32 %s37, 1
        %s345 = smul.addr %s344, 16
        %s346 = scalar_lea.vmem [#allocation2], %s345
        // Predicated region
        $region53: #{tpu_custom_call.1} parent=51 // pred_check
          %p347 = pneg %p50
        $region54: #{tpu_custom_call.1} parent=51 // pred_check_branch
          %349 = sbr.rel (%p347) target = $region56
        $region55: #{tpu_custom_call.1} parent=51 // pred_region
          %350 = dma.done %s343, 256
        $region56: #{tpu_custom_call.1} parent=51 // pred_fallthru
          _
        %s351 = sand.u32 %s29, 1
        %s352 = scalar_lea.sflag [#allocation6], %s351
        %s353 = sand.u32 %s63, 1
        %s354 = smul.addr %s353, 2
        %s355 = scalar_lea.vmem [#allocation5], %s354
        // Predicated region
        $region57: #{tpu_custom_call.1} parent=51 // pred_check
          %p356 = pneg %p76
        $region58: #{tpu_custom_call.1} parent=51 // pred_check_branch
          %358 = sbr.rel (%p356) target = $region60
        $region59: #{tpu_custom_call.1} parent=51 // pred_region
          %359 = dma.done %s352, 32
        $region60: #{tpu_custom_call.1} parent=51 // pred_fallthru
          _
        // Predicated region
        $region61: #{tpu_custom_call.1} parent=51 // pred_check
          %p360 = pneg %p123
        $region62: #{tpu_custom_call.1} parent=51 // pred_check_branch
          %362 = sbr.rel (%p360) target = $region64
        $region63: #{tpu_custom_call.1} parent=51 // pred_region
          %363 = dma.done [#allocation6], 512
        $region64: #{tpu_custom_call.1} parent=51 // pred_fallthru
          _
        // Predicated region
        $region65: #{tpu_custom_call.1} parent=51 // pred_check
          %p364 = pneg %p144
        $region66: #{tpu_custom_call.1} parent=51 // pred_check_branch
          %366 = sbr.rel (%p364) target = $region68
        $region67: #{tpu_custom_call.1} parent=51 // pred_region
          %367 = dma.done [#allocation9], 512
        $region68: #{tpu_custom_call.1} parent=51 // pred_fallthru
          _
        %s368 = sand.u32 %s37, 1
        %s369 = scalar_lea.sflag [#allocation3], %s368
        %s370 = sand.u32 %s37, 1
        %s371 = smul.addr %s370, 16
        %s372 = scalar_lea.vmem [#allocation2], %s371
        %p373 = pneg %p50
        %p374 = pneg %p47
        %s375 = sand.u32 %s29, 1
        %s376 = scalar_lea.sflag [#allocation6], %s375
        %s377 = sand.u32 %s63, 1
        %s378 = smul.addr %s377, 2
        %s379 = scalar_lea.vmem [#allocation5], %s378
        %p380 = pneg %p76
        %p381 = pneg %p73
        %p382 = scmp.lt.s32.totalorder %s29, 1
        %s383 = scalar_select %p382, %s29, 1
        %s384 = scalar_lea.vmem %s2, %s383
        %p385 = pneg %p102
        %p386 = pneg %p99
        %p387 = pneg %p123
        %p388 = pneg %p120
        %p389 = pneg %p144
        %p390 = pneg %p141
        %p391 = pneg %p165
        %p392 = pneg %p162
        %p393 = pneg %p186
        %p394 = pneg %p183
        %p395 = pneg %p207
        %p396 = pneg %p204
        %p397 = pneg %p233
        %p398 = pneg %p230
        %s399 = sand.u32 %s220, 1
        %s400 = scalar_lea.sflag [#allocation4], %s399
        %s401 = sand.u32 %s220, 1
        %s402 = smul.addr %s401, 16
        %s403 = scalar_lea.vmem [#allocation10], %s402
        %p404 = scmp.lt.s32.totalorder %s29, 1
        %s405 = scalar_select %p404, %s29, 1
        %s406 = scalar_lea.vmem %s2, %s405
        %v407 = vld [vmem:[%s346] sm:$0xff]
        %v408 = vld [vmem:[%s346 + $0x8] sm:$0xff]
        %v409 = vld [vmem:[#allocation7] sm:$0xff]
        %v410 = vld [vmem:[#allocation7 + $0x8] sm:$0xff]
        %v411 = vld [vmem:[#allocation7 + $0x10] sm:$0xff]
        %v412 = vld [vmem:[#allocation7 + $0x18] sm:$0xff]
        %vm413 = vcmask 261120
        %v415 = vsel %vm413, %v407, 0
        %v418 = vsel %vm413, %v408, 0
        %v421 = vsel %vm413, %v409, 0
        %v424 = vsel %vm413, %v410, 0
        %v427 = vsel %vm413, %v411, 0
        %v430 = vsel %vm413, %v412, 0
        %432 = vmatprep.subr.mxu0 0.0
        %433 = vmatpush1.xpose.msra.mxu0 %v421
        %434 = vmatprep.subr.mxu0 0.0
        %435 = vmatpush1.xpose.msra.mxu0 %v424
        %436 = vmatprep.subr.mxu0 0.0
        %437 = vmatpush1.xpose.msra.mxu0 %v427
        %438 = vmatprep.subr.mxu0 0.0
        %439 = vmatpush1.xpose.msra.mxu0 %v430
        %440 = vmatprep.subr.mxu0 0.0
        %441 = vmatpush1.xpose.msra.mxu0 0.0
        %442 = vmatprep.subr.mxu0 0.0
        %443 = vmatpush1.xpose.msra.mxu0 0.0
        %444 = vmatprep.subr.mxu0 0.0
        %445 = vmatpush1.xpose.msra.mxu0 0.0
        %446 = vmatprep.subr.mxu0 0.0
        %447 = vmatpush1.xpose.msra.mxu0 0.0
        %448 = vmatprep.subr.mxu0 0.0
        %449 = vmatpush1.xpose.msra.mxu0 0.0
        %450 = vmatprep.subr.mxu0 0.0
        %451 = vmatpush1.xpose.msra.mxu0 0.0
        %452 = vmatprep.subr.mxu0 0.0
        %453 = vmatpush1.xpose.msra.mxu0 0.0
        %454 = vmatprep.subr.mxu0 0.0
        %455 = vmatpush1.xpose.msra.mxu0 0.0
        %456 = vmatprep.subr.mxu0 0.0
        %457 = vmatpush1.xpose.msra.mxu0 0.0
        %458 = vmatprep.subr.mxu0 0.0
        %459 = vmatpush1.xpose.msra.mxu0 0.0
        %460 = vmatprep.subr.mxu0 0.0
        %461 = vmatpush1.xpose.msra.mxu0 0.0
        %462 = vmatprep.subr.mxu0 0.0
        %463 = vmatpush1.xpose.msra.mxu0 0.0
        %464 = vmatprep.subr.mxu0 0.0
        %465 = vmatpush1.xpose.msra.mxu0 0.0
        %466 = vmatprep.subr.mxu0 0.0
        %467 = vmatpush1.xpose.msra.mxu0 0.0
        %468 = vmatprep.subr.mxu0 0.0
        %469 = vmatpush1.xpose.msra.mxu0 0.0
        %470 = vmatprep.subr.mxu0 0.0
        %471 = vmatpush1.xpose.msra.mxu0 0.0
        %472 = vmatprep.subr.mxu0 0.0
        %473 = vmatpush1.xpose.msra.mxu0 0.0
        %474 = vmatprep.subr.mxu0 0.0
        %475 = vmatpush1.xpose.msra.mxu0 0.0
        %476 = vmatprep.subr.mxu0 0.0
        %477 = vmatpush1.xpose.msra.mxu0 0.0
        %478 = vmatprep.subr.mxu0 0.0
        %479 = vmatpush1.xpose.msra.mxu0 0.0
        %480 = vmatprep.subr.mxu0 0.0
        %481 = vmatpush1.xpose.msra.mxu0 0.0
        %482 = vmatprep.subr.mxu0 0.0
        %483 = vmatpush1.xpose.msra.mxu0 0.0
        %484 = vmatprep.subr.mxu0 0.0
        %485 = vmatpush1.xpose.msra.mxu0 0.0
        %486 = vmatprep.subr.mxu0 0.0
        %487 = vmatpush1.xpose.msra.mxu0 0.0
        %488 = vmatprep.subr.mxu0 0.0
        %489 = vmatpush1.xpose.msra.mxu0 0.0
        %490 = vmatprep.subr.mxu0 0.0
        %491 = vmatpush1.xpose.msra.mxu0 0.0
        %492 = vmatprep.subr.mxu0 0.0
        %493 = vmatpush1.xpose.msra.mxu0 0.0
        %494 = vmatprep.subr.mxu0 0.0
        %495 = vmatpush1.xpose.msra.mxu0 0.0
        %496 = vmatprep.mubr.f32.mxu0 0.0
        %497 = vmatmul.mubr.f32.gmra.mrb[0].mxu0 %v415
        %v498 = vpop.f32.mrb[0].mxu0
        %v499 = vadd.f32 0.0, %v498
        %v500 = vpop.f32.mrb[0].mxu0
        %501 = vmatprep.mubr.f32.mxu0 0.0
        %502 = vmatmul.mubr.f32.gmra.mrb[0].mxu0 %v418
        %v503 = vpop.f32.mrb[0].mxu0
        %v504 = vadd.f32 0.0, %v503
        %v505 = vpop.f32.mrb[0].mxu0
        %506 = vdwg.mxu0
        %v507 = vld [vmem:[%s355] sm:$0x1]
        %v508 = vld [vmem:[%s355 + $0x1] sm:$0x1]
        %vm509 = vcmask 57344
        %v510 = vsel %vm509, %v507, -inf
        %511 = vmax.xlane.f32.xlu0 %v510
        %v512 = vpop.xlane.xlu0 %511
        %v513 = vsel %vm509, %v508, -inf
        %514 = vmax.xlane.f32.xlu0 %v513
        %v515 = vpop.xlane.xlu0 %514
        %vm516 = vcmp.gt.f32.partialorder %v512, -1.0
        %vm517 = vcmp.gt.f32.partialorder %v515, -1.0
        %v518 = vsel %vm516, 1, 0
        %v519 = vsel %vm517, 1, 0
        %v520 = vcvt.s32.f32 %v518
        %v521 = vcvt.s32.f32 %v519
        %vm522 = vcmask 64512
        %v524 = vsel %vm522, %v499, 0
        %526 = vmatprep.subr.mxu0 0.0
        %527 = vmatpush1.xpose.msra.mxu0 %v524
        %528 = vmatprep.subr.mxu0 0.0
        %529 = vmatpush1.xpose.msra.mxu0 0.0
        %530 = vmatprep.subr.mxu0 0.0
        %531 = vmatpush1.xpose.msra.mxu0 0.0
        %532 = vmatprep.subr.mxu0 0.0
        %533 = vmatpush1.xpose.msra.mxu0 0.0
        %534 = vmatprep.subr.mxu0 0.0
        %535 = vmatpush1.xpose.msra.mxu0 0.0
        %536 = vmatprep.subr.mxu0 0.0
        %537 = vmatpush1.xpose.msra.mxu0 0.0
        %538 = vmatprep.subr.mxu0 0.0
        %539 = vmatpush1.xpose.msra.mxu0 0.0
        %540 = vmatprep.subr.mxu0 0.0
        %541 = vmatpush1.xpose.msra.mxu0 0.0
        %542 = vmatprep.subr.mxu0 0.0
        %543 = vmatpush1.xpose.msra.mxu0 0.0
        %544 = vmatprep.subr.mxu0 0.0
        %545 = vmatpush1.xpose.msra.mxu0 0.0
        %546 = vmatprep.subr.mxu0 0.0
        %547 = vmatpush1.xpose.msra.mxu0 0.0
        %548 = vmatprep.subr.mxu0 0.0
        %549 = vmatpush1.xpose.msra.mxu0 0.0
        %550 = vmatprep.subr.mxu0 0.0
        %551 = vmatpush1.xpose.msra.mxu0 0.0
        %552 = vmatprep.subr.mxu0 0.0
        %553 = vmatpush1.xpose.msra.mxu0 0.0
        %554 = vmatprep.subr.mxu0 0.0
        %555 = vmatpush1.xpose.msra.mxu0 0.0
        %556 = vmatprep.subr.mxu0 0.0
        %557 = vmatpush1.xpose.msra.mxu0 0.0
        %558 = vmatprep.subr.mxu0 0.0
        %559 = vmatpush1.xpose.msra.mxu0 0.0
        %560 = vmatprep.subr.mxu0 0.0
        %561 = vmatpush1.xpose.msra.mxu0 0.0
        %562 = vmatprep.subr.mxu0 0.0
        %563 = vmatpush1.xpose.msra.mxu0 0.0
        %564 = vmatprep.subr.mxu0 0.0
        %565 = vmatpush1.xpose.msra.mxu0 0.0
        %566 = vmatprep.subr.mxu0 0.0
        %567 = vmatpush1.xpose.msra.mxu0 0.0
        %568 = vmatprep.subr.mxu0 0.0
        %569 = vmatpush1.xpose.msra.mxu0 0.0
        %570 = vmatprep.subr.mxu0 0.0
        %571 = vmatpush1.xpose.msra.mxu0 0.0
        %572 = vmatprep.subr.mxu0 0.0
        %573 = vmatpush1.xpose.msra.mxu0 0.0
        %574 = vmatprep.subr.mxu0 0.0
        %575 = vmatpush1.xpose.msra.mxu0 0.0
        %576 = vmatprep.subr.mxu0 0.0
        %577 = vmatpush1.xpose.msra.mxu0 0.0
        %578 = vmatprep.subr.mxu0 0.0
        %579 = vmatpush1.xpose.msra.mxu0 0.0
        %580 = vmatprep.subr.mxu0 0.0
        %581 = vmatpush1.xpose.msra.mxu0 0.0
        %582 = vmatprep.subr.mxu0 0.0
        %583 = vmatpush1.xpose.msra.mxu0 0.0
        %584 = vmatprep.subr.mxu0 0.0
        %585 = vmatpush1.xpose.msra.mxu0 0.0
        %586 = vmatprep.subr.mxu0 0.0
        %587 = vmatpush1.xpose.msra.mxu0 0.0
        %588 = vmatprep.subr.mxu0 0.0
        %589 = vmatpush1.xpose.msra.mxu0 0.0
        %590 = vmatprep.mubr.f32.mxu0 0.0
        %591 = vmatmul.mubr.f32.gmra.mrb[0].mxu0 %v524
        %v592 = vpop.f32.mrb[0].mxu0
        %v593 = vadd.f32 0.0, %v592
        %v594 = vpop.f32.mrb[0].mxu0
        %595 = vdwg.mxu0
        %v597 = vsel %vm522, %v504, 0
        %599 = vmatprep.subr.mxu0 0.0
        %600 = vmatpush1.xpose.msra.mxu0 %v597
        %601 = vmatprep.subr.mxu0 0.0
        %602 = vmatpush1.xpose.msra.mxu0 0.0
        %603 = vmatprep.subr.mxu0 0.0
        %604 = vmatpush1.xpose.msra.mxu0 0.0
        %605 = vmatprep.subr.mxu0 0.0
        %606 = vmatpush1.xpose.msra.mxu0 0.0
        %607 = vmatprep.subr.mxu0 0.0
        %608 = vmatpush1.xpose.msra.mxu0 0.0
        %609 = vmatprep.subr.mxu0 0.0
        %610 = vmatpush1.xpose.msra.mxu0 0.0
        %611 = vmatprep.subr.mxu0 0.0
        %612 = vmatpush1.xpose.msra.mxu0 0.0
        %613 = vmatprep.subr.mxu0 0.0
        %614 = vmatpush1.xpose.msra.mxu0 0.0
        %615 = vmatprep.subr.mxu0 0.0
        %616 = vmatpush1.xpose.msra.mxu0 0.0
        %617 = vmatprep.subr.mxu0 0.0
        %618 = vmatpush1.xpose.msra.mxu0 0.0
        %619 = vmatprep.subr.mxu0 0.0
        %620 = vmatpush1.xpose.msra.mxu0 0.0
        %621 = vmatprep.subr.mxu0 0.0
        %622 = vmatpush1.xpose.msra.mxu0 0.0
        %623 = vmatprep.subr.mxu0 0.0
        %624 = vmatpush1.xpose.msra.mxu0 0.0
        %625 = vmatprep.subr.mxu0 0.0
        %626 = vmatpush1.xpose.msra.mxu0 0.0
        %627 = vmatprep.subr.mxu0 0.0
        %628 = vmatpush1.xpose.msra.mxu0 0.0
        %629 = vmatprep.subr.mxu0 0.0
        %630 = vmatpush1.xpose.msra.mxu0 0.0
        %631 = vmatprep.subr.mxu0 0.0
        %632 = vmatpush1.xpose.msra.mxu0 0.0
        %633 = vmatprep.subr.mxu0 0.0
        %634 = vmatpush1.xpose.msra.mxu0 0.0
        %635 = vmatprep.subr.mxu0 0.0
        %636 = vmatpush1.xpose.msra.mxu0 0.0
        %637 = vmatprep.subr.mxu0 0.0
        %638 = vmatpush1.xpose.msra.mxu0 0.0
        %639 = vmatprep.subr.mxu0 0.0
        %640 = vmatpush1.xpose.msra.mxu0 0.0
        %641 = vmatprep.subr.mxu0 0.0
        %642 = vmatpush1.xpose.msra.mxu0 0.0
        %643 = vmatprep.subr.mxu0 0.0
        %644 = vmatpush1.xpose.msra.mxu0 0.0
        %645 = vmatprep.subr.mxu0 0.0
        %646 = vmatpush1.xpose.msra.mxu0 0.0
        %647 = vmatprep.subr.mxu0 0.0
        %648 = vmatpush1.xpose.msra.mxu0 0.0
        %649 = vmatprep.subr.mxu0 0.0
        %650 = vmatpush1.xpose.msra.mxu0 0.0
        %651 = vmatprep.subr.mxu0 0.0
        %652 = vmatpush1.xpose.msra.mxu0 0.0
        %653 = vmatprep.subr.mxu0 0.0
        %654 = vmatpush1.xpose.msra.mxu0 0.0
        %655 = vmatprep.subr.mxu0 0.0
        %656 = vmatpush1.xpose.msra.mxu0 0.0
        %657 = vmatprep.subr.mxu0 0.0
        %658 = vmatpush1.xpose.msra.mxu0 0.0
        %659 = vmatprep.subr.mxu0 0.0
        %660 = vmatpush1.xpose.msra.mxu0 0.0
        %661 = vmatprep.subr.mxu0 0.0
        %662 = vmatpush1.xpose.msra.mxu0 0.0
        %663 = vmatprep.mubr.f32.mxu0 0.0
        %664 = vmatmul.mubr.f32.gmra.mrb[0].mxu0 %v597
        %v665 = vpop.f32.mrb[0].mxu0
        %v666 = vadd.f32 0.0, %v665
        %v667 = vpop.f32.mrb[0].mxu0
        %668 = vdwg.mxu0
        %v669 = vmul.f32 %v593, 0.35355338
        %v670 = vmul.f32 %v666, 0.35355338
        %v673 = vlaneseq
        %v674 = vshrl.u32 %v673, 7
        %v675 = vsub.s32 0, %v674
        %v676 = vrot.slane %v507, %v675
        %v677 = vlaneseq
        %v678 = vshrl.u32 %v677, 7
        %v679 = vsub.s32 0, %v678
        %v680 = vrot.slane %v508, %v679
        %v683 = vadd.f32 %v669, %v676
        %v684 = vadd.f32 %v670, %v680
        %v685 = vsel %vm522, %v683, -inf
        %686 = vmax.xlane.f32.xlu0 %v685
        %v687 = vpop.xlane.xlu0 %686
        %v688 = vsel %vm522, %v684, -inf
        %689 = vmax.xlane.f32.xlu0 %v688
        %v690 = vpop.xlane.xlu0 %689
        %v691 = vsub.f32 %v683, %v687
        %v692 = vsub.f32 %v684, %v690
        %v693 = vmul.f32 %v691, 1.442695
        %v694 = vpow.pop %v693
        %v695 = vmul.f32 %v692, 1.442695
        %v696 = vpow.pop %v695
        %v697 = vsel %vm522, %v694, 0.0
        %698 = vadd.xlane.f32.xlu0 %v697
        %v699 = vpop.xlane.xlu0 %698
        %v700 = vsel %vm522, %v696, 0.0
        %701 = vadd.xlane.f32.xlu0 %v700
        %v702 = vpop.xlane.xlu0 %701
        %v703 = vrcp.pop %v699
        %v704 = vrcp.pop %v702
        %v705 = vmul.f32 %v694, %v703
        %v706 = vmul.f32 %v696, %v704
        %v708 = vsel %vm522, %v705, 0
        %710 = vmatprep.subr.mxu0 0.0
        %711 = vmatpush1.msra.mxu0 %v499
        %712 = vmatprep.subr.mxu0 0.0
        %713 = vmatpush1.msra.mxu0 0.0
        %714 = vmatprep.subr.mxu0 0.0
        %715 = vmatpush1.msra.mxu0 0.0
        %716 = vmatprep.subr.mxu0 0.0
        %717 = vmatpush1.msra.mxu0 0.0
        %718 = vmatprep.subr.mxu0 0.0
        %719 = vmatpush1.msra.mxu0 0.0
        %720 = vmatprep.subr.mxu0 0.0
        %721 = vmatpush1.msra.mxu0 0.0
        %722 = vmatprep.subr.mxu0 0.0
        %723 = vmatpush1.msra.mxu0 0.0
        %724 = vmatprep.subr.mxu0 0.0
        %725 = vmatpush1.msra.mxu0 0.0
        %726 = vmatprep.subr.mxu0 0.0
        %727 = vmatpush1.msra.mxu0 0.0
        %728 = vmatprep.subr.mxu0 0.0
        %729 = vmatpush1.msra.mxu0 0.0
        %730 = vmatprep.subr.mxu0 0.0
        %731 = vmatpush1.msra.mxu0 0.0
        %732 = vmatprep.subr.mxu0 0.0
        %733 = vmatpush1.msra.mxu0 0.0
        %734 = vmatprep.subr.mxu0 0.0
        %735 = vmatpush1.msra.mxu0 0.0
        %736 = vmatprep.subr.mxu0 0.0
        %737 = vmatpush1.msra.mxu0 0.0
        %738 = vmatprep.subr.mxu0 0.0
        %739 = vmatpush1.msra.mxu0 0.0
        %740 = vmatprep.subr.mxu0 0.0
        %741 = vmatpush1.msra.mxu0 0.0
        %742 = vmatprep.subr.mxu0 0.0
        %743 = vmatpush1.msra.mxu0 0.0
        %744 = vmatprep.subr.mxu0 0.0
        %745 = vmatpush1.msra.mxu0 0.0
        %746 = vmatprep.subr.mxu0 0.0
        %747 = vmatpush1.msra.mxu0 0.0
        %748 = vmatprep.subr.mxu0 0.0
        %749 = vmatpush1.msra.mxu0 0.0
        %750 = vmatprep.subr.mxu0 0.0
        %751 = vmatpush1.msra.mxu0 0.0
        %752 = vmatprep.subr.mxu0 0.0
        %753 = vmatpush1.msra.mxu0 0.0
        %754 = vmatprep.subr.mxu0 0.0
        %755 = vmatpush1.msra.mxu0 0.0
        %756 = vmatprep.subr.mxu0 0.0
        %757 = vmatpush1.msra.mxu0 0.0
        %758 = vmatprep.subr.mxu0 0.0
        %759 = vmatpush1.msra.mxu0 0.0
        %760 = vmatprep.subr.mxu0 0.0
        %761 = vmatpush1.msra.mxu0 0.0
        %762 = vmatprep.subr.mxu0 0.0
        %763 = vmatpush1.msra.mxu0 0.0
        %764 = vmatprep.subr.mxu0 0.0
        %765 = vmatpush1.msra.mxu0 0.0
        %766 = vmatprep.subr.mxu0 0.0
        %767 = vmatpush1.msra.mxu0 0.0
        %768 = vmatprep.subr.mxu0 0.0
        %769 = vmatpush1.msra.mxu0 0.0
        %770 = vmatprep.subr.mxu0 0.0
        %771 = vmatpush1.msra.mxu0 0.0
        %772 = vmatprep.subr.mxu0 0.0
        %773 = vmatpush1.msra.mxu0 0.0
        %774 = vmatprep.mubr.f32.mxu0 0.0
        %775 = vmatmul.mubr.f32.gmra.mrb[0].mxu0 %v708
        %v776 = vpop.f32.mrb[0].mxu0
        %v777 = vadd.f32 0.0, %v776
        %v778 = vpop.f32.mrb[0].mxu0
        %779 = vdwg.mxu0
        %v781 = vsel %vm522, %v706, 0
        %783 = vmatprep.subr.mxu0 0.0
        %784 = vmatpush1.msra.mxu0 %v504
        %785 = vmatprep.subr.mxu0 0.0
        %786 = vmatpush1.msra.mxu0 0.0
        %787 = vmatprep.subr.mxu0 0.0
        %788 = vmatpush1.msra.mxu0 0.0
        %789 = vmatprep.subr.mxu0 0.0
        %790 = vmatpush1.msra.mxu0 0.0
        %791 = vmatprep.subr.mxu0 0.0
        %792 = vmatpush1.msra.mxu0 0.0
        %793 = vmatprep.subr.mxu0 0.0
        %794 = vmatpush1.msra.mxu0 0.0
        %795 = vmatprep.subr.mxu0 0.0
        %796 = vmatpush1.msra.mxu0 0.0
        %797 = vmatprep.subr.mxu0 0.0
        %798 = vmatpush1.msra.mxu0 0.0
        %799 = vmatprep.subr.mxu0 0.0
        %800 = vmatpush1.msra.mxu0 0.0
        %801 = vmatprep.subr.mxu0 0.0
        %802 = vmatpush1.msra.mxu0 0.0
        %803 = vmatprep.subr.mxu0 0.0
        %804 = vmatpush1.msra.mxu0 0.0
        %805 = vmatprep.subr.mxu0 0.0
        %806 = vmatpush1.msra.mxu0 0.0
        %807 = vmatprep.subr.mxu0 0.0
        %808 = vmatpush1.msra.mxu0 0.0
        %809 = vmatprep.subr.mxu0 0.0
        %810 = vmatpush1.msra.mxu0 0.0
        %811 = vmatprep.subr.mxu0 0.0
        %812 = vmatpush1.msra.mxu0 0.0
        %813 = vmatprep.subr.mxu0 0.0
        %814 = vmatpush1.msra.mxu0 0.0
        %815 = vmatprep.subr.mxu0 0.0
        %816 = vmatpush1.msra.mxu0 0.0
        %817 = vmatprep.subr.mxu0 0.0
        %818 = vmatpush1.msra.mxu0 0.0
        %819 = vmatprep.subr.mxu0 0.0
        %820 = vmatpush1.msra.mxu0 0.0
        %821 = vmatprep.subr.mxu0 0.0
        %822 = vmatpush1.msra.mxu0 0.0
        %823 = vmatprep.subr.mxu0 0.0
        %824 = vmatpush1.msra.mxu0 0.0
        %825 = vmatprep.subr.mxu0 0.0
        %826 = vmatpush1.msra.mxu0 0.0
        %827 = vmatprep.subr.mxu0 0.0
        %828 = vmatpush1.msra.mxu0 0.0
        %829 = vmatprep.subr.mxu0 0.0
        %830 = vmatpush1.msra.mxu0 0.0
        %831 = vmatprep.subr.mxu0 0.0
        %832 = vmatpush1.msra.mxu0 0.0
        %833 = vmatprep.subr.mxu0 0.0
        %834 = vmatpush1.msra.mxu0 0.0
        %835 = vmatprep.subr.mxu0 0.0
        %836 = vmatpush1.msra.mxu0 0.0
        %837 = vmatprep.subr.mxu0 0.0
        %838 = vmatpush1.msra.mxu0 0.0
        %839 = vmatprep.subr.mxu0 0.0
        %840 = vmatpush1.msra.mxu0 0.0
        %841 = vmatprep.subr.mxu0 0.0
        %842 = vmatpush1.msra.mxu0 0.0
        %843 = vmatprep.subr.mxu0 0.0
        %844 = vmatpush1.msra.mxu0 0.0
        %845 = vmatprep.subr.mxu0 0.0
        %846 = vmatpush1.msra.mxu0 0.0
        %847 = vmatprep.mubr.f32.mxu0 0.0
        %848 = vmatmul.mubr.f32.gmra.mrb[0].mxu0 %v781
        %v849 = vpop.f32.mrb[0].mxu0
        %v850 = vadd.f32 0.0, %v849
        %v851 = vpop.f32.mrb[0].mxu0
        %852 = vdwg.mxu0
        %853 = vrot.lane.b32.xlu0 %v499, 120
        %v854 = vpop.permute.xlu0 %853
        %v855 = vsel %vm522, %v854, 0
        %857 = vmatprep.subr.mxu0 0.0
        %858 = vmatpush1.xpose.msra.mxu0 %v855
        %859 = vmatprep.subr.mxu0 0.0
        %860 = vmatpush1.xpose.msra.mxu0 0.0
        %861 = vmatprep.subr.mxu0 0.0
        %862 = vmatpush1.xpose.msra.mxu0 0.0
        %863 = vmatprep.subr.mxu0 0.0
        %864 = vmatpush1.xpose.msra.mxu0 0.0
        %865 = vmatprep.subr.mxu0 0.0
        %866 = vmatpush1.xpose.msra.mxu0 0.0
        %867 = vmatprep.subr.mxu0 0.0
        %868 = vmatpush1.xpose.msra.mxu0 0.0
        %869 = vmatprep.subr.mxu0 0.0
        %870 = vmatpush1.xpose.msra.mxu0 0.0
        %871 = vmatprep.subr.mxu0 0.0
        %872 = vmatpush1.xpose.msra.mxu0 0.0
        %873 = vmatprep.subr.mxu0 0.0
        %874 = vmatpush1.xpose.msra.mxu0 0.0
        %875 = vmatprep.subr.mxu0 0.0
        %876 = vmatpush1.xpose.msra.mxu0 0.0
        %877 = vmatprep.subr.mxu0 0.0
        %878 = vmatpush1.xpose.msra.mxu0 0.0
        %879 = vmatprep.subr.mxu0 0.0
        %880 = vmatpush1.xpose.msra.mxu0 0.0
        %881 = vmatprep.subr.mxu0 0.0
        %882 = vmatpush1.xpose.msra.mxu0 0.0
        %883 = vmatprep.subr.mxu0 0.0
        %884 = vmatpush1.xpose.msra.mxu0 0.0
        %885 = vmatprep.subr.mxu0 0.0
        %886 = vmatpush1.xpose.msra.mxu0 0.0
        %887 = vmatprep.subr.mxu0 0.0
        %888 = vmatpush1.xpose.msra.mxu0 0.0
        %889 = vmatprep.subr.mxu0 0.0
        %890 = vmatpush1.xpose.msra.mxu0 0.0
        %891 = vmatprep.subr.mxu0 0.0
        %892 = vmatpush1.xpose.msra.mxu0 0.0
        %893 = vmatprep.subr.mxu0 0.0
        %894 = vmatpush1.xpose.msra.mxu0 0.0
        %895 = vmatprep.subr.mxu0 0.0
        %896 = vmatpush1.xpose.msra.mxu0 0.0
        %897 = vmatprep.subr.mxu0 0.0
        %898 = vmatpush1.xpose.msra.mxu0 0.0
        %899 = vmatprep.subr.mxu0 0.0
        %900 = vmatpush1.xpose.msra.mxu0 0.0
        %901 = vmatprep.subr.mxu0 0.0
        %902 = vmatpush1.xpose.msra.mxu0 0.0
        %903 = vmatprep.subr.mxu0 0.0
        %904 = vmatpush1.xpose.msra.mxu0 0.0
        %905 = vmatprep.subr.mxu0 0.0
        %906 = vmatpush1.xpose.msra.mxu0 0.0
        %907 = vmatprep.subr.mxu0 0.0
        %908 = vmatpush1.xpose.msra.mxu0 0.0
        %909 = vmatprep.subr.mxu0 0.0
        %910 = vmatpush1.xpose.msra.mxu0 0.0
        %911 = vmatprep.subr.mxu0 0.0
        %912 = vmatpush1.xpose.msra.mxu0 0.0
        %913 = vmatprep.subr.mxu0 0.0
        %914 = vmatpush1.xpose.msra.mxu0 0.0
        %915 = vmatprep.subr.mxu0 0.0
        %916 = vmatpush1.xpose.msra.mxu0 0.0
        %917 = vmatprep.subr.mxu0 0.0
        %918 = vmatpush1.xpose.msra.mxu0 0.0
        %919 = vmatprep.subr.mxu0 0.0
        %920 = vmatpush1.xpose.msra.mxu0 0.0
        %921 = vmatprep.mubr.f32.mxu0 0.0
        %922 = vmatmul.mubr.f32.gmra.mrb[0].mxu0 %v855
        %v923 = vpop.f32.mrb[0].mxu0
        %v924 = vadd.f32 0.0, %v923
        %v925 = vpop.f32.mrb[0].mxu0
        %926 = vdwg.mxu0
        %927 = vrot.lane.b32.xlu0 %v504, 120
        %v928 = vpop.permute.xlu0 %927
        %v929 = vsel %vm522, %v928, 0
        %931 = vmatprep.subr.mxu0 0.0
        %932 = vmatpush1.xpose.msra.mxu0 %v929
        %933 = vmatprep.subr.mxu0 0.0
        %934 = vmatpush1.xpose.msra.mxu0 0.0
        %935 = vmatprep.subr.mxu0 0.0
        %936 = vmatpush1.xpose.msra.mxu0 0.0
        %937 = vmatprep.subr.mxu0 0.0
        %938 = vmatpush1.xpose.msra.mxu0 0.0
        %939 = vmatprep.subr.mxu0 0.0
        %940 = vmatpush1.xpose.msra.mxu0 0.0
        %941 = vmatprep.subr.mxu0 0.0
        %942 = vmatpush1.xpose.msra.mxu0 0.0
        %943 = vmatprep.subr.mxu0 0.0
        %944 = vmatpush1.xpose.msra.mxu0 0.0
        %945 = vmatprep.subr.mxu0 0.0
        %946 = vmatpush1.xpose.msra.mxu0 0.0
        %947 = vmatprep.subr.mxu0 0.0
        %948 = vmatpush1.xpose.msra.mxu0 0.0
        %949 = vmatprep.subr.mxu0 0.0
        %950 = vmatpush1.xpose.msra.mxu0 0.0
        %951 = vmatprep.subr.mxu0 0.0
        %952 = vmatpush1.xpose.msra.mxu0 0.0
        %953 = vmatprep.subr.mxu0 0.0
        %954 = vmatpush1.xpose.msra.mxu0 0.0
        %955 = vmatprep.subr.mxu0 0.0
        %956 = vmatpush1.xpose.msra.mxu0 0.0
        %957 = vmatprep.subr.mxu0 0.0
        %958 = vmatpush1.xpose.msra.mxu0 0.0
        %959 = vmatprep.subr.mxu0 0.0
        %960 = vmatpush1.xpose.msra.mxu0 0.0
        %961 = vmatprep.subr.mxu0 0.0
        %962 = vmatpush1.xpose.msra.mxu0 0.0
        %963 = vmatprep.subr.mxu0 0.0
        %964 = vmatpush1.xpose.msra.mxu0 0.0
        %965 = vmatprep.subr.mxu0 0.0
        %966 = vmatpush1.xpose.msra.mxu0 0.0
        %967 = vmatprep.subr.mxu0 0.0
        %968 = vmatpush1.xpose.msra.mxu0 0.0
        %969 = vmatprep.subr.mxu0 0.0
        %970 = vmatpush1.xpose.msra.mxu0 0.0
        %971 = vmatprep.subr.mxu0 0.0
        %972 = vmatpush1.xpose.msra.mxu0 0.0
        %973 = vmatprep.subr.mxu0 0.0
        %974 = vmatpush1.xpose.msra.mxu0 0.0
        %975 = vmatprep.subr.mxu0 0.0
        %976 = vmatpush1.xpose.msra.mxu0 0.0
        %977 = vmatprep.subr.mxu0 0.0
        %978 = vmatpush1.xpose.msra.mxu0 0.0
        %979 = vmatprep.subr.mxu0 0.0
        %980 = vmatpush1.xpose.msra.mxu0 0.0
        %981 = vmatprep.subr.mxu0 0.0
        %982 = vmatpush1.xpose.msra.mxu0 0.0
        %983 = vmatprep.subr.mxu0 0.0
        %984 = vmatpush1.xpose.msra.mxu0 0.0
        %985 = vmatprep.subr.mxu0 0.0
        %986 = vmatpush1.xpose.msra.mxu0 0.0
        %987 = vmatprep.subr.mxu0 0.0
        %988 = vmatpush1.xpose.msra.mxu0 0.0
        %989 = vmatprep.subr.mxu0 0.0
        %990 = vmatpush1.xpose.msra.mxu0 0.0
        %991 = vmatprep.subr.mxu0 0.0
        %992 = vmatpush1.xpose.msra.mxu0 0.0
        %993 = vmatprep.subr.mxu0 0.0
        %994 = vmatpush1.xpose.msra.mxu0 0.0
        %995 = vmatprep.mubr.f32.mxu0 0.0
        %996 = vmatmul.mubr.f32.gmra.mrb[0].mxu0 %v929
        %v997 = vpop.f32.mrb[0].mxu0
        %v998 = vadd.f32 0.0, %v997
        %v999 = vpop.f32.mrb[0].mxu0
        %1000 = vdwg.mxu0
        %v1001 = vmul.f32 %v924, 0.35355338
        %v1002 = vmul.f32 %v998, 0.35355338
        %v1003 = vadd.f32 %v1001, %v676
        %v1004 = vadd.f32 %v1002, %v680
        %v1005 = vsel %vm522, %v1003, -inf
        %1006 = vmax.xlane.f32.xlu0 %v1005
        %v1007 = vpop.xlane.xlu0 %1006
        %v1008 = vsel %vm522, %v1004, -inf
        %1009 = vmax.xlane.f32.xlu0 %v1008
        %v1010 = vpop.xlane.xlu0 %1009
        %v1011 = vsub.f32 %v1003, %v1007
        %v1012 = vsub.f32 %v1004, %v1010
        %v1013 = vmul.f32 %v1011, 1.442695
        %v1014 = vpow.pop %v1013
        %v1015 = vmul.f32 %v1012, 1.442695
        %v1016 = vpow.pop %v1015
        %v1017 = vsel %vm522, %v1014, 0.0
        %1018 = vadd.xlane.f32.xlu0 %v1017
        %v1019 = vpop.xlane.xlu0 %1018
        %v1020 = vsel %vm522, %v1016, 0.0
        %1021 = vadd.xlane.f32.xlu0 %v1020
        %v1022 = vpop.xlane.xlu0 %1021
        %v1023 = vrcp.pop %v1019
        %v1024 = vrcp.pop %v1022
        %v1025 = vmul.f32 %v1014, %v1023
        %v1026 = vmul.f32 %v1016, %v1024
        %v1029 = vsel %vm522, %v1025, 0
        %1031 = vmatprep.subr.mxu0 0.0
        %1032 = vmatpush1.msra.mxu0 %v854
        %1033 = vmatprep.subr.mxu0 0.0
        %1034 = vmatpush1.msra.mxu0 0.0
        %1035 = vmatprep.subr.mxu0 0.0
        %1036 = vmatpush1.msra.mxu0 0.0
        %1037 = vmatprep.subr.mxu0 0.0
        %1038 = vmatpush1.msra.mxu0 0.0
        %1039 = vmatprep.subr.mxu0 0.0
        %1040 = vmatpush1.msra.mxu0 0.0
        %1041 = vmatprep.subr.mxu0 0.0
        %1042 = vmatpush1.msra.mxu0 0.0
        %1043 = vmatprep.subr.mxu0 0.0
        %1044 = vmatpush1.msra.mxu0 0.0
        %1045 = vmatprep.subr.mxu0 0.0
        %1046 = vmatpush1.msra.mxu0 0.0
        %1047 = vmatprep.subr.mxu0 0.0
        %1048 = vmatpush1.msra.mxu0 0.0
        %1049 = vmatprep.subr.mxu0 0.0
        %1050 = vmatpush1.msra.mxu0 0.0
        %1051 = vmatprep.subr.mxu0 0.0
        %1052 = vmatpush1.msra.mxu0 0.0
        %1053 = vmatprep.subr.mxu0 0.0
        %1054 = vmatpush1.msra.mxu0 0.0
        %1055 = vmatprep.subr.mxu0 0.0
        %1056 = vmatpush1.msra.mxu0 0.0
        %1057 = vmatprep.subr.mxu0 0.0
        %1058 = vmatpush1.msra.mxu0 0.0
        %1059 = vmatprep.subr.mxu0 0.0
        %1060 = vmatpush1.msra.mxu0 0.0
        %1061 = vmatprep.subr.mxu0 0.0
        %1062 = vmatpush1.msra.mxu0 0.0
        %1063 = vmatprep.subr.mxu0 0.0
        %1064 = vmatpush1.msra.mxu0 0.0
        %1065 = vmatprep.subr.mxu0 0.0
        %1066 = vmatpush1.msra.mxu0 0.0
        %1067 = vmatprep.subr.mxu0 0.0
        %1068 = vmatpush1.msra.mxu0 0.0
        %1069 = vmatprep.subr.mxu0 0.0
        %1070 = vmatpush1.msra.mxu0 0.0
        %1071 = vmatprep.subr.mxu0 0.0
        %1072 = vmatpush1.msra.mxu0 0.0
        %1073 = vmatprep.subr.mxu0 0.0
        %1074 = vmatpush1.msra.mxu0 0.0
        %1075 = vmatprep.subr.mxu0 0.0
        %1076 = vmatpush1.msra.mxu0 0.0
        %1077 = vmatprep.subr.mxu0 0.0
        %1078 = vmatpush1.msra.mxu0 0.0
        %1079 = vmatprep.subr.mxu0 0.0
        %1080 = vmatpush1.msra.mxu0 0.0
        %1081 = vmatprep.subr.mxu0 0.0
        %1082 = vmatpush1.msra.mxu0 0.0
        %1083 = vmatprep.subr.mxu0 0.0
        %1084 = vmatpush1.msra.mxu0 0.0
        %1085 = vmatprep.subr.mxu0 0.0
        %1086 = vmatpush1.msra.mxu0 0.0
        %1087 = vmatprep.subr.mxu0 0.0
        %1088 = vmatpush1.msra.mxu0 0.0
        %1089 = vmatprep.subr.mxu0 0.0
        %1090 = vmatpush1.msra.mxu0 0.0
        %1091 = vmatprep.subr.mxu0 0.0
        %1092 = vmatpush1.msra.mxu0 0.0
        %1093 = vmatprep.subr.mxu0 0.0
        %1094 = vmatpush1.msra.mxu0 0.0
        %1095 = vmatprep.mubr.f32.mxu0 0.0
        %1096 = vmatmul.mubr.f32.gmra.mrb[0].mxu0 %v1029
        %v1097 = vpop.f32.mrb[0].mxu0
        %v1098 = vadd.f32 0.0, %v1097
        %v1099 = vpop.f32.mrb[0].mxu0
        %1100 = vdwg.mxu0
        %v1103 = vsel %vm522, %v1026, 0
        %1105 = vmatprep.subr.mxu0 0.0
        %1106 = vmatpush1.msra.mxu0 %v928
        %1107 = vmatprep.subr.mxu0 0.0
        %1108 = vmatpush1.msra.mxu0 0.0
        %1109 = vmatprep.subr.mxu0 0.0
        %1110 = vmatpush1.msra.mxu0 0.0
        %1111 = vmatprep.subr.mxu0 0.0
        %1112 = vmatpush1.msra.mxu0 0.0
        %1113 = vmatprep.subr.mxu0 0.0
        %1114 = vmatpush1.msra.mxu0 0.0
        %1115 = vmatprep.subr.mxu0 0.0
        %1116 = vmatpush1.msra.mxu0 0.0
        %1117 = vmatprep.subr.mxu0 0.0
        %1118 = vmatpush1.msra.mxu0 0.0
        %1119 = vmatprep.subr.mxu0 0.0
        %1120 = vmatpush1.msra.mxu0 0.0
        %1121 = vmatprep.subr.mxu0 0.0
        %1122 = vmatpush1.msra.mxu0 0.0
        %1123 = vmatprep.subr.mxu0 0.0
        %1124 = vmatpush1.msra.mxu0 0.0
        %1125 = vmatprep.subr.mxu0 0.0
        %1126 = vmatpush1.msra.mxu0 0.0
        %1127 = vmatprep.subr.mxu0 0.0
        %1128 = vmatpush1.msra.mxu0 0.0
        %1129 = vmatprep.subr.mxu0 0.0
        %1130 = vmatpush1.msra.mxu0 0.0
        %1131 = vmatprep.subr.mxu0 0.0
        %1132 = vmatpush1.msra.mxu0 0.0
        %1133 = vmatprep.subr.mxu0 0.0
        %1134 = vmatpush1.msra.mxu0 0.0
        %1135 = vmatprep.subr.mxu0 0.0
        %1136 = vmatpush1.msra.mxu0 0.0
        %1137 = vmatprep.subr.mxu0 0.0
        %1138 = vmatpush1.msra.mxu0 0.0
        %1139 = vmatprep.subr.mxu0 0.0
        %1140 = vmatpush1.msra.mxu0 0.0
        %1141 = vmatprep.subr.mxu0 0.0
        %1142 = vmatpush1.msra.mxu0 0.0
        %1143 = vmatprep.subr.mxu0 0.0
        %1144 = vmatpush1.msra.mxu0 0.0
        %1145 = vmatprep.subr.mxu0 0.0
        %1146 = vmatpush1.msra.mxu0 0.0
        %1147 = vmatprep.subr.mxu0 0.0
        %1148 = vmatpush1.msra.mxu0 0.0
        %1149 = vmatprep.subr.mxu0 0.0
        %1150 = vmatpush1.msra.mxu0 0.0
        %1151 = vmatprep.subr.mxu0 0.0
        %1152 = vmatpush1.msra.mxu0 0.0
        %1153 = vmatprep.subr.mxu0 0.0
        %1154 = vmatpush1.msra.mxu0 0.0
        %1155 = vmatprep.subr.mxu0 0.0
        %1156 = vmatpush1.msra.mxu0 0.0
        %1157 = vmatprep.subr.mxu0 0.0
        %1158 = vmatpush1.msra.mxu0 0.0
        %1159 = vmatprep.subr.mxu0 0.0
        %1160 = vmatpush1.msra.mxu0 0.0
        %1161 = vmatprep.subr.mxu0 0.0
        %1162 = vmatpush1.msra.mxu0 0.0
        %1163 = vmatprep.subr.mxu0 0.0
        %1164 = vmatpush1.msra.mxu0 0.0
        %1165 = vmatprep.subr.mxu0 0.0
        %1166 = vmatpush1.msra.mxu0 0.0
        %1167 = vmatprep.subr.mxu0 0.0
        %1168 = vmatpush1.msra.mxu0 0.0
        %1169 = vmatprep.mubr.f32.mxu0 0.0
        %1170 = vmatmul.mubr.f32.gmra.mrb[0].mxu0 %v1103
        %v1171 = vpop.f32.mrb[0].mxu0
        %v1172 = vadd.f32 0.0, %v1171
        %v1173 = vpop.f32.mrb[0].mxu0
        %1174 = vdwg.mxu0
        %1175 = vrot.lane.b32.xlu0 %v499, 112
        %v1176 = vpop.permute.xlu0 %1175
        %v1177 = vsel %vm522, %v1176, 0
        %1179 = vmatprep.subr.mxu0 0.0
        %1180 = vmatpush1.xpose.msra.mxu0 %v1177
        %1181 = vmatprep.subr.mxu0 0.0
        %1182 = vmatpush1.xpose.msra.mxu0 0.0
        %1183 = vmatprep.subr.mxu0 0.0
        %1184 = vmatpush1.xpose.msra.mxu0 0.0
        %1185 = vmatprep.subr.mxu0 0.0
        %1186 = vmatpush1.xpose.msra.mxu0 0.0
        %1187 = vmatprep.subr.mxu0 0.0
        %1188 = vmatpush1.xpose.msra.mxu0 0.0
        %1189 = vmatprep.subr.mxu0 0.0
        %1190 = vmatpush1.xpose.msra.mxu0 0.0
        %1191 = vmatprep.subr.mxu0 0.0
        %1192 = vmatpush1.xpose.msra.mxu0 0.0
        %1193 = vmatprep.subr.mxu0 0.0
        %1194 = vmatpush1.xpose.msra.mxu0 0.0
        %1195 = vmatprep.subr.mxu0 0.0
        %1196 = vmatpush1.xpose.msra.mxu0 0.0
        %1197 = vmatprep.subr.mxu0 0.0
        %1198 = vmatpush1.xpose.msra.mxu0 0.0
        %1199 = vmatprep.subr.mxu0 0.0
        %1200 = vmatpush1.xpose.msra.mxu0 0.0
        %1201 = vmatprep.subr.mxu0 0.0
        %1202 = vmatpush1.xpose.msra.mxu0 0.0
        %1203 = vmatprep.subr.mxu0 0.0
        %1204 = vmatpush1.xpose.msra.mxu0 0.0
        %1205 = vmatprep.subr.mxu0 0.0
        %1206 = vmatpush1.xpose.msra.mxu0 0.0
        %1207 = vmatprep.subr.mxu0 0.0
        %1208 = vmatpush1.xpose.msra.mxu0 0.0
        %1209 = vmatprep.subr.mxu0 0.0
        %1210 = vmatpush1.xpose.msra.mxu0 0.0
        %1211 = vmatprep.subr.mxu0 0.0
        %1212 = vmatpush1.xpose.msra.mxu0 0.0
        %1213 = vmatprep.subr.mxu0 0.0
        %1214 = vmatpush1.xpose.msra.mxu0 0.0
        %1215 = vmatprep.subr.mxu0 0.0
        %1216 = vmatpush1.xpose.msra.mxu0 0.0
        %1217 = vmatprep.subr.mxu0 0.0
        %1218 = vmatpush1.xpose.msra.mxu0 0.0
        %1219 = vmatprep.subr.mxu0 0.0
        %1220 = vmatpush1.xpose.msra.mxu0 0.0
        %1221 = vmatprep.subr.mxu0 0.0
        %1222 = vmatpush1.xpose.msra.mxu0 0.0
        %1223 = vmatprep.subr.mxu0 0.0
        %1224 = vmatpush1.xpose.msra.mxu0 0.0
        %1225 = vmatprep.subr.mxu0 0.0
        %1226 = vmatpush1.xpose.msra.mxu0 0.0
        %1227 = vmatprep.subr.mxu0 0.0
        %1228 = vmatpush1.xpose.msra.mxu0 0.0
        %1229 = vmatprep.subr.mxu0 0.0
        %1230 = vmatpush1.xpose.msra.mxu0 0.0
        %1231 = vmatprep.subr.mxu0 0.0
        %1232 = vmatpush1.xpose.msra.mxu0 0.0
        %1233 = vmatprep.subr.mxu0 0.0
        %1234 = vmatpush1.xpose.msra.mxu0 0.0
        %1235 = vmatprep.subr.mxu0 0.0
        %1236 = vmatpush1.xpose.msra.mxu0 0.0
        %1237 = vmatprep.subr.mxu0 0.0
        %1238 = vmatpush1.xpose.msra.mxu0 0.0
        %1239 = vmatprep.subr.mxu0 0.0
        %1240 = vmatpush1.xpose.msra.mxu0 0.0
        %1241 = vmatprep.subr.mxu0 0.0
        %1242 = vmatpush1.xpose.msra.mxu0 0.0
        %1243 = vmatprep.mubr.f32.mxu0 0.0
        %1244 = vmatmul.mubr.f32.gmra.mrb[0].mxu0 %v1177
        %v1245 = vpop.f32.mrb[0].mxu0
        %v1246 = vadd.f32 0.0, %v1245
        %v1247 = vpop.f32.mrb[0].mxu0
        %1248 = vdwg.mxu0
        %1249 = vrot.lane.b32.xlu0 %v504, 112
        %v1250 = vpop.permute.xlu0 %1249
        %v1251 = vsel %vm522, %v1250, 0
        %1253 = vmatprep.subr.mxu0 0.0
        %1254 = vmatpush1.xpose.msra.mxu0 %v1251
        %1255 = vmatprep.subr.mxu0 0.0
        %1256 = vmatpush1.xpose.msra.mxu0 0.0
        %1257 = vmatprep.subr.mxu0 0.0
        %1258 = vmatpush1.xpose.msra.mxu0 0.0
        %1259 = vmatprep.subr.mxu0 0.0
        %1260 = vmatpush1.xpose.msra.mxu0 0.0
        %1261 = vmatprep.subr.mxu0 0.0
        %1262 = vmatpush1.xpose.msra.mxu0 0.0
        %1263 = vmatprep.subr.mxu0 0.0
        %1264 = vmatpush1.xpose.msra.mxu0 0.0
        %1265 = vmatprep.subr.mxu0 0.0
        %1266 = vmatpush1.xpose.msra.mxu0 0.0
        %1267 = vmatprep.subr.mxu0 0.0
        %1268 = vmatpush1.xpose.msra.mxu0 0.0
        %1269 = vmatprep.subr.mxu0 0.0
        %1270 = vmatpush1.xpose.msra.mxu0 0.0
        %1271 = vmatprep.subr.mxu0 0.0
        %1272 = vmatpush1.xpose.msra.mxu0 0.0
        %1273 = vmatprep.subr.mxu0 0.0
        %1274 = vmatpush1.xpose.msra.mxu0 0.0
        %1275 = vmatprep.subr.mxu0 0.0
        %1276 = vmatpush1.xpose.msra.mxu0 0.0
        %1277 = vmatprep.subr.mxu0 0.0
        %1278 = vmatpush1.xpose.msra.mxu0 0.0
        %1279 = vmatprep.subr.mxu0 0.0
        %1280 = vmatpush1.xpose.msra.mxu0 0.0
        %1281 = vmatprep.subr.mxu0 0.0
        %1282 = vmatpush1.xpose.msra.mxu0 0.0
        %1283 = vmatprep.subr.mxu0 0.0
        %1284 = vmatpush1.xpose.msra.mxu0 0.0
        %1285 = vmatprep.subr.mxu0 0.0
        %1286 = vmatpush1.xpose.msra.mxu0 0.0
        %1287 = vmatprep.subr.mxu0 0.0
        %1288 = vmatpush1.xpose.msra.mxu0 0.0
        %1289 = vmatprep.subr.mxu0 0.0
        %1290 = vmatpush1.xpose.msra.mxu0 0.0
        %1291 = vmatprep.subr.mxu0 0.0
        %1292 = vmatpush1.xpose.msra.mxu0 0.0
        %1293 = vmatprep.subr.mxu0 0.0
        %1294 = vmatpush1.xpose.msra.mxu0 0.0
        %1295 = vmatprep.subr.mxu0 0.0
        %1296 = vmatpush1.xpose.msra.mxu0 0.0
        %1297 = vmatprep.subr.mxu0 0.0
        %1298 = vmatpush1.xpose.msra.mxu0 0.0
        %1299 = vmatprep.subr.mxu0 0.0
        %1300 = vmatpush1.xpose.msra.mxu0 0.0
        %1301 = vmatprep.subr.mxu0 0.0
        %1302 = vmatpush1.xpose.msra.mxu0 0.0
        %1303 = vmatprep.subr.mxu0 0.0
        %1304 = vmatpush1.xpose.msra.mxu0 0.0
        %1305 = vmatprep.subr.mxu0 0.0
        %1306 = vmatpush1.xpose.msra.mxu0 0.0
        %1307 = vmatprep.subr.mxu0 0.0
        %1308 = vmatpush1.xpose.msra.mxu0 0.0
        %1309 = vmatprep.subr.mxu0 0.0
        %1310 = vmatpush1.xpose.msra.mxu0 0.0
        %1311 = vmatprep.subr.mxu0 0.0
        %1312 = vmatpush1.xpose.msra.mxu0 0.0
        %1313 = vmatprep.subr.mxu0 0.0
        %1314 = vmatpush1.xpose.msra.mxu0 0.0
        %1315 = vmatprep.subr.mxu0 0.0
        %1316 = vmatpush1.xpose.msra.mxu0 0.0
        %1317 = vmatprep.mubr.f32.mxu0 0.0
        %1318 = vmatmul.mubr.f32.gmra.mrb[0].mxu0 %v1251
        %v1319 = vpop.f32.mrb[0].mxu0
        %v1320 = vadd.f32 0.0, %v1319
        %v1321 = vpop.f32.mrb[0].mxu0
        %1322 = vdwg.mxu0
        %v1323 = vmul.f32 %v1246, 0.35355338
        %v1324 = vmul.f32 %v1320, 0.35355338
        %v1325 = vadd.f32 %v1323, %v676
        %v1326 = vadd.f32 %v1324, %v680
        %v1327 = vsel %vm522, %v1325, -inf
        %1328 = vmax.xlane.f32.xlu0 %v1327
        %v1329 = vpop.xlane.xlu0 %1328
        %v1330 = vsel %vm522, %v1326, -inf
        %1331 = vmax.xlane.f32.xlu0 %v1330
        %v1332 = vpop.xlane.xlu0 %1331
        %v1333 = vsub.f32 %v1325, %v1329
        %v1334 = vsub.f32 %v1326, %v1332
        %v1335 = vmul.f32 %v1333, 1.442695
        %v1336 = vpow.pop %v1335
        %v1337 = vmul.f32 %v1334, 1.442695
        %v1338 = vpow.pop %v1337
        %v1339 = vsel %vm522, %v1336, 0.0
        %1340 = vadd.xlane.f32.xlu0 %v1339
        %v1341 = vpop.xlane.xlu0 %1340
        %v1342 = vsel %vm522, %v1338, 0.0
        %1343 = vadd.xlane.f32.xlu0 %v1342
        %v1344 = vpop.xlane.xlu0 %1343
        %v1345 = vrcp.pop %v1341
        %v1346 = vrcp.pop %v1344
        %v1347 = vmul.f32 %v1336, %v1345
        %v1348 = vmul.f32 %v1338, %v1346
        %v1351 = vsel %vm522, %v1347, 0
        %1353 = vmatprep.subr.mxu0 0.0
        %1354 = vmatpush1.msra.mxu0 %v1176
        %1355 = vmatprep.subr.mxu0 0.0
        %1356 = vmatpush1.msra.mxu0 0.0
        %1357 = vmatprep.subr.mxu0 0.0
        %1358 = vmatpush1.msra.mxu0 0.0
        %1359 = vmatprep.subr.mxu0 0.0
        %1360 = vmatpush1.msra.mxu0 0.0
        %1361 = vmatprep.subr.mxu0 0.0
        %1362 = vmatpush1.msra.mxu0 0.0
        %1363 = vmatprep.subr.mxu0 0.0
        %1364 = vmatpush1.msra.mxu0 0.0
        %1365 = vmatprep.subr.mxu0 0.0
        %1366 = vmatpush1.msra.mxu0 0.0
        %1367 = vmatprep.subr.mxu0 0.0
        %1368 = vmatpush1.msra.mxu0 0.0
        %1369 = vmatprep.subr.mxu0 0.0
        %1370 = vmatpush1.msra.mxu0 0.0
        %1371 = vmatprep.subr.mxu0 0.0
        %1372 = vmatpush1.msra.mxu0 0.0
        %1373 = vmatprep.subr.mxu0 0.0
        %1374 = vmatpush1.msra.mxu0 0.0
        %1375 = vmatprep.subr.mxu0 0.0
        %1376 = vmatpush1.msra.mxu0 0.0
        %1377 = vmatprep.subr.mxu0 0.0
        %1378 = vmatpush1.msra.mxu0 0.0
        %1379 = vmatprep.subr.mxu0 0.0
        %1380 = vmatpush1.msra.mxu0 0.0
        %1381 = vmatprep.subr.mxu0 0.0
        %1382 = vmatpush1.msra.mxu0 0.0
        %1383 = vmatprep.subr.mxu0 0.0
        %1384 = vmatpush1.msra.mxu0 0.0
        %1385 = vmatprep.subr.mxu0 0.0
        %1386 = vmatpush1.msra.mxu0 0.0
        %1387 = vmatprep.subr.mxu0 0.0
        %1388 = vmatpush1.msra.mxu0 0.0
        %1389 = vmatprep.subr.mxu0 0.0
        %1390 = vmatpush1.msra.mxu0 0.0
        %1391 = vmatprep.subr.mxu0 0.0
        %1392 = vmatpush1.msra.mxu0 0.0
        %1393 = vmatprep.subr.mxu0 0.0
        %1394 = vmatpush1.msra.mxu0 0.0
        %1395 = vmatprep.subr.mxu0 0.0
        %1396 = vmatpush1.msra.mxu0 0.0
        %1397 = vmatprep.subr.mxu0 0.0
        %1398 = vmatpush1.msra.mxu0 0.0
        %1399 = vmatprep.subr.mxu0 0.0
        %1400 = vmatpush1.msra.mxu0 0.0
        %1401 = vmatprep.subr.mxu0 0.0
        %1402 = vmatpush1.msra.mxu0 0.0
        %1403 = vmatprep.subr.mxu0 0.0
        %1404 = vmatpush1.msra.mxu0 0.0
        %1405 = vmatprep.subr.mxu0 0.0
        %1406 = vmatpush1.msra.mxu0 0.0
        %1407 = vmatprep.subr.mxu0 0.0
        %1408 = vmatpush1.msra.mxu0 0.0
        %1409 = vmatprep.subr.mxu0 0.0
        %1410 = vmatpush1.msra.mxu0 0.0
        %1411 = vmatprep.subr.mxu0 0.0
        %1412 = vmatpush1.msra.mxu0 0.0
        %1413 = vmatprep.subr.mxu0 0.0
        %1414 = vmatpush1.msra.mxu0 0.0
        %1415 = vmatprep.subr.mxu0 0.0
        %1416 = vmatpush1.msra.mxu0 0.0
        %1417 = vmatprep.mubr.f32.mxu0 0.0
        %1418 = vmatmul.mubr.f32.gmra.mrb[0].mxu0 %v1351
        %v1419 = vpop.f32.mrb[0].mxu0
        %v1420 = vadd.f32 0.0, %v1419
        %v1421 = vpop.f32.mrb[0].mxu0
        %1422 = vdwg.mxu0
        %v1425 = vsel %vm522, %v1348, 0
        %1427 = vmatprep.subr.mxu0 0.0
        %1428 = vmatpush1.msra.mxu0 %v1250
        %1429 = vmatprep.subr.mxu0 0.0
        %1430 = vmatpush1.msra.mxu0 0.0
        %1431 = vmatprep.subr.mxu0 0.0
        %1432 = vmatpush1.msra.mxu0 0.0
        %1433 = vmatprep.subr.mxu0 0.0
        %1434 = vmatpush1.msra.mxu0 0.0
        %1435 = vmatprep.subr.mxu0 0.0
        %1436 = vmatpush1.msra.mxu0 0.0
        %1437 = vmatprep.subr.mxu0 0.0
        %1438 = vmatpush1.msra.mxu0 0.0
        %1439 = vmatprep.subr.mxu0 0.0
        %1440 = vmatpush1.msra.mxu0 0.0
        %1441 = vmatprep.subr.mxu0 0.0
        %1442 = vmatpush1.msra.mxu0 0.0
        %1443 = vmatprep.subr.mxu0 0.0
        %1444 = vmatpush1.msra.mxu0 0.0
        %1445 = vmatprep.subr.mxu0 0.0
        %1446 = vmatpush1.msra.mxu0 0.0
        %1447 = vmatprep.subr.mxu0 0.0
        %1448 = vmatpush1.msra.mxu0 0.0
        %1449 = vmatprep.subr.mxu0 0.0
        %1450 = vmatpush1.msra.mxu0 0.0
        %1451 = vmatprep.subr.mxu0 0.0
        %1452 = vmatpush1.msra.mxu0 0.0
        %1453 = vmatprep.subr.mxu0 0.0
        %1454 = vmatpush1.msra.mxu0 0.0
        %1455 = vmatprep.subr.mxu0 0.0
        %1456 = vmatpush1.msra.mxu0 0.0
        %1457 = vmatprep.subr.mxu0 0.0
        %1458 = vmatpush1.msra.mxu0 0.0
        %1459 = vmatprep.subr.mxu0 0.0
        %1460 = vmatpush1.msra.mxu0 0.0
        %1461 = vmatprep.subr.mxu0 0.0
        %1462 = vmatpush1.msra.mxu0 0.0
        %1463 = vmatprep.subr.mxu0 0.0
        %1464 = vmatpush1.msra.mxu0 0.0
        %1465 = vmatprep.subr.mxu0 0.0
        %1466 = vmatpush1.msra.mxu0 0.0
        %1467 = vmatprep.subr.mxu0 0.0
        %1468 = vmatpush1.msra.mxu0 0.0
        %1469 = vmatprep.subr.mxu0 0.0
        %1470 = vmatpush1.msra.mxu0 0.0
        %1471 = vmatprep.subr.mxu0 0.0
        %1472 = vmatpush1.msra.mxu0 0.0
        %1473 = vmatprep.subr.mxu0 0.0
        %1474 = vmatpush1.msra.mxu0 0.0
        %1475 = vmatprep.subr.mxu0 0.0
        %1476 = vmatpush1.msra.mxu0 0.0
        %1477 = vmatprep.subr.mxu0 0.0
        %1478 = vmatpush1.msra.mxu0 0.0
        %1479 = vmatprep.subr.mxu0 0.0
        %1480 = vmatpush1.msra.mxu0 0.0
        %1481 = vmatprep.subr.mxu0 0.0
        %1482 = vmatpush1.msra.mxu0 0.0
        %1483 = vmatprep.subr.mxu0 0.0
        %1484 = vmatpush1.msra.mxu0 0.0
        %1485 = vmatprep.subr.mxu0 0.0
        %1486 = vmatpush1.msra.mxu0 0.0
        %1487 = vmatprep.subr.mxu0 0.0
        %1488 = vmatpush1.msra.mxu0 0.0
        %1489 = vmatprep.subr.mxu0 0.0
        %1490 = vmatpush1.msra.mxu0 0.0
        %1491 = vmatprep.mubr.f32.mxu0 0.0
        %1492 = vmatmul.mubr.f32.gmra.mrb[0].mxu0 %v1425
        %v1493 = vpop.f32.mrb[0].mxu0
        %v1494 = vadd.f32 0.0, %v1493
        %v1495 = vpop.f32.mrb[0].mxu0
        %1496 = vdwg.mxu0
        %1497 = vrot.lane.b32.xlu0 %v499, 104
        %v1498 = vpop.permute.xlu0 %1497
        %v1499 = vsel %vm522, %v1498, 0
        %1501 = vmatprep.subr.mxu0 0.0
        %1502 = vmatpush1.xpose.msra.mxu0 %v1499
        %1503 = vmatprep.subr.mxu0 0.0
        %1504 = vmatpush1.xpose.msra.mxu0 0.0
        %1505 = vmatprep.subr.mxu0 0.0
        %1506 = vmatpush1.xpose.msra.mxu0 0.0
        %1507 = vmatprep.subr.mxu0 0.0
        %1508 = vmatpush1.xpose.msra.mxu0 0.0
        %1509 = vmatprep.subr.mxu0 0.0
        %1510 = vmatpush1.xpose.msra.mxu0 0.0
        %1511 = vmatprep.subr.mxu0 0.0
        %1512 = vmatpush1.xpose.msra.mxu0 0.0
        %1513 = vmatprep.subr.mxu0 0.0
        %1514 = vmatpush1.xpose.msra.mxu0 0.0
        %1515 = vmatprep.subr.mxu0 0.0
        %1516 = vmatpush1.xpose.msra.mxu0 0.0
        %1517 = vmatprep.subr.mxu0 0.0
        %1518 = vmatpush1.xpose.msra.mxu0 0.0
        %1519 = vmatprep.subr.mxu0 0.0
        %1520 = vmatpush1.xpose.msra.mxu0 0.0
        %1521 = vmatprep.subr.mxu0 0.0
        %1522 = vmatpush1.xpose.msra.mxu0 0.0
        %1523 = vmatprep.subr.mxu0 0.0
        %1524 = vmatpush1.xpose.msra.mxu0 0.0
        %1525 = vmatprep.subr.mxu0 0.0
        %1526 = vmatpush1.xpose.msra.mxu0 0.0
        %1527 = vmatprep.subr.mxu0 0.0
        %1528 = vmatpush1.xpose.msra.mxu0 0.0
        %1529 = vmatprep.subr.mxu0 0.0
        %1530 = vmatpush1.xpose.msra.mxu0 0.0
        %1531 = vmatprep.subr.mxu0 0.0
        %1532 = vmatpush1.xpose.msra.mxu0 0.0
        %1533 = vmatprep.subr.mxu0 0.0
        %1534 = vmatpush1.xpose.msra.mxu0 0.0
        %1535 = vmatprep.subr.mxu0 0.0
        %1536 = vmatpush1.xpose.msra.mxu0 0.0
        %1537 = vmatprep.subr.mxu0 0.0
        %1538 = vmatpush1.xpose.msra.mxu0 0.0
        %1539 = vmatprep.subr.mxu0 0.0
        %1540 = vmatpush1.xpose.msra.mxu0 0.0
        %1541 = vmatprep.subr.mxu0 0.0
        %1542 = vmatpush1.xpose.msra.mxu0 0.0
        %1543 = vmatprep.subr.mxu0 0.0
        %1544 = vmatpush1.xpose.msra.mxu0 0.0
        %1545 = vmatprep.subr.mxu0 0.0
        %1546 = vmatpush1.xpose.msra.mxu0 0.0
        %1547 = vmatprep.subr.mxu0 0.0
        %1548 = vmatpush1.xpose.msra.mxu0 0.0
        %1549 = vmatprep.subr.mxu0 0.0
        %1550 = vmatpush1.xpose.msra.mxu0 0.0
        %1551 = vmatprep.subr.mxu0 0.0
        %1552 = vmatpush1.xpose.msra.mxu0 0.0
        %1553 = vmatprep.subr.mxu0 0.0
        %1554 = vmatpush1.xpose.msra.mxu0 0.0
        %1555 = vmatprep.subr.mxu0 0.0
        %1556 = vmatpush1.xpose.msra.mxu0 0.0
        %1557 = vmatprep.subr.mxu0 0.0
        %1558 = vmatpush1.xpose.msra.mxu0 0.0
        %1559 = vmatprep.subr.mxu0 0.0
        %1560 = vmatpush1.xpose.msra.mxu0 0.0
        %1561 = vmatprep.subr.mxu0 0.0
        %1562 = vmatpush1.xpose.msra.mxu0 0.0
        %1563 = vmatprep.subr.mxu0 0.0
        %1564 = vmatpush1.xpose.msra.mxu0 0.0
        %1565 = vmatprep.mubr.f32.mxu0 0.0
        %1566 = vmatmul.mubr.f32.gmra.mrb[0].mxu0 %v1499
        %v1567 = vpop.f32.mrb[0].mxu0
        %v1568 = vadd.f32 0.0, %v1567
        %v1569 = vpop.f32.mrb[0].mxu0
        %1570 = vdwg.mxu0
        %1571 = vrot.lane.b32.xlu0 %v504, 104
        %v1572 = vpop.permute.xlu0 %1571
        %v1573 = vsel %vm522, %v1572, 0
        %1575 = vmatprep.subr.mxu0 0.0
        %1576 = vmatpush1.xpose.msra.mxu0 %v1573
        %1577 = vmatprep.subr.mxu0 0.0
        %1578 = vmatpush1.xpose.msra.mxu0 0.0
        %1579 = vmatprep.subr.mxu0 0.0
        %1580 = vmatpush1.xpose.msra.mxu0 0.0
        %1581 = vmatprep.subr.mxu0 0.0
        %1582 = vmatpush1.xpose.msra.mxu0 0.0
        %1583 = vmatprep.subr.mxu0 0.0
        %1584 = vmatpush1.xpose.msra.mxu0 0.0
        %1585 = vmatprep.subr.mxu0 0.0
        %1586 = vmatpush1.xpose.msra.mxu0 0.0
        %1587 = vmatprep.subr.mxu0 0.0
        %1588 = vmatpush1.xpose.msra.mxu0 0.0
        %1589 = vmatprep.subr.mxu0 0.0
        %1590 = vmatpush1.xpose.msra.mxu0 0.0
        %1591 = vmatprep.subr.mxu0 0.0
        %1592 = vmatpush1.xpose.msra.mxu0 0.0
        %1593 = vmatprep.subr.mxu0 0.0
        %1594 = vmatpush1.xpose.msra.mxu0 0.0
        %1595 = vmatprep.subr.mxu0 0.0
        %1596 = vmatpush1.xpose.msra.mxu0 0.0
        %1597 = vmatprep.subr.mxu0 0.0
        %1598 = vmatpush1.xpose.msra.mxu0 0.0
        %1599 = vmatprep.subr.mxu0 0.0
        %1600 = vmatpush1.xpose.msra.mxu0 0.0
        %1601 = vmatprep.subr.mxu0 0.0
        %1602 = vmatpush1.xpose.msra.mxu0 0.0
        %1603 = vmatprep.subr.mxu0 0.0
        %1604 = vmatpush1.xpose.msra.mxu0 0.0
        %1605 = vmatprep.subr.mxu0 0.0
        %1606 = vmatpush1.xpose.msra.mxu0 0.0
        %1607 = vmatprep.subr.mxu0 0.0
        %1608 = vmatpush1.xpose.msra.mxu0 0.0
        %1609 = vmatprep.subr.mxu0 0.0
        %1610 = vmatpush1.xpose.msra.mxu0 0.0
        %1611 = vmatprep.subr.mxu0 0.0
        %1612 = vmatpush1.xpose.msra.mxu0 0.0
        %1613 = vmatprep.subr.mxu0 0.0
        %1614 = vmatpush1.xpose.msra.mxu0 0.0
        %1615 = vmatprep.subr.mxu0 0.0
        %1616 = vmatpush1.xpose.msra.mxu0 0.0
        %1617 = vmatprep.subr.mxu0 0.0
        %1618 = vmatpush1.xpose.msra.mxu0 0.0
        %1619 = vmatprep.subr.mxu0 0.0
        %1620 = vmatpush1.xpose.msra.mxu0 0.0
        %1621 = vmatprep.subr.mxu0 0.0
        %1622 = vmatpush1.xpose.msra.mxu0 0.0
        %1623 = vmatprep.subr.mxu0 0.0
        %1624 = vmatpush1.xpose.msra.mxu0 0.0
        %1625 = vmatprep.subr.mxu0 0.0
        %1626 = vmatpush1.xpose.msra.mxu0 0.0
        %1627 = vmatprep.subr.mxu0 0.0
        %1628 = vmatpush1.xpose.msra.mxu0 0.0
        %1629 = vmatprep.subr.mxu0 0.0
        %1630 = vmatpush1.xpose.msra.mxu0 0.0
        %1631 = vmatprep.subr.mxu0 0.0
        %1632 = vmatpush1.xpose.msra.mxu0 0.0
        %1633 = vmatprep.subr.mxu0 0.0
        %1634 = vmatpush1.xpose.msra.mxu0 0.0
        %1635 = vmatprep.subr.mxu0 0.0
        %1636 = vmatpush1.xpose.msra.mxu0 0.0
        %1637 = vmatprep.subr.mxu0 0.0
        %1638 = vmatpush1.xpose.msra.mxu0 0.0
        %1639 = vmatprep.mubr.f32.mxu0 0.0
        %1640 = vmatmul.mubr.f32.gmra.mrb[0].mxu0 %v1573
        %v1641 = vpop.f32.mrb[0].mxu0
        %v1642 = vadd.f32 0.0, %v1641
        %v1643 = vpop.f32.mrb[0].mxu0
        %1644 = vdwg.mxu0
        %v1645 = vmul.f32 %v1568, 0.35355338
        %v1646 = vmul.f32 %v1642, 0.35355338
        %v1647 = vadd.f32 %v1645, %v676
        %v1648 = vadd.f32 %v1646, %v680
        %v1649 = vsel %vm522, %v1647, -inf
        %1650 = vmax.xlane.f32.xlu0 %v1649
        %v1651 = vpop.xlane.xlu0 %1650
        %v1652 = vsel %vm522, %v1648, -inf
        %1653 = vmax.xlane.f32.xlu0 %v1652
        %v1654 = vpop.xlane.xlu0 %1653
        %v1655 = vsub.f32 %v1647, %v1651
        %v1656 = vsub.f32 %v1648, %v1654
        %v1657 = vmul.f32 %v1655, 1.442695
        %v1658 = vpow.pop %v1657
        %v1659 = vmul.f32 %v1656, 1.442695
        %v1660 = vpow.pop %v1659
        %v1661 = vsel %vm522, %v1658, 0.0
        %1662 = vadd.xlane.f32.xlu0 %v1661
        %v1663 = vpop.xlane.xlu0 %1662
        %v1664 = vsel %vm522, %v1660, 0.0
        %1665 = vadd.xlane.f32.xlu0 %v1664
        %v1666 = vpop.xlane.xlu0 %1665
        %v1667 = vrcp.pop %v1663
        %v1668 = vrcp.pop %v1666
        %v1669 = vmul.f32 %v1658, %v1667
        %v1670 = vmul.f32 %v1660, %v1668
        %v1673 = vsel %vm522, %v1669, 0
        %1675 = vmatprep.subr.mxu0 0.0
        %1676 = vmatpush1.msra.mxu0 %v1498
        %1677 = vmatprep.subr.mxu0 0.0
        %1678 = vmatpush1.msra.mxu0 0.0
        %1679 = vmatprep.subr.mxu0 0.0
        %1680 = vmatpush1.msra.mxu0 0.0
        %1681 = vmatprep.subr.mxu0 0.0
        %1682 = vmatpush1.msra.mxu0 0.0
        %1683 = vmatprep.subr.mxu0 0.0
        %1684 = vmatpush1.msra.mxu0 0.0
        %1685 = vmatprep.subr.mxu0 0.0
        %1686 = vmatpush1.msra.mxu0 0.0
        %1687 = vmatprep.subr.mxu0 0.0
        %1688 = vmatpush1.msra.mxu0 0.0
        %1689 = vmatprep.subr.mxu0 0.0
        %1690 = vmatpush1.msra.mxu0 0.0
        %1691 = vmatprep.subr.mxu0 0.0
        %1692 = vmatpush1.msra.mxu0 0.0
        %1693 = vmatprep.subr.mxu0 0.0
        %1694 = vmatpush1.msra.mxu0 0.0
        %1695 = vmatprep.subr.mxu0 0.0
        %1696 = vmatpush1.msra.mxu0 0.0
        %1697 = vmatprep.subr.mxu0 0.0
        %1698 = vmatpush1.msra.mxu0 0.0
        %1699 = vmatprep.subr.mxu0 0.0
        %1700 = vmatpush1.msra.mxu0 0.0
        %1701 = vmatprep.subr.mxu0 0.0
        %1702 = vmatpush1.msra.mxu0 0.0
        %1703 = vmatprep.subr.mxu0 0.0
        %1704 = vmatpush1.msra.mxu0 0.0
        %1705 = vmatprep.subr.mxu0 0.0
        %1706 = vmatpush1.msra.mxu0 0.0
        %1707 = vmatprep.subr.mxu0 0.0
        %1708 = vmatpush1.msra.mxu0 0.0
        %1709 = vmatprep.subr.mxu0 0.0
        %1710 = vmatpush1.msra.mxu0 0.0
        %1711 = vmatprep.subr.mxu0 0.0
        %1712 = vmatpush1.msra.mxu0 0.0
        %1713 = vmatprep.subr.mxu0 0.0
        %1714 = vmatpush1.msra.mxu0 0.0
        %1715 = vmatprep.subr.mxu0 0.0
        %1716 = vmatpush1.msra.mxu0 0.0
        %1717 = vmatprep.subr.mxu0 0.0
        %1718 = vmatpush1.msra.mxu0 0.0
        %1719 = vmatprep.subr.mxu0 0.0
        %1720 = vmatpush1.msra.mxu0 0.0
        %1721 = vmatprep.subr.mxu0 0.0
        %1722 = vmatpush1.msra.mxu0 0.0
        %1723 = vmatprep.subr.mxu0 0.0
        %1724 = vmatpush1.msra.mxu0 0.0
        %1725 = vmatprep.subr.mxu0 0.0
        %1726 = vmatpush1.msra.mxu0 0.0
        %1727 = vmatprep.subr.mxu0 0.0
        %1728 = vmatpush1.msra.mxu0 0.0
        %1729 = vmatprep.subr.mxu0 0.0
        %1730 = vmatpush1.msra.mxu0 0.0
        %1731 = vmatprep.subr.mxu0 0.0
        %1732 = vmatpush1.msra.mxu0 0.0
        %1733 = vmatprep.subr.mxu0 0.0
        %1734 = vmatpush1.msra.mxu0 0.0
        %1735 = vmatprep.subr.mxu0 0.0
        %1736 = vmatpush1.msra.mxu0 0.0
        %1737 = vmatprep.subr.mxu0 0.0
        %1738 = vmatpush1.msra.mxu0 0.0
        %1739 = vmatprep.mubr.f32.mxu0 0.0
        %1740 = vmatmul.mubr.f32.gmra.mrb[0].mxu0 %v1673
        %v1741 = vpop.f32.mrb[0].mxu0
        %v1742 = vadd.f32 0.0, %v1741
        %v1743 = vpop.f32.mrb[0].mxu0
        %1744 = vdwg.mxu0
        %v1747 = vsel %vm522, %v1670, 0
        %1749 = vmatprep.subr.mxu0 0.0
        %1750 = vmatpush1.msra.mxu0 %v1572
        %1751 = vmatprep.subr.mxu0 0.0
        %1752 = vmatpush1.msra.mxu0 0.0
        %1753 = vmatprep.subr.mxu0 0.0
        %1754 = vmatpush1.msra.mxu0 0.0
        %1755 = vmatprep.subr.mxu0 0.0
        %1756 = vmatpush1.msra.mxu0 0.0
        %1757 = vmatprep.subr.mxu0 0.0
        %1758 = vmatpush1.msra.mxu0 0.0
        %1759 = vmatprep.subr.mxu0 0.0
        %1760 = vmatpush1.msra.mxu0 0.0
        %1761 = vmatprep.subr.mxu0 0.0
        %1762 = vmatpush1.msra.mxu0 0.0
        %1763 = vmatprep.subr.mxu0 0.0
        %1764 = vmatpush1.msra.mxu0 0.0
        %1765 = vmatprep.subr.mxu0 0.0
        %1766 = vmatpush1.msra.mxu0 0.0
        %1767 = vmatprep.subr.mxu0 0.0
        %1768 = vmatpush1.msra.mxu0 0.0
        %1769 = vmatprep.subr.mxu0 0.0
        %1770 = vmatpush1.msra.mxu0 0.0
        %1771 = vmatprep.subr.mxu0 0.0
        %1772 = vmatpush1.msra.mxu0 0.0
        %1773 = vmatprep.subr.mxu0 0.0
        %1774 = vmatpush1.msra.mxu0 0.0
        %1775 = vmatprep.subr.mxu0 0.0
        %1776 = vmatpush1.msra.mxu0 0.0
        %1777 = vmatprep.subr.mxu0 0.0
        %1778 = vmatpush1.msra.mxu0 0.0
        %1779 = vmatprep.subr.mxu0 0.0
        %1780 = vmatpush1.msra.mxu0 0.0
        %1781 = vmatprep.subr.mxu0 0.0
        %1782 = vmatpush1.msra.mxu0 0.0
        %1783 = vmatprep.subr.mxu0 0.0
        %1784 = vmatpush1.msra.mxu0 0.0
        %1785 = vmatprep.subr.mxu0 0.0
        %1786 = vmatpush1.msra.mxu0 0.0
        %1787 = vmatprep.subr.mxu0 0.0
        %1788 = vmatpush1.msra.mxu0 0.0
        %1789 = vmatprep.subr.mxu0 0.0
        %1790 = vmatpush1.msra.mxu0 0.0
        %1791 = vmatprep.subr.mxu0 0.0
        %1792 = vmatpush1.msra.mxu0 0.0
        %1793 = vmatprep.subr.mxu0 0.0
        %1794 = vmatpush1.msra.mxu0 0.0
        %1795 = vmatprep.subr.mxu0 0.0
        %1796 = vmatpush1.msra.mxu0 0.0
        %1797 = vmatprep.subr.mxu0 0.0
        %1798 = vmatpush1.msra.mxu0 0.0
        %1799 = vmatprep.subr.mxu0 0.0
        %1800 = vmatpush1.msra.mxu0 0.0
        %1801 = vmatprep.subr.mxu0 0.0
        %1802 = vmatpush1.msra.mxu0 0.0
        %1803 = vmatprep.subr.mxu0 0.0
        %1804 = vmatpush1.msra.mxu0 0.0
        %1805 = vmatprep.subr.mxu0 0.0
        %1806 = vmatpush1.msra.mxu0 0.0
        %1807 = vmatprep.subr.mxu0 0.0
        %1808 = vmatpush1.msra.mxu0 0.0
        %1809 = vmatprep.subr.mxu0 0.0
        %1810 = vmatpush1.msra.mxu0 0.0
        %1811 = vmatprep.subr.mxu0 0.0
        %1812 = vmatpush1.msra.mxu0 0.0
        %1813 = vmatprep.mubr.f32.mxu0 0.0
        %1814 = vmatmul.mubr.f32.gmra.mrb[0].mxu0 %v1747
        %v1815 = vpop.f32.mrb[0].mxu0
        %v1816 = vadd.f32 0.0, %v1815
        %v1817 = vpop.f32.mrb[0].mxu0
        %1818 = vdwg.mxu0
        %1821 = vrot.lane.b32.xlu0 %v1098, 8
        %v1822 = vpop.permute.xlu0 %1821
        %1823 = vrot.lane.b32.xlu0 %v1172, 8
        %v1824 = vpop.permute.xlu0 %1823
        %1829 = vrot.lane.b32.xlu0 %v1420, 16
        %v1830 = vpop.permute.xlu0 %1829
        %1831 = vrot.lane.b32.xlu0 %v1494, 16
        %v1832 = vpop.permute.xlu0 %1831
        %1837 = vrot.lane.b32.xlu0 %v1742, 24
        %v1838 = vpop.permute.xlu0 %1837
        %1839 = vrot.lane.b32.xlu0 %v1816, 24
        %v1840 = vpop.permute.xlu0 %1839
        %v1843 = vsel %vm522, %v777, %v1822
        %v1844 = vsel %vm522, %v850, %v1824
        %vm1845 = vcmask 130048
        %v1846 = vsel %vm1845, %v1843, %v1830
        %v1847 = vsel %vm1845, %v1844, %v1832
        %vm1848 = vcmask 195584
        %v1849 = vsel %vm1848, %v1846, %v1838
        %v1850 = vsel %vm1848, %v1847, %v1840
        %v1851 = vlaneseq
        %v1852 = vshrl.u32 %v1851, 7
        %v1853 = vsub.s32 0, %v1852
        %v1854 = vrot.slane %v520, %v1853
        %v1855 = vlaneseq
        %v1856 = vshrl.u32 %v1855, 7
        %v1857 = vsub.s32 0, %v1856
        %v1858 = vrot.slane %v521, %v1857
        %v1859 = vmul.f32 %v1849, %v1854
        %v1860 = vmul.f32 %v1850, %v1858
        %v1861 = vmul.f32 %v1859, 0.5
        %v1862 = vmul.f32 %v1860, 0.5
        %v1863 = vadd.f32 %v1861, 0.0
        %v1864 = vadd.f32 %v1862, 0.0
        %v1865 = vlaneseq
        %v1866 = vshrl.u32 %v1865, 7
        %v1867 = vlaneseq
        %v1868 = vand.u32 %v1867, 127
        %v1869 = vmul.u32 %v1866, 2
        %vm1870 = vcmp.eq.s32.totalorder %v1868, %v1869
        %v1871 = vsel %vm1870, 1, 0
        %v1872 = vcvt.s32.f32 %v1871
        %v1874 = vsel %vm1845, %v1872, 0
        %1876 = vmatprep.subr.mxu0 0.0
        %1877 = vmatpush1.msra.mxu0 %v499
        %1878 = vmatprep.subr.mxu0 0.0
        %1879 = vmatpush1.msra.mxu0 %v504
        %1880 = vmatprep.subr.mxu0 0.0
        %1881 = vmatpush1.msra.mxu0 0.0
        %1882 = vmatprep.subr.mxu0 0.0
        %1883 = vmatpush1.msra.mxu0 0.0
        %1884 = vmatprep.subr.mxu0 0.0
        %1885 = vmatpush1.msra.mxu0 0.0
        %1886 = vmatprep.subr.mxu0 0.0
        %1887 = vmatpush1.msra.mxu0 0.0
        %1888 = vmatprep.subr.mxu0 0.0
        %1889 = vmatpush1.msra.mxu0 0.0
        %1890 = vmatprep.subr.mxu0 0.0
        %1891 = vmatpush1.msra.mxu0 0.0
        %1892 = vmatprep.subr.mxu0 0.0
        %1893 = vmatpush1.msra.mxu0 0.0
        %1894 = vmatprep.subr.mxu0 0.0
        %1895 = vmatpush1.msra.mxu0 0.0
        %1896 = vmatprep.subr.mxu0 0.0
        %1897 = vmatpush1.msra.mxu0 0.0
        %1898 = vmatprep.subr.mxu0 0.0
        %1899 = vmatpush1.msra.mxu0 0.0
        %1900 = vmatprep.subr.mxu0 0.0
        %1901 = vmatpush1.msra.mxu0 0.0
        %1902 = vmatprep.subr.mxu0 0.0
        %1903 = vmatpush1.msra.mxu0 0.0
        %1904 = vmatprep.subr.mxu0 0.0
        %1905 = vmatpush1.msra.mxu0 0.0
        %1906 = vmatprep.subr.mxu0 0.0
        %1907 = vmatpush1.msra.mxu0 0.0
        %1908 = vmatprep.subr.mxu0 0.0
        %1909 = vmatpush1.msra.mxu0 0.0
        %1910 = vmatprep.subr.mxu0 0.0
        %1911 = vmatpush1.msra.mxu0 0.0
        %1912 = vmatprep.subr.mxu0 0.0
        %1913 = vmatpush1.msra.mxu0 0.0
        %1914 = vmatprep.subr.mxu0 0.0
        %1915 = vmatpush1.msra.mxu0 0.0
        %1916 = vmatprep.subr.mxu0 0.0
        %1917 = vmatpush1.msra.mxu0 0.0
        %1918 = vmatprep.subr.mxu0 0.0
        %1919 = vmatpush1.msra.mxu0 0.0
        %1920 = vmatprep.subr.mxu0 0.0
        %1921 = vmatpush1.msra.mxu0 0.0
        %1922 = vmatprep.subr.mxu0 0.0
        %1923 = vmatpush1.msra.mxu0 0.0
        %1924 = vmatprep.subr.mxu0 0.0
        %1925 = vmatpush1.msra.mxu0 0.0
        %1926 = vmatprep.subr.mxu0 0.0
        %1927 = vmatpush1.msra.mxu0 0.0
        %1928 = vmatprep.subr.mxu0 0.0
        %1929 = vmatpush1.msra.mxu0 0.0
        %1930 = vmatprep.subr.mxu0 0.0
        %1931 = vmatpush1.msra.mxu0 0.0
        %1932 = vmatprep.subr.mxu0 0.0
        %1933 = vmatpush1.msra.mxu0 0.0
        %1934 = vmatprep.subr.mxu0 0.0
        %1935 = vmatpush1.msra.mxu0 0.0
        %1936 = vmatprep.subr.mxu0 0.0
        %1937 = vmatpush1.msra.mxu0 0.0
        %1938 = vmatprep.subr.mxu0 0.0
        %1939 = vmatpush1.msra.mxu0 0.0
        %1940 = vmatprep.mubr.f32.mxu0 0.0
        %1941 = vmatmul.mubr.f32.gmra.mrb[0].mxu0 %v1874
        %v1942 = vpop.f32.mrb[0].mxu0
        %v1943 = vadd.f32 0.0, %v1942
        %v1944 = vpop.f32.mrb[0].mxu0
        %1945 = vdwg.mxu0
        %v1946 = vld [vmem:[%s406] sm:$0x1]
        %v1947 = vsel %vm509, %v1946, -inf
        %1948 = vmax.xlane.f32.xlu0 %v1947
        %v1949 = vpop.xlane.xlu0 %1948
        %vm1950 = vcmp.gt.f32.partialorder %v1949, -1.0
        %v1951 = vsel %vm1950, 1, 0
        %v1952 = vcvt.s32.f32 %v1951
        %v1954 = vsel %vm522, %v1943, 0
        %1956 = vmatprep.subr.mxu0 0.0
        %1957 = vmatpush1.xpose.msra.mxu0 %v1954
        %1958 = vmatprep.subr.mxu0 0.0
        %1959 = vmatpush1.xpose.msra.mxu0 0.0
        %1960 = vmatprep.subr.mxu0 0.0
        %1961 = vmatpush1.xpose.msra.mxu0 0.0
        %1962 = vmatprep.subr.mxu0 0.0
        %1963 = vmatpush1.xpose.msra.mxu0 0.0
        %1964 = vmatprep.subr.mxu0 0.0
        %1965 = vmatpush1.xpose.msra.mxu0 0.0
        %1966 = vmatprep.subr.mxu0 0.0
        %1967 = vmatpush1.xpose.msra.mxu0 0.0
        %1968 = vmatprep.subr.mxu0 0.0
        %1969 = vmatpush1.xpose.msra.mxu0 0.0
        %1970 = vmatprep.subr.mxu0 0.0
        %1971 = vmatpush1.xpose.msra.mxu0 0.0
        %1972 = vmatprep.subr.mxu0 0.0
        %1973 = vmatpush1.xpose.msra.mxu0 0.0
        %1974 = vmatprep.subr.mxu0 0.0
        %1975 = vmatpush1.xpose.msra.mxu0 0.0
        %1976 = vmatprep.subr.mxu0 0.0
        %1977 = vmatpush1.xpose.msra.mxu0 0.0
        %1978 = vmatprep.subr.mxu0 0.0
        %1979 = vmatpush1.xpose.msra.mxu0 0.0
        %1980 = vmatprep.subr.mxu0 0.0
        %1981 = vmatpush1.xpose.msra.mxu0 0.0
        %1982 = vmatprep.subr.mxu0 0.0
        %1983 = vmatpush1.xpose.msra.mxu0 0.0
        %1984 = vmatprep.subr.mxu0 0.0
        %1985 = vmatpush1.xpose.msra.mxu0 0.0
        %1986 = vmatprep.subr.mxu0 0.0
        %1987 = vmatpush1.xpose.msra.mxu0 0.0
        %1988 = vmatprep.subr.mxu0 0.0
        %1989 = vmatpush1.xpose.msra.mxu0 0.0
        %1990 = vmatprep.subr.mxu0 0.0
        %1991 = vmatpush1.xpose.msra.mxu0 0.0
        %1992 = vmatprep.subr.mxu0 0.0
        %1993 = vmatpush1.xpose.msra.mxu0 0.0
        %1994 = vmatprep.subr.mxu0 0.0
        %1995 = vmatpush1.xpose.msra.mxu0 0.0
        %1996 = vmatprep.subr.mxu0 0.0
        %1997 = vmatpush1.xpose.msra.mxu0 0.0
        %1998 = vmatprep.subr.mxu0 0.0
        %1999 = vmatpush1.xpose.msra.mxu0 0.0
        %2000 = vmatprep.subr.mxu0 0.0
        %2001 = vmatpush1.xpose.msra.mxu0 0.0
        %2002 = vmatprep.subr.mxu0 0.0
        %2003 = vmatpush1.xpose.msra.mxu0 0.0
        %2004 = vmatprep.subr.mxu0 0.0
        %2005 = vmatpush1.xpose.msra.mxu0 0.0
        %2006 = vmatprep.subr.mxu0 0.0
        %2007 = vmatpush1.xpose.msra.mxu0 0.0
        %2008 = vmatprep.subr.mxu0 0.0
        %2009 = vmatpush1.xpose.msra.mxu0 0.0
        %2010 = vmatprep.subr.mxu0 0.0
        %2011 = vmatpush1.xpose.msra.mxu0 0.0
        %2012 = vmatprep.subr.mxu0 0.0
        %2013 = vmatpush1.xpose.msra.mxu0 0.0
        %2014 = vmatprep.subr.mxu0 0.0
        %2015 = vmatpush1.xpose.msra.mxu0 0.0
        %2016 = vmatprep.subr.mxu0 0.0
        %2017 = vmatpush1.xpose.msra.mxu0 0.0
        %2018 = vmatprep.subr.mxu0 0.0
        %2019 = vmatpush1.xpose.msra.mxu0 0.0
        %2020 = vmatprep.mubr.f32.mxu0 0.0
        %2021 = vmatmul.mubr.f32.gmra.mrb[0].mxu0 %v1954
        %v2022 = vpop.f32.mrb[0].mxu0
        %v2023 = vadd.f32 0.0, %v2022
        %v2024 = vpop.f32.mrb[0].mxu0
        %2025 = vdwg.mxu0
        %v2026 = vmul.f32 %v2023, 0.35355338
        %v2028 = vlaneseq
        %v2029 = vshrl.u32 %v2028, 7
        %v2030 = vsub.s32 0, %v2029
        %v2031 = vrot.slane %v1946, %v2030
        %v2033 = vadd.f32 %v2026, %v2031
        %v2034 = vsel %vm522, %v2033, -inf
        %2035 = vmax.xlane.f32.xlu0 %v2034
        %v2036 = vpop.xlane.xlu0 %2035
        %v2037 = vsub.f32 %v2033, %v2036
        %v2038 = vmul.f32 %v2037, 1.442695
        %v2039 = vpow.pop %v2038
        %v2040 = vsel %vm522, %v2039, 0.0
        %2041 = vadd.xlane.f32.xlu0 %v2040
        %v2042 = vpop.xlane.xlu0 %2041
        %v2043 = vrcp.pop %v2042
        %v2044 = vmul.f32 %v2039, %v2043
        %v2046 = vsel %vm522, %v2044, 0
        %2048 = vmatprep.subr.mxu0 0.0
        %2049 = vmatpush1.msra.mxu0 %v1943
        %2050 = vmatprep.subr.mxu0 0.0
        %2051 = vmatpush1.msra.mxu0 0.0
        %2052 = vmatprep.subr.mxu0 0.0
        %2053 = vmatpush1.msra.mxu0 0.0
        %2054 = vmatprep.subr.mxu0 0.0
        %2055 = vmatpush1.msra.mxu0 0.0
        %2056 = vmatprep.subr.mxu0 0.0
        %2057 = vmatpush1.msra.mxu0 0.0
        %2058 = vmatprep.subr.mxu0 0.0
        %2059 = vmatpush1.msra.mxu0 0.0
        %2060 = vmatprep.subr.mxu0 0.0
        %2061 = vmatpush1.msra.mxu0 0.0
        %2062 = vmatprep.subr.mxu0 0.0
        %2063 = vmatpush1.msra.mxu0 0.0
        %2064 = vmatprep.subr.mxu0 0.0
        %2065 = vmatpush1.msra.mxu0 0.0
        %2066 = vmatprep.subr.mxu0 0.0
        %2067 = vmatpush1.msra.mxu0 0.0
        %2068 = vmatprep.subr.mxu0 0.0
        %2069 = vmatpush1.msra.mxu0 0.0
        %2070 = vmatprep.subr.mxu0 0.0
        %2071 = vmatpush1.msra.mxu0 0.0
        %2072 = vmatprep.subr.mxu0 0.0
        %2073 = vmatpush1.msra.mxu0 0.0
        %2074 = vmatprep.subr.mxu0 0.0
        %2075 = vmatpush1.msra.mxu0 0.0
        %2076 = vmatprep.subr.mxu0 0.0
        %2077 = vmatpush1.msra.mxu0 0.0
        %2078 = vmatprep.subr.mxu0 0.0
        %2079 = vmatpush1.msra.mxu0 0.0
        %2080 = vmatprep.subr.mxu0 0.0
        %2081 = vmatpush1.msra.mxu0 0.0
        %2082 = vmatprep.subr.mxu0 0.0
        %2083 = vmatpush1.msra.mxu0 0.0
        %2084 = vmatprep.subr.mxu0 0.0
        %2085 = vmatpush1.msra.mxu0 0.0
        %2086 = vmatprep.subr.mxu0 0.0
        %2087 = vmatpush1.msra.mxu0 0.0
        %2088 = vmatprep.subr.mxu0 0.0
        %2089 = vmatpush1.msra.mxu0 0.0
        %2090 = vmatprep.subr.mxu0 0.0
        %2091 = vmatpush1.msra.mxu0 0.0
        %2092 = vmatprep.subr.mxu0 0.0
        %2093 = vmatpush1.msra.mxu0 0.0
        %2094 = vmatprep.subr.mxu0 0.0
        %2095 = vmatpush1.msra.mxu0 0.0
        %2096 = vmatprep.subr.mxu0 0.0
        %2097 = vmatpush1.msra.mxu0 0.0
        %2098 = vmatprep.subr.mxu0 0.0
        %2099 = vmatpush1.msra.mxu0 0.0
        %2100 = vmatprep.subr.mxu0 0.0
        %2101 = vmatpush1.msra.mxu0 0.0
        %2102 = vmatprep.subr.mxu0 0.0
        %2103 = vmatpush1.msra.mxu0 0.0
        %2104 = vmatprep.subr.mxu0 0.0
        %2105 = vmatpush1.msra.mxu0 0.0
        %2106 = vmatprep.subr.mxu0 0.0
        %2107 = vmatpush1.msra.mxu0 0.0
        %2108 = vmatprep.subr.mxu0 0.0
        %2109 = vmatpush1.msra.mxu0 0.0
        %2110 = vmatprep.subr.mxu0 0.0
        %2111 = vmatpush1.msra.mxu0 0.0
        %2112 = vmatprep.mubr.f32.mxu0 0.0
        %2113 = vmatmul.mubr.f32.gmra.mrb[0].mxu0 %v2046
        %v2114 = vpop.f32.mrb[0].mxu0
        %v2115 = vadd.f32 0.0, %v2114
        %v2116 = vpop.f32.mrb[0].mxu0
        %2117 = vdwg.mxu0
        %2118 = vrot.lane.b32.xlu0 %v1943, 120
        %v2119 = vpop.permute.xlu0 %2118
        %v2120 = vsel %vm522, %v2119, 0
        %2122 = vmatprep.subr.mxu0 0.0
        %2123 = vmatpush1.xpose.msra.mxu0 %v2120
        %2124 = vmatprep.subr.mxu0 0.0
        %2125 = vmatpush1.xpose.msra.mxu0 0.0
        %2126 = vmatprep.subr.mxu0 0.0
        %2127 = vmatpush1.xpose.msra.mxu0 0.0
        %2128 = vmatprep.subr.mxu0 0.0
        %2129 = vmatpush1.xpose.msra.mxu0 0.0
        %2130 = vmatprep.subr.mxu0 0.0
        %2131 = vmatpush1.xpose.msra.mxu0 0.0
        %2132 = vmatprep.subr.mxu0 0.0
        %2133 = vmatpush1.xpose.msra.mxu0 0.0
        %2134 = vmatprep.subr.mxu0 0.0
        %2135 = vmatpush1.xpose.msra.mxu0 0.0
        %2136 = vmatprep.subr.mxu0 0.0
        %2137 = vmatpush1.xpose.msra.mxu0 0.0
        %2138 = vmatprep.subr.mxu0 0.0
        %2139 = vmatpush1.xpose.msra.mxu0 0.0
        %2140 = vmatprep.subr.mxu0 0.0
        %2141 = vmatpush1.xpose.msra.mxu0 0.0
        %2142 = vmatprep.subr.mxu0 0.0
        %2143 = vmatpush1.xpose.msra.mxu0 0.0
        %2144 = vmatprep.subr.mxu0 0.0
        %2145 = vmatpush1.xpose.msra.mxu0 0.0
        %2146 = vmatprep.subr.mxu0 0.0
        %2147 = vmatpush1.xpose.msra.mxu0 0.0
        %2148 = vmatprep.subr.mxu0 0.0
        %2149 = vmatpush1.xpose.msra.mxu0 0.0
        %2150 = vmatprep.subr.mxu0 0.0
        %2151 = vmatpush1.xpose.msra.mxu0 0.0
        %2152 = vmatprep.subr.mxu0 0.0
        %2153 = vmatpush1.xpose.msra.mxu0 0.0
        %2154 = vmatprep.subr.mxu0 0.0
        %2155 = vmatpush1.xpose.msra.mxu0 0.0
        %2156 = vmatprep.subr.mxu0 0.0
        %2157 = vmatpush1.xpose.msra.mxu0 0.0
        %2158 = vmatprep.subr.mxu0 0.0
        %2159 = vmatpush1.xpose.msra.mxu0 0.0
        %2160 = vmatprep.subr.mxu0 0.0
        %2161 = vmatpush1.xpose.msra.mxu0 0.0
        %2162 = vmatprep.subr.mxu0 0.0
        %2163 = vmatpush1.xpose.msra.mxu0 0.0
        %2164 = vmatprep.subr.mxu0 0.0
        %2165 = vmatpush1.xpose.msra.mxu0 0.0
        %2166 = vmatprep.subr.mxu0 0.0
        %2167 = vmatpush1.xpose.msra.mxu0 0.0
        %2168 = vmatprep.subr.mxu0 0.0
        %2169 = vmatpush1.xpose.msra.mxu0 0.0
        %2170 = vmatprep.subr.mxu0 0.0
        %2171 = vmatpush1.xpose.msra.mxu0 0.0
        %2172 = vmatprep.subr.mxu0 0.0
        %2173 = vmatpush1.xpose.msra.mxu0 0.0
        %2174 = vmatprep.subr.mxu0 0.0
        %2175 = vmatpush1.xpose.msra.mxu0 0.0
        %2176 = vmatprep.subr.mxu0 0.0
        %2177 = vmatpush1.xpose.msra.mxu0 0.0
        %2178 = vmatprep.subr.mxu0 0.0
        %2179 = vmatpush1.xpose.msra.mxu0 0.0
        %2180 = vmatprep.subr.mxu0 0.0
        %2181 = vmatpush1.xpose.msra.mxu0 0.0
        %2182 = vmatprep.subr.mxu0 0.0
        %2183 = vmatpush1.xpose.msra.mxu0 0.0
        %2184 = vmatprep.subr.mxu0 0.0
        %2185 = vmatpush1.xpose.msra.mxu0 0.0
        %2186 = vmatprep.mubr.f32.mxu0 0.0
        %2187 = vmatmul.mubr.f32.gmra.mrb[0].mxu0 %v2120
        %v2188 = vpop.f32.mrb[0].mxu0
        %v2189 = vadd.f32 0.0, %v2188
        %v2190 = vpop.f32.mrb[0].mxu0
        %2191 = vdwg.mxu0
        %v2192 = vmul.f32 %v2189, 0.35355338
        %v2193 = vadd.f32 %v2192, %v2031
        %v2194 = vsel %vm522, %v2193, -inf
        %2195 = vmax.xlane.f32.xlu0 %v2194
        %v2196 = vpop.xlane.xlu0 %2195
        %v2197 = vsub.f32 %v2193, %v2196
        %v2198 = vmul.f32 %v2197, 1.442695
        %v2199 = vpow.pop %v2198
        %v2200 = vsel %vm522, %v2199, 0.0
        %2201 = vadd.xlane.f32.xlu0 %v2200
        %v2202 = vpop.xlane.xlu0 %2201
        %v2203 = vrcp.pop %v2202
        %v2204 = vmul.f32 %v2199, %v2203
        %v2207 = vsel %vm522, %v2204, 0
        %2209 = vmatprep.subr.mxu0 0.0
        %2210 = vmatpush1.msra.mxu0 %v2119
        %2211 = vmatprep.subr.mxu0 0.0
        %2212 = vmatpush1.msra.mxu0 0.0
        %2213 = vmatprep.subr.mxu0 0.0
        %2214 = vmatpush1.msra.mxu0 0.0
        %2215 = vmatprep.subr.mxu0 0.0
        %2216 = vmatpush1.msra.mxu0 0.0
        %2217 = vmatprep.subr.mxu0 0.0
        %2218 = vmatpush1.msra.mxu0 0.0
        %2219 = vmatprep.subr.mxu0 0.0
        %2220 = vmatpush1.msra.mxu0 0.0
        %2221 = vmatprep.subr.mxu0 0.0
        %2222 = vmatpush1.msra.mxu0 0.0
        %2223 = vmatprep.subr.mxu0 0.0
        %2224 = vmatpush1.msra.mxu0 0.0
        %2225 = vmatprep.subr.mxu0 0.0
        %2226 = vmatpush1.msra.mxu0 0.0
        %2227 = vmatprep.subr.mxu0 0.0
        %2228 = vmatpush1.msra.mxu0 0.0
        %2229 = vmatprep.subr.mxu0 0.0
        %2230 = vmatpush1.msra.mxu0 0.0
        %2231 = vmatprep.subr.mxu0 0.0
        %2232 = vmatpush1.msra.mxu0 0.0
        %2233 = vmatprep.subr.mxu0 0.0
        %2234 = vmatpush1.msra.mxu0 0.0
        %2235 = vmatprep.subr.mxu0 0.0
        %2236 = vmatpush1.msra.mxu0 0.0
        %2237 = vmatprep.subr.mxu0 0.0
        %2238 = vmatpush1.msra.mxu0 0.0
        %2239 = vmatprep.subr.mxu0 0.0
        %2240 = vmatpush1.msra.mxu0 0.0
        %2241 = vmatprep.subr.mxu0 0.0
        %2242 = vmatpush1.msra.mxu0 0.0
        %2243 = vmatprep.subr.mxu0 0.0
        %2244 = vmatpush1.msra.mxu0 0.0
        %2245 = vmatprep.subr.mxu0 0.0
        %2246 = vmatpush1.msra.mxu0 0.0
        %2247 = vmatprep.subr.mxu0 0.0
        %2248 = vmatpush1.msra.mxu0 0.0
        %2249 = vmatprep.subr.mxu0 0.0
        %2250 = vmatpush1.msra.mxu0 0.0
        %2251 = vmatprep.subr.mxu0 0.0
        %2252 = vmatpush1.msra.mxu0 0.0
        %2253 = vmatprep.subr.mxu0 0.0
        %2254 = vmatpush1.msra.mxu0 0.0
        %2255 = vmatprep.subr.mxu0 0.0
        %2256 = vmatpush1.msra.mxu0 0.0
        %2257 = vmatprep.subr.mxu0 0.0
        %2258 = vmatpush1.msra.mxu0 0.0
        %2259 = vmatprep.subr.mxu0 0.0
        %2260 = vmatpush1.msra.mxu0 0.0
        %2261 = vmatprep.subr.mxu0 0.0
        %2262 = vmatpush1.msra.mxu0 0.0
        %2263 = vmatprep.subr.mxu0 0.0
        %2264 = vmatpush1.msra.mxu0 0.0
        %2265 = vmatprep.subr.mxu0 0.0
        %2266 = vmatpush1.msra.mxu0 0.0
        %2267 = vmatprep.subr.mxu0 0.0
        %2268 = vmatpush1.msra.mxu0 0.0
        %2269 = vmatprep.subr.mxu0 0.0
        %2270 = vmatpush1.msra.mxu0 0.0
        %2271 = vmatprep.subr.mxu0 0.0
        %2272 = vmatpush1.msra.mxu0 0.0
        %2273 = vmatprep.mubr.f32.mxu0 0.0
        %2274 = vmatmul.mubr.f32.gmra.mrb[0].mxu0 %v2207
        %v2275 = vpop.f32.mrb[0].mxu0
        %v2276 = vadd.f32 0.0, %v2275
        %v2277 = vpop.f32.mrb[0].mxu0
        %2278 = vdwg.mxu0
        %2279 = vrot.lane.b32.xlu0 %v1943, 112
        %v2280 = vpop.permute.xlu0 %2279
        %v2281 = vsel %vm522, %v2280, 0
        %2283 = vmatprep.subr.mxu0 0.0
        %2284 = vmatpush1.xpose.msra.mxu0 %v2281
        %2285 = vmatprep.subr.mxu0 0.0
        %2286 = vmatpush1.xpose.msra.mxu0 0.0
        %2287 = vmatprep.subr.mxu0 0.0
        %2288 = vmatpush1.xpose.msra.mxu0 0.0
        %2289 = vmatprep.subr.mxu0 0.0
        %2290 = vmatpush1.xpose.msra.mxu0 0.0
        %2291 = vmatprep.subr.mxu0 0.0
        %2292 = vmatpush1.xpose.msra.mxu0 0.0
        %2293 = vmatprep.subr.mxu0 0.0
        %2294 = vmatpush1.xpose.msra.mxu0 0.0
        %2295 = vmatprep.subr.mxu0 0.0
        %2296 = vmatpush1.xpose.msra.mxu0 0.0
        %2297 = vmatprep.subr.mxu0 0.0
        %2298 = vmatpush1.xpose.msra.mxu0 0.0
        %2299 = vmatprep.subr.mxu0 0.0
        %2300 = vmatpush1.xpose.msra.mxu0 0.0
        %2301 = vmatprep.subr.mxu0 0.0
        %2302 = vmatpush1.xpose.msra.mxu0 0.0
        %2303 = vmatprep.subr.mxu0 0.0
        %2304 = vmatpush1.xpose.msra.mxu0 0.0
        %2305 = vmatprep.subr.mxu0 0.0
        %2306 = vmatpush1.xpose.msra.mxu0 0.0
        %2307 = vmatprep.subr.mxu0 0.0
        %2308 = vmatpush1.xpose.msra.mxu0 0.0
        %2309 = vmatprep.subr.mxu0 0.0
        %2310 = vmatpush1.xpose.msra.mxu0 0.0
        %2311 = vmatprep.subr.mxu0 0.0
        %2312 = vmatpush1.xpose.msra.mxu0 0.0
        %2313 = vmatprep.subr.mxu0 0.0
        %2314 = vmatpush1.xpose.msra.mxu0 0.0
        %2315 = vmatprep.subr.mxu0 0.0
        %2316 = vmatpush1.xpose.msra.mxu0 0.0
        %2317 = vmatprep.subr.mxu0 0.0
        %2318 = vmatpush1.xpose.msra.mxu0 0.0
        %2319 = vmatprep.subr.mxu0 0.0
        %2320 = vmatpush1.xpose.msra.mxu0 0.0
        %2321 = vmatprep.subr.mxu0 0.0
        %2322 = vmatpush1.xpose.msra.mxu0 0.0
        %2323 = vmatprep.subr.mxu0 0.0
        %2324 = vmatpush1.xpose.msra.mxu0 0.0
        %2325 = vmatprep.subr.mxu0 0.0
        %2326 = vmatpush1.xpose.msra.mxu0 0.0
        %2327 = vmatprep.subr.mxu0 0.0
        %2328 = vmatpush1.xpose.msra.mxu0 0.0
        %2329 = vmatprep.subr.mxu0 0.0
        %2330 = vmatpush1.xpose.msra.mxu0 0.0
        %2331 = vmatprep.subr.mxu0 0.0
        %2332 = vmatpush1.xpose.msra.mxu0 0.0
        %2333 = vmatprep.subr.mxu0 0.0
        %2334 = vmatpush1.xpose.msra.mxu0 0.0
        %2335 = vmatprep.subr.mxu0 0.0
        %2336 = vmatpush1.xpose.msra.mxu0 0.0
        %2337 = vmatprep.subr.mxu0 0.0
        %2338 = vmatpush1.xpose.msra.mxu0 0.0
        %2339 = vmatprep.subr.mxu0 0.0
        %2340 = vmatpush1.xpose.msra.mxu0 0.0
        %2341 = vmatprep.subr.mxu0 0.0
        %2342 = vmatpush1.xpose.msra.mxu0 0.0
        %2343 = vmatprep.subr.mxu0 0.0
        %2344 = vmatpush1.xpose.msra.mxu0 0.0
        %2345 = vmatprep.subr.mxu0 0.0
        %2346 = vmatpush1.xpose.msra.mxu0 0.0
        %2347 = vmatprep.mubr.f32.mxu0 0.0
        %2348 = vmatmul.mubr.f32.gmra.mrb[0].mxu0 %v2281
        %v2349 = vpop.f32.mrb[0].mxu0
        %v2350 = vadd.f32 0.0, %v2349
        %v2351 = vpop.f32.mrb[0].mxu0
        %2352 = vdwg.mxu0
        %v2353 = vmul.f32 %v2350, 0.35355338
        %v2354 = vadd.f32 %v2353, %v2031
        %v2355 = vsel %vm522, %v2354, -inf
        %2356 = vmax.xlane.f32.xlu0 %v2355
        %v2357 = vpop.xlane.xlu0 %2356
        %v2358 = vsub.f32 %v2354, %v2357
        %v2359 = vmul.f32 %v2358, 1.442695
        %v2360 = vpow.pop %v2359
        %v2361 = vsel %vm522, %v2360, 0.0
        %2362 = vadd.xlane.f32.xlu0 %v2361
        %v2363 = vpop.xlane.xlu0 %2362
        %v2364 = vrcp.pop %v2363
        %v2365 = vmul.f32 %v2360, %v2364
        %v2368 = vsel %vm522, %v2365, 0
        %2370 = vmatprep.subr.mxu0 0.0
        %2371 = vmatpush1.msra.mxu0 %v2280
        %2372 = vmatprep.subr.mxu0 0.0
        %2373 = vmatpush1.msra.mxu0 0.0
        %2374 = vmatprep.subr.mxu0 0.0
        %2375 = vmatpush1.msra.mxu0 0.0
        %2376 = vmatprep.subr.mxu0 0.0
        %2377 = vmatpush1.msra.mxu0 0.0
        %2378 = vmatprep.subr.mxu0 0.0
        %2379 = vmatpush1.msra.mxu0 0.0
        %2380 = vmatprep.subr.mxu0 0.0
        %2381 = vmatpush1.msra.mxu0 0.0
        %2382 = vmatprep.subr.mxu0 0.0
        %2383 = vmatpush1.msra.mxu0 0.0
        %2384 = vmatprep.subr.mxu0 0.0
        %2385 = vmatpush1.msra.mxu0 0.0
        %2386 = vmatprep.subr.mxu0 0.0
        %2387 = vmatpush1.msra.mxu0 0.0
        %2388 = vmatprep.subr.mxu0 0.0
        %2389 = vmatpush1.msra.mxu0 0.0
        %2390 = vmatprep.subr.mxu0 0.0
        %2391 = vmatpush1.msra.mxu0 0.0
        %2392 = vmatprep.subr.mxu0 0.0
        %2393 = vmatpush1.msra.mxu0 0.0
        %2394 = vmatprep.subr.mxu0 0.0
        %2395 = vmatpush1.msra.mxu0 0.0
        %2396 = vmatprep.subr.mxu0 0.0
        %2397 = vmatpush1.msra.mxu0 0.0
        %2398 = vmatprep.subr.mxu0 0.0
        %2399 = vmatpush1.msra.mxu0 0.0
        %2400 = vmatprep.subr.mxu0 0.0
        %2401 = vmatpush1.msra.mxu0 0.0
        %2402 = vmatprep.subr.mxu0 0.0
        %2403 = vmatpush1.msra.mxu0 0.0
        %2404 = vmatprep.subr.mxu0 0.0
        %2405 = vmatpush1.msra.mxu0 0.0
        %2406 = vmatprep.subr.mxu0 0.0
        %2407 = vmatpush1.msra.mxu0 0.0
        %2408 = vmatprep.subr.mxu0 0.0
        %2409 = vmatpush1.msra.mxu0 0.0
        %2410 = vmatprep.subr.mxu0 0.0
        %2411 = vmatpush1.msra.mxu0 0.0
        %2412 = vmatprep.subr.mxu0 0.0
        %2413 = vmatpush1.msra.mxu0 0.0
        %2414 = vmatprep.subr.mxu0 0.0
        %2415 = vmatpush1.msra.mxu0 0.0
        %2416 = vmatprep.subr.mxu0 0.0
        %2417 = vmatpush1.msra.mxu0 0.0
        %2418 = vmatprep.subr.mxu0 0.0
        %2419 = vmatpush1.msra.mxu0 0.0
        %2420 = vmatprep.subr.mxu0 0.0
        %2421 = vmatpush1.msra.mxu0 0.0
        %2422 = vmatprep.subr.mxu0 0.0
        %2423 = vmatpush1.msra.mxu0 0.0
        %2424 = vmatprep.subr.mxu0 0.0
        %2425 = vmatpush1.msra.mxu0 0.0
        %2426 = vmatprep.subr.mxu0 0.0
        %2427 = vmatpush1.msra.mxu0 0.0
        %2428 = vmatprep.subr.mxu0 0.0
        %2429 = vmatpush1.msra.mxu0 0.0
        %2430 = vmatprep.subr.mxu0 0.0
        %2431 = vmatpush1.msra.mxu0 0.0
        %2432 = vmatprep.subr.mxu0 0.0
        %2433 = vmatpush1.msra.mxu0 0.0
        %2434 = vmatprep.mubr.f32.mxu0 0.0
        %2435 = vmatmul.mubr.f32.gmra.mrb[0].mxu0 %v2368
        %v2436 = vpop.f32.mrb[0].mxu0
        %v2437 = vadd.f32 0.0, %v2436
        %v2438 = vpop.f32.mrb[0].mxu0
        %2439 = vdwg.mxu0
        %2440 = vrot.lane.b32.xlu0 %v1943, 104
        %v2441 = vpop.permute.xlu0 %2440
        %v2442 = vsel %vm522, %v2441, 0
        %2444 = vmatprep.subr.mxu0 0.0
        %2445 = vmatpush1.xpose.msra.mxu0 %v2442
        %2446 = vmatprep.subr.mxu0 0.0
        %2447 = vmatpush1.xpose.msra.mxu0 0.0
        %2448 = vmatprep.subr.mxu0 0.0
        %2449 = vmatpush1.xpose.msra.mxu0 0.0
        %2450 = vmatprep.subr.mxu0 0.0
        %2451 = vmatpush1.xpose.msra.mxu0 0.0
        %2452 = vmatprep.subr.mxu0 0.0
        %2453 = vmatpush1.xpose.msra.mxu0 0.0
        %2454 = vmatprep.subr.mxu0 0.0
        %2455 = vmatpush1.xpose.msra.mxu0 0.0
        %2456 = vmatprep.subr.mxu0 0.0
        %2457 = vmatpush1.xpose.msra.mxu0 0.0
        %2458 = vmatprep.subr.mxu0 0.0
        %2459 = vmatpush1.xpose.msra.mxu0 0.0
        %2460 = vmatprep.subr.mxu0 0.0
        %2461 = vmatpush1.xpose.msra.mxu0 0.0
        %2462 = vmatprep.subr.mxu0 0.0
        %2463 = vmatpush1.xpose.msra.mxu0 0.0
        %2464 = vmatprep.subr.mxu0 0.0
        %2465 = vmatpush1.xpose.msra.mxu0 0.0
        %2466 = vmatprep.subr.mxu0 0.0
        %2467 = vmatpush1.xpose.msra.mxu0 0.0
        %2468 = vmatprep.subr.mxu0 0.0
        %2469 = vmatpush1.xpose.msra.mxu0 0.0
        %2470 = vmatprep.subr.mxu0 0.0
        %2471 = vmatpush1.xpose.msra.mxu0 0.0
        %2472 = vmatprep.subr.mxu0 0.0
        %2473 = vmatpush1.xpose.msra.mxu0 0.0
        %2474 = vmatprep.subr.mxu0 0.0
        %2475 = vmatpush1.xpose.msra.mxu0 0.0
        %2476 = vmatprep.subr.mxu0 0.0
        %2477 = vmatpush1.xpose.msra.mxu0 0.0
        %2478 = vmatprep.subr.mxu0 0.0
        %2479 = vmatpush1.xpose.msra.mxu0 0.0
        %2480 = vmatprep.subr.mxu0 0.0
        %2481 = vmatpush1.xpose.msra.mxu0 0.0
        %2482 = vmatprep.subr.mxu0 0.0
        %2483 = vmatpush1.xpose.msra.mxu0 0.0
        %2484 = vmatprep.subr.mxu0 0.0
        %2485 = vmatpush1.xpose.msra.mxu0 0.0
        %2486 = vmatprep.subr.mxu0 0.0
        %2487 = vmatpush1.xpose.msra.mxu0 0.0
        %2488 = vmatprep.subr.mxu0 0.0
        %2489 = vmatpush1.xpose.msra.mxu0 0.0
        %2490 = vmatprep.subr.mxu0 0.0
        %2491 = vmatpush1.xpose.msra.mxu0 0.0
        %2492 = vmatprep.subr.mxu0 0.0
        %2493 = vmatpush1.xpose.msra.mxu0 0.0
        %2494 = vmatprep.subr.mxu0 0.0
        %2495 = vmatpush1.xpose.msra.mxu0 0.0
        %2496 = vmatprep.subr.mxu0 0.0
        %2497 = vmatpush1.xpose.msra.mxu0 0.0
        %2498 = vmatprep.subr.mxu0 0.0
        %2499 = vmatpush1.xpose.msra.mxu0 0.0
        %2500 = vmatprep.subr.mxu0 0.0
        %2501 = vmatpush1.xpose.msra.mxu0 0.0
        %2502 = vmatprep.subr.mxu0 0.0
        %2503 = vmatpush1.xpose.msra.mxu0 0.0
        %2504 = vmatprep.subr.mxu0 0.0
        %2505 = vmatpush1.xpose.msra.mxu0 0.0
        %2506 = vmatprep.subr.mxu0 0.0
        %2507 = vmatpush1.xpose.msra.mxu0 0.0
        %2508 = vmatprep.mubr.f32.mxu0 0.0
        %2509 = vmatmul.mubr.f32.gmra.mrb[0].mxu0 %v2442
        %v2510 = vpop.f32.mrb[0].mxu0
        %v2511 = vadd.f32 0.0, %v2510
        %v2512 = vpop.f32.mrb[0].mxu0
        %2513 = vdwg.mxu0
        %v2514 = vmul.f32 %v2511, 0.35355338
        %v2515 = vadd.f32 %v2514, %v2031
        %v2516 = vsel %vm522, %v2515, -inf
        %2517 = vmax.xlane.f32.xlu0 %v2516
        %v2518 = vpop.xlane.xlu0 %2517
        %v2519 = vsub.f32 %v2515, %v2518
        %v2520 = vmul.f32 %v2519, 1.442695
        %v2521 = vpow.pop %v2520
        %v2522 = vsel %vm522, %v2521, 0.0
        %2523 = vadd.xlane.f32.xlu0 %v2522
        %v2524 = vpop.xlane.xlu0 %2523
        %v2525 = vrcp.pop %v2524
        %v2526 = vmul.f32 %v2521, %v2525
        %v2529 = vsel %vm522, %v2526, 0
        %2531 = vmatprep.subr.mxu0 0.0
        %2532 = vmatpush1.msra.mxu0 %v2441
        %2533 = vmatprep.subr.mxu0 0.0
        %2534 = vmatpush1.msra.mxu0 0.0
        %2535 = vmatprep.subr.mxu0 0.0
        %2536 = vmatpush1.msra.mxu0 0.0
        %2537 = vmatprep.subr.mxu0 0.0
        %2538 = vmatpush1.msra.mxu0 0.0
        %2539 = vmatprep.subr.mxu0 0.0
        %2540 = vmatpush1.msra.mxu0 0.0
        %2541 = vmatprep.subr.mxu0 0.0
        %2542 = vmatpush1.msra.mxu0 0.0
        %2543 = vmatprep.subr.mxu0 0.0
        %2544 = vmatpush1.msra.mxu0 0.0
        %2545 = vmatprep.subr.mxu0 0.0
        %2546 = vmatpush1.msra.mxu0 0.0
        %2547 = vmatprep.subr.mxu0 0.0
        %2548 = vmatpush1.msra.mxu0 0.0
        %2549 = vmatprep.subr.mxu0 0.0
        %2550 = vmatpush1.msra.mxu0 0.0
        %2551 = vmatprep.subr.mxu0 0.0
        %2552 = vmatpush1.msra.mxu0 0.0
        %2553 = vmatprep.subr.mxu0 0.0
        %2554 = vmatpush1.msra.mxu0 0.0
        %2555 = vmatprep.subr.mxu0 0.0
        %2556 = vmatpush1.msra.mxu0 0.0
        %2557 = vmatprep.subr.mxu0 0.0
        %2558 = vmatpush1.msra.mxu0 0.0
        %2559 = vmatprep.subr.mxu0 0.0
        %2560 = vmatpush1.msra.mxu0 0.0
        %2561 = vmatprep.subr.mxu0 0.0
        %2562 = vmatpush1.msra.mxu0 0.0
        %2563 = vmatprep.subr.mxu0 0.0
        %2564 = vmatpush1.msra.mxu0 0.0
        %2565 = vmatprep.subr.mxu0 0.0
        %2566 = vmatpush1.msra.mxu0 0.0
        %2567 = vmatprep.subr.mxu0 0.0
        %2568 = vmatpush1.msra.mxu0 0.0
        %2569 = vmatprep.subr.mxu0 0.0
        %2570 = vmatpush1.msra.mxu0 0.0
        %2571 = vmatprep.subr.mxu0 0.0
        %2572 = vmatpush1.msra.mxu0 0.0
        %2573 = vmatprep.subr.mxu0 0.0
        %2574 = vmatpush1.msra.mxu0 0.0
        %2575 = vmatprep.subr.mxu0 0.0
        %2576 = vmatpush1.msra.mxu0 0.0
        %2577 = vmatprep.subr.mxu0 0.0
        %2578 = vmatpush1.msra.mxu0 0.0
        %2579 = vmatprep.subr.mxu0 0.0
        %2580 = vmatpush1.msra.mxu0 0.0
        %2581 = vmatprep.subr.mxu0 0.0
        %2582 = vmatpush1.msra.mxu0 0.0
        %2583 = vmatprep.subr.mxu0 0.0
        %2584 = vmatpush1.msra.mxu0 0.0
        %2585 = vmatprep.subr.mxu0 0.0
        %2586 = vmatpush1.msra.mxu0 0.0
        %2587 = vmatprep.subr.mxu0 0.0
        %2588 = vmatpush1.msra.mxu0 0.0
        %2589 = vmatprep.subr.mxu0 0.0
        %2590 = vmatpush1.msra.mxu0 0.0
        %2591 = vmatprep.subr.mxu0 0.0
        %2592 = vmatpush1.msra.mxu0 0.0
        %2593 = vmatprep.subr.mxu0 0.0
        %2594 = vmatpush1.msra.mxu0 0.0
        %2595 = vmatprep.mubr.f32.mxu0 0.0
        %2596 = vmatmul.mubr.f32.gmra.mrb[0].mxu0 %v2529
        %v2597 = vpop.f32.mrb[0].mxu0
        %v2598 = vadd.f32 0.0, %v2597
        %v2599 = vpop.f32.mrb[0].mxu0
        %2600 = vdwg.mxu0
        %2602 = vrot.lane.b32.xlu0 %v2276, 8
        %v2603 = vpop.permute.xlu0 %2602
        %2606 = vrot.lane.b32.xlu0 %v2437, 16
        %v2607 = vpop.permute.xlu0 %2606
        %2610 = vrot.lane.b32.xlu0 %v2598, 24
        %v2611 = vpop.permute.xlu0 %2610
        %v2613 = vsel %vm522, %v2115, %v2603
        %v2614 = vsel %vm1845, %v2613, %v2607
        %v2615 = vsel %vm1848, %v2614, %v2611
        %v2616 = vlaneseq
        %v2617 = vshrl.u32 %v2616, 7
        %v2618 = vsub.s32 0, %v2617
        %v2619 = vrot.slane %v1952, %v2618
        %v2620 = vmul.f32 %v2615, %v2619
        %2621 = vxpose.xlu0.b32.start [1/16] %v1872, 128
        %2622 = vxpose.xlu0.b32.cont [2/16] 0.0, 128
        %2623 = vxpose.xlu0.b32.cont [3/16] 0.0, 128
        %2624 = vxpose.xlu0.b32.cont [4/16] 0.0, 128
        %2625 = vxpose.xlu0.b32.cont [5/16] 0.0, 128
        %2626 = vxpose.xlu0.b32.cont [6/16] 0.0, 128
        %2627 = vxpose.xlu0.b32.cont [7/16] 0.0, 128
        %2628 = vxpose.xlu0.b32.cont [8/16] 0.0, 128
        %2629 = vxpose.xlu0.b32.cont [9/16] 0.0, 128
        %2630 = vxpose.xlu0.b32.cont [10/16] 0.0, 128
        %2631 = vxpose.xlu0.b32.cont [11/16] 0.0, 128
        %2632 = vxpose.xlu0.b32.cont [12/16] 0.0, 128
        %2633 = vxpose.xlu0.b32.cont [13/16] 0.0, 128
        %2634 = vxpose.xlu0.b32.cont [14/16] 0.0, 128
        %2635 = vxpose.xlu0.b32.cont [15/16] 0.0, 128
        %2636 = vxpose.xlu0.b32.end [16/16] 0.0, 128
        %v2637 = vpop.trf.xlu0
        %v2638 = vpop.trf.xlu0
        %v2639 = vpop.trf.xlu0
        %v2640 = vpop.trf.xlu0
        %v2641 = vpop.trf.xlu0
        %v2642 = vpop.trf.xlu0
        %v2643 = vpop.trf.xlu0
        %v2644 = vpop.trf.xlu0
        %v2645 = vpop.trf.xlu0
        %v2646 = vpop.trf.xlu0
        %v2647 = vpop.trf.xlu0
        %v2648 = vpop.trf.xlu0
        %v2649 = vpop.trf.xlu0
        %v2650 = vpop.trf.xlu0
        %v2651 = vpop.trf.xlu0
        %v2652 = vpop.trf.xlu0
        %v2654 = vsel %vm522, %v2637, 0
        %v2657 = vsel %vm522, %v2638, 0
        %2659 = vmatprep.subr.mxu0 0.0
        %2660 = vmatpush1.msra.mxu0 %v2620
        %2661 = vmatprep.subr.mxu0 0.0
        %2662 = vmatpush1.msra.mxu0 0.0
        %2663 = vmatprep.subr.mxu0 0.0
        %2664 = vmatpush1.msra.mxu0 0.0
        %2665 = vmatprep.subr.mxu0 0.0
        %2666 = vmatpush1.msra.mxu0 0.0
        %2667 = vmatprep.subr.mxu0 0.0
        %2668 = vmatpush1.msra.mxu0 0.0
        %2669 = vmatprep.subr.mxu0 0.0
        %2670 = vmatpush1.msra.mxu0 0.0
        %2671 = vmatprep.subr.mxu0 0.0
        %2672 = vmatpush1.msra.mxu0 0.0
        %2673 = vmatprep.subr.mxu0 0.0
        %2674 = vmatpush1.msra.mxu0 0.0
        %2675 = vmatprep.subr.mxu0 0.0
        %2676 = vmatpush1.msra.mxu0 0.0
        %2677 = vmatprep.subr.mxu0 0.0
        %2678 = vmatpush1.msra.mxu0 0.0
        %2679 = vmatprep.subr.mxu0 0.0
        %2680 = vmatpush1.msra.mxu0 0.0
        %2681 = vmatprep.subr.mxu0 0.0
        %2682 = vmatpush1.msra.mxu0 0.0
        %2683 = vmatprep.subr.mxu0 0.0
        %2684 = vmatpush1.msra.mxu0 0.0
        %2685 = vmatprep.subr.mxu0 0.0
        %2686 = vmatpush1.msra.mxu0 0.0
        %2687 = vmatprep.subr.mxu0 0.0
        %2688 = vmatpush1.msra.mxu0 0.0
        %2689 = vmatprep.subr.mxu0 0.0
        %2690 = vmatpush1.msra.mxu0 0.0
        %2691 = vmatprep.subr.mxu0 0.0
        %2692 = vmatpush1.msra.mxu0 0.0
        %2693 = vmatprep.subr.mxu0 0.0
        %2694 = vmatpush1.msra.mxu0 0.0
        %2695 = vmatprep.subr.mxu0 0.0
        %2696 = vmatpush1.msra.mxu0 0.0
        %2697 = vmatprep.subr.mxu0 0.0
        %2698 = vmatpush1.msra.mxu0 0.0
        %2699 = vmatprep.subr.mxu0 0.0
        %2700 = vmatpush1.msra.mxu0 0.0
        %2701 = vmatprep.subr.mxu0 0.0
        %2702 = vmatpush1.msra.mxu0 0.0
        %2703 = vmatprep.subr.mxu0 0.0
        %2704 = vmatpush1.msra.mxu0 0.0
        %2705 = vmatprep.subr.mxu0 0.0
        %2706 = vmatpush1.msra.mxu0 0.0
        %2707 = vmatprep.subr.mxu0 0.0
        %2708 = vmatpush1.msra.mxu0 0.0
        %2709 = vmatprep.subr.mxu0 0.0
        %2710 = vmatpush1.msra.mxu0 0.0
        %2711 = vmatprep.subr.mxu0 0.0
        %2712 = vmatpush1.msra.mxu0 0.0
        %2713 = vmatprep.subr.mxu0 0.0
        %2714 = vmatpush1.msra.mxu0 0.0
        %2715 = vmatprep.subr.mxu0 0.0
        %2716 = vmatpush1.msra.mxu0 0.0
        %2717 = vmatprep.subr.mxu0 0.0
        %2718 = vmatpush1.msra.mxu0 0.0
        %2719 = vmatprep.subr.mxu0 0.0
        %2720 = vmatpush1.msra.mxu0 0.0
        %2721 = vmatprep.subr.mxu0 0.0
        %2722 = vmatpush1.msra.mxu0 0.0
        %2723 = vmatprep.mubr.f32.mxu0 0.0
        %2724 = vmatmul.mubr.f32.gmra.mrb[0].mxu0 %v2654
        %v2725 = vpop.f32.mrb[0].mxu0
        %v2726 = vadd.f32 0.0, %v2725
        %v2727 = vpop.f32.mrb[0].mxu0
        %2728 = vmatprep.mubr.f32.mxu0 0.0
        %2729 = vmatmul.mubr.f32.gmra.mrb[0].mxu0 %v2657
        %v2730 = vpop.f32.mrb[0].mxu0
        %v2731 = vadd.f32 0.0, %v2730
        %v2732 = vpop.f32.mrb[0].mxu0
        %2733 = vdwg.mxu0
        %v2734 = vmul.f32 %v2726, 0.5
        %v2735 = vmul.f32 %v2731, 0.5
        %v2736 = vadd.f32 %v1863, %v2734
        %v2737 = vadd.f32 %v1864, %v2735
        %v2738 = vld [vmem:[#allocation8] sm:$0xff]
        %v2739 = vld [vmem:[#allocation8 + $0x8] sm:$0xff]
        %v2740 = vld [vmem:[#allocation8 + $0x10] sm:$0xff]
        %v2741 = vld [vmem:[#allocation8 + $0x18] sm:$0xff]
        %v2742 = vld [vmem:[%s5] sm:$0x1]
        %v2744 = vlaneseq
        %v2745 = vshrl.u32 %v2744, 7
        %v2746 = vsub.s32 0, %v2745
        %v2747 = vrot.slane %v2742, %v2746
        %v2750 = vsel %vm413, %v2736, 0
        %v2753 = vsel %vm413, %v2737, 0
        %v2756 = vsel %vm413, %v2738, 0
        %v2759 = vsel %vm413, %v2739, 0
        %v2762 = vsel %vm413, %v2740, 0
        %v2765 = vsel %vm413, %v2741, 0
        %2767 = vmatprep.subr.mxu0 0.0
        %2768 = vmatpush1.xpose.msra.mxu0 %v2756
        %2769 = vmatprep.subr.mxu0 0.0
        %2770 = vmatpush1.xpose.msra.mxu0 %v2759
        %2771 = vmatprep.subr.mxu0 0.0
        %2772 = vmatpush1.xpose.msra.mxu0 %v2762
        %2773 = vmatprep.subr.mxu0 0.0
        %2774 = vmatpush1.xpose.msra.mxu0 %v2765
        %2775 = vmatprep.subr.mxu0 0.0
        %2776 = vmatpush1.xpose.msra.mxu0 0.0
        %2777 = vmatprep.subr.mxu0 0.0
        %2778 = vmatpush1.xpose.msra.mxu0 0.0
        %2779 = vmatprep.subr.mxu0 0.0
        %2780 = vmatpush1.xpose.msra.mxu0 0.0
        %2781 = vmatprep.subr.mxu0 0.0
        %2782 = vmatpush1.xpose.msra.mxu0 0.0
        %2783 = vmatprep.subr.mxu0 0.0
        %2784 = vmatpush1.xpose.msra.mxu0 0.0
        %2785 = vmatprep.subr.mxu0 0.0
        %2786 = vmatpush1.xpose.msra.mxu0 0.0
        %2787 = vmatprep.subr.mxu0 0.0
        %2788 = vmatpush1.xpose.msra.mxu0 0.0
        %2789 = vmatprep.subr.mxu0 0.0
        %2790 = vmatpush1.xpose.msra.mxu0 0.0
        %2791 = vmatprep.subr.mxu0 0.0
        %2792 = vmatpush1.xpose.msra.mxu0 0.0
        %2793 = vmatprep.subr.mxu0 0.0
        %2794 = vmatpush1.xpose.msra.mxu0 0.0
        %2795 = vmatprep.subr.mxu0 0.0
        %2796 = vmatpush1.xpose.msra.mxu0 0.0
        %2797 = vmatprep.subr.mxu0 0.0
        %2798 = vmatpush1.xpose.msra.mxu0 0.0
        %2799 = vmatprep.subr.mxu0 0.0
        %2800 = vmatpush1.xpose.msra.mxu0 0.0
        %2801 = vmatprep.subr.mxu0 0.0
        %2802 = vmatpush1.xpose.msra.mxu0 0.0
        %2803 = vmatprep.subr.mxu0 0.0
        %2804 = vmatpush1.xpose.msra.mxu0 0.0
        %2805 = vmatprep.subr.mxu0 0.0
        %2806 = vmatpush1.xpose.msra.mxu0 0.0
        %2807 = vmatprep.subr.mxu0 0.0
        %2808 = vmatpush1.xpose.msra.mxu0 0.0
        %2809 = vmatprep.subr.mxu0 0.0
        %2810 = vmatpush1.xpose.msra.mxu0 0.0
        %2811 = vmatprep.subr.mxu0 0.0
        %2812 = vmatpush1.xpose.msra.mxu0 0.0
        %2813 = vmatprep.subr.mxu0 0.0
        %2814 = vmatpush1.xpose.msra.mxu0 0.0
        %2815 = vmatprep.subr.mxu0 0.0
        %2816 = vmatpush1.xpose.msra.mxu0 0.0
        %2817 = vmatprep.subr.mxu0 0.0
        %2818 = vmatpush1.xpose.msra.mxu0 0.0
        %2819 = vmatprep.subr.mxu0 0.0
        %2820 = vmatpush1.xpose.msra.mxu0 0.0
        %2821 = vmatprep.subr.mxu0 0.0
        %2822 = vmatpush1.xpose.msra.mxu0 0.0
        %2823 = vmatprep.subr.mxu0 0.0
        %2824 = vmatpush1.xpose.msra.mxu0 0.0
        %2825 = vmatprep.subr.mxu0 0.0
        %2826 = vmatpush1.xpose.msra.mxu0 0.0
        %2827 = vmatprep.subr.mxu0 0.0
        %2828 = vmatpush1.xpose.msra.mxu0 0.0
        %2829 = vmatprep.subr.mxu0 0.0
        %2830 = vmatpush1.xpose.msra.mxu0 0.0
        %2831 = vmatprep.mubr.f32.mxu0 0.0
        %2832 = vmatmul.mubr.f32.gmra.mrb[0].mxu0 %v2750
        %v2833 = vpop.f32.mrb[0].mxu0
        %v2834 = vadd.f32 %v2747, %v2833
        %v2835 = vpop.f32.mrb[0].mxu0
        %2836 = vmatprep.mubr.f32.mxu0 0.0
        %2837 = vmatmul.mubr.f32.gmra.mrb[0].mxu0 %v2753
        %v2838 = vpop.f32.mrb[0].mxu0
        %v2839 = vadd.f32 %v2747, %v2838
        %v2840 = vpop.f32.mrb[0].mxu0
        %2841 = vdwg.mxu0
        %v2842 = vsel %vm413, %v2834, 0.0
        %2843 = vadd.xlane.f32.xlu0 %v2842
        %v2844 = vpop.xlane.xlu0 %2843
        %v2845 = vsel %vm413, %v2839, 0.0
        %2846 = vadd.xlane.f32.xlu0 %v2845
        %v2847 = vpop.xlane.xlu0 %2846
        %v2848 = vrcp.pop 32.0
        %v2849 = vmul.f32 %v2844, %v2848
        %v2850 = vmul.f32 %v2847, %v2848
        %v2851 = vsub.f32 %v2834, %v2849
        %v2852 = vsub.f32 %v2839, %v2850
        %v2853 = vmul.f32 %v2851, %v2851
        %v2854 = vmul.f32 %v2852, %v2852
        %v2855 = vsel %vm413, %v2853, 0.0
        %2856 = vadd.xlane.f32.xlu0 %v2855
        %v2857 = vpop.xlane.xlu0 %2856
        %v2858 = vsel %vm413, %v2854, 0.0
        %2859 = vadd.xlane.f32.xlu0 %v2858
        %v2860 = vpop.xlane.xlu0 %2859
        %v2861 = vmul.f32 %v2857, %v2848
        %v2862 = vmul.f32 %v2860, %v2848
        %v2863 = vadd.f32 %v2861, 1e-12
        %v2864 = vadd.f32 %v2862, 1e-12
        %v2865 = vrsqrt.pop %v2863
        %v2866 = vrsqrt.pop %v2864
        %v2867 = vmul.f32 %v2851, %v2865
        %v2868 = vmul.f32 %v2852, %v2866
        %v2869 = vld [vmem:[%s6] sm:$0x1]
        %v2871 = vlaneseq
        %v2872 = vshrl.u32 %v2871, 7
        %v2873 = vsub.s32 0, %v2872
        %v2874 = vrot.slane %v2869, %v2873
        %v2876 = vmul.f32 %v2867, %v2874
        %v2877 = vmul.f32 %v2868, %v2874
        %v2878 = vld [vmem:[%s7] sm:$0x1]
        %v2880 = vlaneseq
        %v2881 = vshrl.u32 %v2880, 7
        %v2882 = vsub.s32 0, %v2881
        %v2883 = vrot.slane %v2878, %v2882
        %v2885 = vadd.f32 %v2876, %v2883
        %v2886 = vadd.f32 %v2877, %v2883
        %2887 = vst.msk [vmem:[%s403] sm:$0xff] %vm413, %v2885
        %2888 = vst.msk [vmem:[%s403 + $0x8] sm:$0xff] %vm413, %v2886
        %s2889 = sand.u32 %s220, 1
        %s2890 = scalar_lea.sflag [#allocation4], %s2889
        %s2891 = sand.u32 %s220, 1
        %s2892 = smul.addr %s2891, 16
        %s2893 = scalar_lea.vmem [#allocation10], %s2892
        // Predicated region
        $region69: #{tpu_custom_call.1} parent=51 // pred_check
          %p2894 = pneg %p230
        $region70: #{tpu_custom_call.1} parent=51 // pred_check_branch
          %2896 = sbr.rel (%p2894) target = $region72
        $region71: #{tpu_custom_call.1} parent=51 // pred_region
          %s2898 = ssub.s32 256, 256
          %2899 = vsyncadd %s2890, %s2898
          %s2900 = smul.addr %s29, 2
          %s2901 = smul.addr %s2900, 128
          %s2902 = scalar_lea.hbm %s8, %s2901
          %s2903 = sshll.u32 %s2893, 4
          %s2904 = int_to_ptr.vmem [resolvable:$true] %s2903
          %2909 = dma.vmem_to_hbm [thread:$0]  %s2904, 256, %s2902, %s2890, 128, 128, 8
        $region72: #{tpu_custom_call.1} parent=51 // pred_fallthru
          _
      $region52: #{tpu_custom_call.1} parent=5 // pred_fallthru
        _
      %p2910 = scmp.le.s32.totalorder 2, %s24
      // Predicated region
      $region73: #{tpu_custom_call.1} parent=5 // pred_check
        %p2911 = pneg %p2910
      $region74: #{tpu_custom_call.1} parent=5 // pred_check_branch
        %2913 = sbr.rel (%p2911) target = $region76
      $region75: #{tpu_custom_call.1} parent=5 // pred_region
        %s2914 = ssub.s32 %s24, 2
        // Predicated region
        $region77: #{tpu_custom_call.1} parent=75 // pred_check
          %p2915 = pneg %p236
        $region78: #{tpu_custom_call.1} parent=75 // pred_check_branch
          %2917 = sbr.rel (%p2915) target = $region80
        $region79: #{tpu_custom_call.1} parent=75 // pred_region
          %s2918 = sand.u32 %s221, 1
          %s2919 = scalar_lea.sflag [#allocation4], %s2918
          %s2920 = sand.u32 %s221, 1
          %s2921 = smul.addr %s2920, 16
          %s2922 = scalar_lea.vmem [#allocation10], %s2921
          %2923 = dma.done %s2919, 256
        $region80: #{tpu_custom_call.1} parent=75 // pred_fallthru
          _
      $region76: #{tpu_custom_call.1} parent=5 // pred_fallthru
        _
    $region6: #{tpu_custom_call.1} parent=1 // loop_footer
      %s28 = sadd.s32 1, %s24
    $region7: #{tpu_custom_call.1} parent=1 // loop_footer_branch
      %23 = sbr.rel target = $region3
    $region8: #{tpu_custom_call.1} parent=1 // loop_exit
      _
    %2924 = vsyncpa [#allocation3], 1
    %s2925 = scalar_lea.sflag [#allocation3], 1
    %2926 = vsyncpa %s2925, 1
    %2927 = vsyncpa [#allocation6], 1
    %s2928 = scalar_lea.sflag [#allocation6], 1
    %2929 = vsyncpa %s2928, 1
    %2930 = vsyncpa [#allocation9], 1
    %2931 = vsyncpa [#allocation4], 1
    %s2932 = scalar_lea.sflag [#allocation4], 1
    %2933 = vsyncpa %s2932, 1

</llo_original>
